<compile_context>
chip_gen: v7x
topology: tpu7x:2x2x1
jax: 0.10.0
libtpu: 0.0.40
codegen_flags: <defaults>
</compile_context>

<pallas_src>
import jax
import jax.numpy as jnp
from jax.experimental import pallas as pl
from jax.experimental.pallas import tpu as pltpu

K = 4          # conv kernel size
S = 2          # stride
P = 1          # padding
EPS = 1e-5     # BatchNorm2d eps
NEG_SLOPE = 0.2
VMEM_LIMIT = 32 * 1024 * 1024   # explicit scoped-VMEM budget (safe on v5e/v6e/v7x)


def _pick_row_block(oh, ow, target_rows=1024):
    """Largest divisor of `oh` whose GEMM row tile (TR*OW) stays under
    `target_rows`, while keeping >=2 row bands when possible (grid steps for
    megacore sharding / per-core pipelining)."""
    cap = max(1, oh // 2)
    best = 1
    for d in range(1, oh + 1):
        if oh % d == 0 and d <= cap and d * ow <= target_rows:
            best = d
    return best


# --------------------------- down path (Conv + ReLU) -----------------------

def _down_conv(x_act, w1_taps, b1, tr, compute_dtype):
    """(LeakyReLU already applied in glue) -> Conv2d(4x4, s2, p1) -> ReLU.

    x_act:   (N, H, W, Cin) activation, compute_dtype
    w1_taps: (16, Cin, Cint) per-tap weight matrices, tap index kh*4+kw
    Returns h: (N, OH, OW, Cint) in compute_dtype.
    """
    N, H, W, Cin = x_act.shape
    OH, OW = H // S, W // S
    Cint = w1_taps.shape[-1]
    nblk = OH // tr

    # pad, split rows/cols by parity, band rows with a one-row halo.
    xp = jnp.pad(x_act, ((0, 0), (P, P), (P, P), (0, 0)))      # (N, 2(OH+1), 2(OW+1), Cin)
    xr = xp.reshape(N, OH + 1, 2, OW + 1, 2, Cin)
    xpar = xr.transpose(0, 2, 4, 1, 3, 5).reshape(N, 4, OH + 1, OW + 1, Cin)
    xb = jnp.stack(
        [xpar[:, :, t * tr:t * tr + tr + 1] for t in range(nblk)],
        axis=1)                                                # (N, nblk, 4, tr+1, OW+1, Cin)

    def kernel(xb_ref, w_ref, b_ref, h_ref):
        planes = [xb_ref[p] for p in range(4)]                 # each (tr+1, OW+1, Cin)
        acc = jnp.zeros((tr * OW, Cint), jnp.float32)
        for kh in range(K):
            a, r = divmod(kh, 2)
            for kw in range(K):
                b, s = divmod(kw, 2)
                tap = planes[r * 2 + s][a:a + tr, b:b + OW, :]  # (tr, OW, Cin)
                acc = acc + jnp.dot(tap.reshape(tr * OW, Cin),
                                    w_ref[kh * K + kw],
                                    preferred_element_type=jnp.float32)
        y = jnp.maximum(acc + b_ref[...], 0.0)                  # bias + ReLU (f32)
        h_ref[...] = y.reshape(tr, OW, Cint).astype(h_ref.dtype)

    return pl.pallas_call(
        kernel,
        out_shape=jax.ShapeDtypeStruct((N, OH, OW, Cint), compute_dtype),
        grid=(N, nblk),
        in_specs=[
            pl.BlockSpec((None, None, 4, tr + 1, OW + 1, Cin),
                         lambda n, t: (n, t, 0, 0, 0, 0)),
            pl.BlockSpec((K * K, Cin, Cint), lambda n, t: (0, 0, 0)),
            pl.BlockSpec((1, Cint), lambda n, t: (0, 0)),
        ],
        out_specs=pl.BlockSpec((None, tr, OW, Cint), lambda n, t: (n, t, 0, 0)),
        compiler_params=pltpu.CompilerParams(
            dimension_semantics=("parallel", "parallel"),
            vmem_limit_bytes=VMEM_LIMIT),
    )(xb, w1_taps, b1.reshape(1, Cint))


# ---------------- up path (sub-pixel ConvTranspose + BN partials) ----------

def _up_convt_stats(h, w2_taps, b2t, tr, compute_dtype):
    """ConvTranspose2d(4x4, s2, p1) via sub-pixel decomposition.

    h:       (N, OH, OW, Cint) in compute_dtype
    w2_taps: (9, Cint, 4*Cout) per-3x3-tap weights; output column block
             (py*2+px)*Cout + co holds W2[:, :, 3+py-2u, 3+px-2v]
    Returns:
      y_raw: (N, OH, OW, 4*Cout) pre-BN output, last dim = [(py,px) parity, co]
      stats: (N, nblk, 2, 4*Cout) per-tile (sum, sum of squares) BN partials.
    """
    N, OH, OW, Cint = h.shape
    Cout4 = w2_taps.shape[-1]
    nblk = OH // tr

    hp = jnp.pad(h, ((0, 0), (1, 1), (1, 1), (0, 0)))          # (N, OH+2, OW+2, Cint)
    hb = jnp.stack(
        [hp[:, t * tr:t * tr + tr + 2] for t in range(nblk)],
        axis=1)                                                # (N, nblk, tr+2, OW+2, Cint)

    def kernel(hb_ref, w_ref, b_ref, y_ref, st_ref):
        hv = hb_ref[...]                                       # (tr+2, OW+2, Cint)
        acc = jnp.zeros((tr * OW, Cout4), jnp.float32)
        for u in range(3):
            for v in range(3):
                tap = hv[u:u + tr, v:v + OW, :]                # (tr, OW, Cint)
                acc = acc + jnp.dot(tap.reshape(tr * OW, Cint),
                                    w_ref[u * 3 + v],
                                    preferred_element_type=jnp.float32)
        y = acc + b_ref[...]                                   # (tr*OW, 4*Cout) f32
        # per-tile BN partial sums via ones-vector MXU matmul (not a lane-sparse
        # sublane reduce); global reduction / normalization happens in glue.
        ones = jnp.ones((1, tr * OW), jnp.float32)
        s1 = jnp.dot(ones, y, preferred_element_type=jnp.float32)       # (1, 4*Cout)
        s2 = jnp.dot(ones, y * y, preferred_element_type=jnp.float32)   # (1, 4*Cout)
        st_ref[...] = jnp.concatenate([s1, s2], axis=0)                 # (2, 4*Cout)
        y_ref[...] = y.reshape(tr, OW, Cout4).astype(y_ref.dtype)

    return pl.pallas_call(
        kernel,
        out_shape=(
            jax.ShapeDtypeStruct((N, OH, OW, Cout4), compute_dtype),
            jax.ShapeDtypeStruct((N, nblk, 2, Cout4), jnp.float32),
        ),
        grid=(N, nblk),
        in_specs=[
            pl.BlockSpec((None, None, tr + 2, OW + 2, Cint),
                         lambda n, t: (n, t, 0, 0, 0)),
            pl.BlockSpec((9, Cint, Cout4), lambda n, t: (0, 0, 0)),
            pl.BlockSpec((1, Cout4), lambda n, t: (0, 0)),
        ],
        out_specs=(
            pl.BlockSpec((None, tr, OW, Cout4), lambda n, t: (n, t, 0, 0)),
            pl.BlockSpec((None, None, 2, Cout4), lambda n, t: (n, t, 0, 0)),
        ),
        compiler_params=pltpu.CompilerParams(
            dimension_semantics=("parallel", "parallel"),
            vmem_limit_bytes=VMEM_LIMIT),
    )(hb, w2_taps, b2t)


# ------------------------------- full forward ------------------------------

def unet_layer_forward(x_nchw, params, compute_dtype=jnp.float32):
    W1, b1 = params["W1"], params["b1"]      # Conv2d:          (Cint, Cin, 4, 4), (Cint,)
    W2, b2 = params["W2"], params["b2"]      # ConvTranspose2d: (Cint, Cout, 4, 4), (Cout,)
    gamma, beta = params["gamma"], params["beta"]
    N, Cin, H, W = x_nchw.shape
    assert H % 2 == 0 and W % 2 == 0
    Cint = W1.shape[0]
    Cout = W2.shape[1]
    OH, OW = H // S, W // S

    # glue: NHWC + hoisted LeakyReLU (once per element; pad zeros are invariant)
    x = jnp.transpose(x_nchw, (0, 2, 3, 1))
    x_act = jnp.where(x >= 0, x, NEG_SLOPE * x).astype(compute_dtype)

    # weight repack (tiny, done once per call / folded by jit)
    # down: tap (kh, kw) -> (Cin, Cint)
    w1_taps = jnp.transpose(W1, (2, 3, 1, 0)).reshape(K * K, Cin, Cint)
    w1_taps = w1_taps.astype(compute_dtype)
    # up (sub-pixel): 3x3-neighbourhood tap (u, v) -> (Cint, 4*Cout)
    tap_blocks = []
    for u in range(3):
        for v in range(3):
            cols = []
            for py in range(2):
                for px in range(2):
                    kh = 3 + py - 2 * u
                    kw = 3 + px - 2 * v
                    if 0 <= kh < K and 0 <= kw < K:
                        cols.append(W2[:, :, kh, kw])
                    else:
                        cols.append(jnp.zeros((Cint, Cout), W2.dtype))
            tap_blocks.append(jnp.concatenate(cols, axis=1))   # (Cint, 4*Cout)
    w2_taps = jnp.stack(tap_blocks, axis=0).astype(compute_dtype)
    b2t = jnp.tile(b2, 4).reshape(1, 4 * Cout)

    # Pallas kernels
    tr_d = _pick_row_block(OH, OW)
    h = _down_conv(x_act, w1_taps, b1, tr_d, compute_dtype)
    tr_u = _pick_row_block(OH, OW)
    y_raw, stats = _up_convt_stats(h, w2_taps, b2t, tr_u, compute_dtype)

    # glue: finalize BN (training-mode global batch stats), fold to scale/shift
    total = jnp.sum(stats, axis=(0, 1))                        # (2, 4*Cout)
    cnt = jnp.float32(N * H * W)
    mean = total[0].reshape(4, Cout).sum(0) / cnt
    sumsq = total[1].reshape(4, Cout).sum(0)
    var = jnp.maximum(sumsq / cnt - mean * mean, 0.0)          # biased variance
    inv = jax.lax.rsqrt(var + EPS)
    scale = gamma * inv
    shift = beta - mean * scale
    # TODO(synk): BatchNorm2d running_mean/running_var buffer updates (training
    # side effect) are not modeled; they do not affect the returned tensor.

    # normalize + depth-to-space + back to NCHW + skip concat (fused by XLA)
    y = y_raw.astype(jnp.float32).reshape(N, OH, OW, 2, 2, Cout) * scale + shift
    y = y.transpose(0, 1, 3, 2, 4, 5).reshape(N, H, W, Cout)
    y = jnp.transpose(y, (0, 3, 1, 2))
    return jnp.concatenate([x_nchw, y], axis=1)


# --------------------- independent pure-JAX reference ----------------------

def _reference(x_nchw, params):
    W1, b1, W2, b2 = params["W1"], params["b1"], params["W2"], params["b2"]
    gamma, beta = params["gamma"], params["beta"]
    x = jnp.transpose(x_nchw, (0, 2, 3, 1))
    h = jnp.where(x >= 0, x, NEG_SLOPE * x)
    w1_hwio = jnp.transpose(W1, (2, 3, 1, 0))
    h = jax.lax.conv_general_dilated(
        h, w1_hwio, window_strides=(S, S), padding=[(P, P), (P, P)],
        dimension_numbers=("NHWC", "HWIO", "NHWC")) + b1
    h = jnp.maximum(h, 0.0)
    w2_hwio = jnp.transpose(W2[:, :, ::-1, ::-1], (2, 3, 0, 1))
    y = jax.lax.conv_general_dilated(
        h, w2_hwio, window_strides=(1, 1),
        padding=[(K - 1 - P, K - 1 - P)] * 2, lhs_dilation=(S, S),
        dimension_numbers=("NHWC", "HWIO", "NHWC")) + b2
    mean = jnp.mean(y, axis=(0, 1, 2), keepdims=True)
    var = jnp.mean((y - mean) ** 2, axis=(0, 1, 2), keepdims=True)
    y = (y - mean) * jax.lax.rsqrt(var + EPS) * gamma + beta
    y = jnp.transpose(y, (0, 3, 1, 2))
    return jnp.concatenate([x_nchw, y], axis=1)


if __name__ == "__main__":
    key = jax.random.PRNGKey(0)
    kx, k1, k2, k3, k4 = jax.random.split(key, 5)

    # UNetLayer(output_channels=4, internal_channels=8, input_channels=None,
    #           submodule=None, outermost=False)
    N, Cin, H, W = 2, 4, 16, 16
    Cout, Cint = 4, 8

    x = jax.random.normal(kx, (N, Cin, H, W), jnp.float32)
    params = dict(
        W1=0.1 * jax.random.normal(k1, (Cint, Cin, K, K), jnp.float32),
        b1=0.1 * jax.random.normal(k2, (Cint,), jnp.float32),
        W2=0.1 * jax.random.normal(k3, (Cint, Cout, K, K), jnp.float32),
        b2=0.1 * jax.random.normal(k4, (Cout,), jnp.float32),
        gamma=jnp.ones((Cout,), jnp.float32),   # BatchNorm2d default weight
        beta=jnp.zeros((Cout,), jnp.float32),   # BatchNorm2d default bias
    )

    fwd = jax.jit(unet_layer_forward, static_argnames=("compute_dtype",))
    ref = jax.block_until_ready(_reference(x, params))

    # exact-semantics check (f32 compute path)
    out32 = jax.block_until_ready(fwd(x, params, compute_dtype=jnp.float32))
    assert out32.shape == (N, Cin + Cout, H, W), out32.shape
    err32 = float(jnp.max(jnp.abs(out32 - ref)))
    assert err32 < 2e-4, f"f32 max err {err32}"

    # perf configuration (bf16 activations/weights, f32 MXU accumulation)
    out16 = jax.block_until_ready(fwd(x, params, compute_dtype=jnp.bfloat16))
    err16 = float(jnp.max(jnp.abs(out16 - ref)))
    assert err16 < 6e-2, f"bf16 max err {err16}"

    print("KERNEL_OK")
</pallas_src>

<mosaic_0001>
module attributes {stable_mosaic.version = 11 : i64} {
  func.func @kernel(%arg0: i32, %arg1: i32, %arg2: memref<1x1x4x5x9x4xf32, #tpu.memory_space<vmem>>, %arg3: memref<16x4x8xf32, #tpu.memory_space<vmem>>, %arg4: memref<1x8xf32, #tpu.memory_space<vmem>>, %arg5: memref<1x4x8x8xf32, #tpu.memory_space<vmem>>) attributes {dimension_semantics = [#tpu.dimension_semantics<parallel>, #tpu.dimension_semantics<parallel>], iteration_bounds = array<i64: 2, 2>, scalar_prefetch = 0 : i64, scratch_operands = 0 : i64, tpu.core_type = #tpu.core_type<tc>, window_params = [{transform_indices = @transform_0, window_bounds = array<i64: 1, 1, 4, 5, 9, 4>}, {pipeline_mode = #tpu.pipeline_mode<synchronous>, transform_indices = @transform_1, window_bounds = array<i64: 16, 4, 8>}, {pipeline_mode = #tpu.pipeline_mode<synchronous>, transform_indices = @transform_2, window_bounds = array<i64: 1, 8>}, {transform_indices = @transform_3, window_bounds = array<i64: 1, 4, 8, 8>}]} {
    %c0 = arith.constant 0 : index
    %c0_0 = arith.constant 0 : index
    %c0_1 = arith.constant 0 : index
    %c0_2 = arith.constant 0 : index
    %c0_3 = arith.constant 0 : index
    %c0_4 = arith.constant 0 : index
    %0 = vector.load %arg2[%c0, %c0_0, %c0_1, %c0_2, %c0_3, %c0_4] : memref<1x1x4x5x9x4xf32, #tpu.memory_space<vmem>>, vector<1x1x1x5x9x4xf32>
    %1 = vector.shape_cast %0 : vector<1x1x1x5x9x4xf32> to vector<5x9x4xf32>
    %c0_5 = arith.constant 0 : index
    %c0_6 = arith.constant 0 : index
    %c1 = arith.constant 1 : index
    %c0_7 = arith.constant 0 : index
    %c0_8 = arith.constant 0 : index
    %c0_9 = arith.constant 0 : index
    %2 = vector.load %arg2[%c0_5, %c0_6, %c1, %c0_7, %c0_8, %c0_9] : memref<1x1x4x5x9x4xf32, #tpu.memory_space<vmem>>, vector<1x1x1x5x9x4xf32>
    %3 = vector.shape_cast %2 : vector<1x1x1x5x9x4xf32> to vector<5x9x4xf32>
    %c0_10 = arith.constant 0 : index
    %c0_11 = arith.constant 0 : index
    %c2 = arith.constant 2 : index
    %c0_12 = arith.constant 0 : index
    %c0_13 = arith.constant 0 : index
    %c0_14 = arith.constant 0 : index
    %4 = vector.load %arg2[%c0_10, %c0_11, %c2, %c0_12, %c0_13, %c0_14] : memref<1x1x4x5x9x4xf32, #tpu.memory_space<vmem>>, vector<1x1x1x5x9x4xf32>
    %5 = vector.shape_cast %4 : vector<1x1x1x5x9x4xf32> to vector<5x9x4xf32>
    %c0_15 = arith.constant 0 : index
    %c0_16 = arith.constant 0 : index
    %c3 = arith.constant 3 : index
    %c0_17 = arith.constant 0 : index
    %c0_18 = arith.constant 0 : index
    %c0_19 = arith.constant 0 : index
    %6 = vector.load %arg2[%c0_15, %c0_16, %c3, %c0_17, %c0_18, %c0_19] : memref<1x1x4x5x9x4xf32, #tpu.memory_space<vmem>>, vector<1x1x1x5x9x4xf32>
    %7 = vector.shape_cast %6 : vector<1x1x1x5x9x4xf32> to vector<5x9x4xf32>
    %cst = arith.constant 0.000000e+00 : f32
    %8 = vector.broadcast %cst : f32 to vector<32x8xf32>
    %9 = vector.extract_strided_slice %1 {offsets = [0, 0, 0], sizes = [4, 8, 4], strides = [1, 1, 1]} : vector<5x9x4xf32> to vector<4x8x4xf32>
    %10 = vector.shape_cast %9 : vector<4x8x4xf32> to vector<32x4xf32>
    %c0_20 = arith.constant 0 : index
    %c0_21 = arith.constant 0 : index
    %c0_22 = arith.constant 0 : index
    %11 = vector.load %arg3[%c0_20, %c0_21, %c0_22] : memref<16x4x8xf32, #tpu.memory_space<vmem>>, vector<1x4x8xf32>
    %12 = vector.shape_cast %11 : vector<1x4x8xf32> to vector<4x8xf32>
    %cst_23 = arith.constant dense<0.000000e+00> : vector<32x8xf32>
    %13 = tpu.matmul %10, %12, %cst_23 {dimension_numbers = #tpu.dot_dimension_numbers<[1], [0], [0], [1], [0, 0, 1, 1], [], []>} : vector<32x4xf32>, vector<4x8xf32>, vector<32x8xf32> -> vector<32x8xf32>
    %14 = arith.addf %8, %13 : vector<32x8xf32>
    %15 = vector.extract_strided_slice %3 {offsets = [0, 0, 0], sizes = [4, 8, 4], strides = [1, 1, 1]} : vector<5x9x4xf32> to vector<4x8x4xf32>
    %16 = vector.shape_cast %15 : vector<4x8x4xf32> to vector<32x4xf32>
    %c1_24 = arith.constant 1 : index
    %c0_25 = arith.constant 0 : index
    %c0_26 = arith.constant 0 : index
    %17 = vector.load %arg3[%c1_24, %c0_25, %c0_26] : memref<16x4x8xf32, #tpu.memory_space<vmem>>, vector<1x4x8xf32>
    %18 = vector.shape_cast %17 : vector<1x4x8xf32> to vector<4x8xf32>
    %cst_27 = arith.constant dense<0.000000e+00> : vector<32x8xf32>
    %19 = tpu.matmul %16, %18, %cst_27 {dimension_numbers = #tpu.dot_dimension_numbers<[1], [0], [0], [1], [0, 0, 1, 1], [], []>} : vector<32x4xf32>, vector<4x8xf32>, vector<32x8xf32> -> vector<32x8xf32>
    %20 = arith.addf %14, %19 : vector<32x8xf32>
    %21 = vector.extract_strided_slice %1 {offsets = [0, 1, 0], sizes = [4, 8, 4], strides = [1, 1, 1]} : vector<5x9x4xf32> to vector<4x8x4xf32>
    %22 = vector.shape_cast %21 : vector<4x8x4xf32> to vector<32x4xf32>
    %c2_28 = arith.constant 2 : index
    %c0_29 = arith.constant 0 : index
    %c0_30 = arith.constant 0 : index
    %23 = vector.load %arg3[%c2_28, %c0_29, %c0_30] : memref<16x4x8xf32, #tpu.memory_space<vmem>>, vector<1x4x8xf32>
    %24 = vector.shape_cast %23 : vector<1x4x8xf32> to vector<4x8xf32>
    %cst_31 = arith.constant dense<0.000000e+00> : vector<32x8xf32>
    %25 = tpu.matmul %22, %24, %cst_31 {dimension_numbers = #tpu.dot_dimension_numbers<[1], [0], [0], [1], [0, 0, 1, 1], [], []>} : vector<32x4xf32>, vector<4x8xf32>, vector<32x8xf32> -> vector<32x8xf32>
    %26 = arith.addf %20, %25 : vector<32x8xf32>
    %27 = vector.extract_strided_slice %3 {offsets = [0, 1, 0], sizes = [4, 8, 4], strides = [1, 1, 1]} : vector<5x9x4xf32> to vector<4x8x4xf32>
    %28 = vector.shape_cast %27 : vector<4x8x4xf32> to vector<32x4xf32>
    %c3_32 = arith.constant 3 : index
    %c0_33 = arith.constant 0 : index
    %c0_34 = arith.constant 0 : index
    %29 = vector.load %arg3[%c3_32, %c0_33, %c0_34] : memref<16x4x8xf32, #tpu.memory_space<vmem>>, vector<1x4x8xf32>
    %30 = vector.shape_cast %29 : vector<1x4x8xf32> to vector<4x8xf32>
    %cst_35 = arith.constant dense<0.000000e+00> : vector<32x8xf32>
    %31 = tpu.matmul %28, %30, %cst_35 {dimension_numbers = #tpu.dot_dimension_numbers<[1], [0], [0], [1], [0, 0, 1, 1], [], []>} : vector<32x4xf32>, vector<4x8xf32>, vector<32x8xf32> -> vector<32x8xf32>
    %32 = arith.addf %26, %31 : vector<32x8xf32>
    %33 = vector.extract_strided_slice %5 {offsets = [0, 0, 0], sizes = [4, 8, 4], strides = [1, 1, 1]} : vector<5x9x4xf32> to vector<4x8x4xf32>
    %34 = vector.shape_cast %33 : vector<4x8x4xf32> to vector<32x4xf32>
    %c4 = arith.constant 4 : index
    %c0_36 = arith.constant 0 : index
    %c0_37 = arith.constant 0 : index
    %35 = vector.load %arg3[%c4, %c0_36, %c0_37] : memref<16x4x8xf32, #tpu.memory_space<vmem>>, vector<1x4x8xf32>
    %36 = vector.shape_cast %35 : vector<1x4x8xf32> to vector<4x8xf32>
    %cst_38 = arith.constant dense<0.000000e+00> : vector<32x8xf32>
    %37 = tpu.matmul %34, %36, %cst_38 {dimension_numbers = #tpu.dot_dimension_numbers<[1], [0], [0], [1], [0, 0, 1, 1], [], []>} : vector<32x4xf32>, vector<4x8xf32>, vector<32x8xf32> -> vector<32x8xf32>
    %38 = arith.addf %32, %37 : vector<32x8xf32>
    %39 = vector.extract_strided_slice %7 {offsets = [0, 0, 0], sizes = [4, 8, 4], strides = [1, 1, 1]} : vector<5x9x4xf32> to vector<4x8x4xf32>
    %40 = vector.shape_cast %39 : vector<4x8x4xf32> to vector<32x4xf32>
    %c5 = arith.constant 5 : index
    %c0_39 = arith.constant 0 : index
    %c0_40 = arith.constant 0 : index
    %41 = vector.load %arg3[%c5, %c0_39, %c0_40] : memref<16x4x8xf32, #tpu.memory_space<vmem>>, vector<1x4x8xf32>
    %42 = vector.shape_cast %41 : vector<1x4x8xf32> to vector<4x8xf32>
    %cst_41 = arith.constant dense<0.000000e+00> : vector<32x8xf32>
    %43 = tpu.matmul %40, %42, %cst_41 {dimension_numbers = #tpu.dot_dimension_numbers<[1], [0], [0], [1], [0, 0, 1, 1], [], []>} : vector<32x4xf32>, vector<4x8xf32>, vector<32x8xf32> -> vector<32x8xf32>
    %44 = arith.addf %38, %43 : vector<32x8xf32>
    %45 = vector.extract_strided_slice %5 {offsets = [0, 1, 0], sizes = [4, 8, 4], strides = [1, 1, 1]} : vector<5x9x4xf32> to vector<4x8x4xf32>
    %46 = vector.shape_cast %45 : vector<4x8x4xf32> to vector<32x4xf32>
    %c6 = arith.constant 6 : index
    %c0_42 = arith.constant 0 : index
    %c0_43 = arith.constant 0 : index
    %47 = vector.load %arg3[%c6, %c0_42, %c0_43] : memref<16x4x8xf32, #tpu.memory_space<vmem>>, vector<1x4x8xf32>
    %48 = vector.shape_cast %47 : vector<1x4x8xf32> to vector<4x8xf32>
    %cst_44 = arith.constant dense<0.000000e+00> : vector<32x8xf32>
    %49 = tpu.matmul %46, %48, %cst_44 {dimension_numbers = #tpu.dot_dimension_numbers<[1], [0], [0], [1], [0, 0, 1, 1], [], []>} : vector<32x4xf32>, vector<4x8xf32>, vector<32x8xf32> -> vector<32x8xf32>
    %50 = arith.addf %44, %49 : vector<32x8xf32>
    %51 = vector.extract_strided_slice %7 {offsets = [0, 1, 0], sizes = [4, 8, 4], strides = [1, 1, 1]} : vector<5x9x4xf32> to vector<4x8x4xf32>
    %52 = vector.shape_cast %51 : vector<4x8x4xf32> to vector<32x4xf32>
    %c7 = arith.constant 7 : index
    %c0_45 = arith.constant 0 : index
    %c0_46 = arith.constant 0 : index
    %53 = vector.load %arg3[%c7, %c0_45, %c0_46] : memref<16x4x8xf32, #tpu.memory_space<vmem>>, vector<1x4x8xf32>
    %54 = vector.shape_cast %53 : vector<1x4x8xf32> to vector<4x8xf32>
    %cst_47 = arith.constant dense<0.000000e+00> : vector<32x8xf32>
    %55 = tpu.matmul %52, %54, %cst_47 {dimension_numbers = #tpu.dot_dimension_numbers<[1], [0], [0], [1], [0, 0, 1, 1], [], []>} : vector<32x4xf32>, vector<4x8xf32>, vector<32x8xf32> -> vector<32x8xf32>
    %56 = arith.addf %50, %55 : vector<32x8xf32>
    %57 = vector.extract_strided_slice %1 {offsets = [1, 0, 0], sizes = [4, 8, 4], strides = [1, 1, 1]} : vector<5x9x4xf32> to vector<4x8x4xf32>
    %58 = vector.shape_cast %57 : vector<4x8x4xf32> to vector<32x4xf32>
    %c8 = arith.constant 8 : index
    %c0_48 = arith.constant 0 : index
    %c0_49 = arith.constant 0 : index
    %59 = vector.load %arg3[%c8, %c0_48, %c0_49] : memref<16x4x8xf32, #tpu.memory_space<vmem>>, vector<1x4x8xf32>
    %60 = vector.shape_cast %59 : vector<1x4x8xf32> to vector<4x8xf32>
    %cst_50 = arith.constant dense<0.000000e+00> : vector<32x8xf32>
    %61 = tpu.matmul %58, %60, %cst_50 {dimension_numbers = #tpu.dot_dimension_numbers<[1], [0], [0], [1], [0, 0, 1, 1], [], []>} : vector<32x4xf32>, vector<4x8xf32>, vector<32x8xf32> -> vector<32x8xf32>
    %62 = arith.addf %56, %61 : vector<32x8xf32>
    %63 = vector.extract_strided_slice %3 {offsets = [1, 0, 0], sizes = [4, 8, 4], strides = [1, 1, 1]} : vector<5x9x4xf32> to vector<4x8x4xf32>
    %64 = vector.shape_cast %63 : vector<4x8x4xf32> to vector<32x4xf32>
    %c9 = arith.constant 9 : index
    %c0_51 = arith.constant 0 : index
    %c0_52 = arith.constant 0 : index
    %65 = vector.load %arg3[%c9, %c0_51, %c0_52] : memref<16x4x8xf32, #tpu.memory_space<vmem>>, vector<1x4x8xf32>
    %66 = vector.shape_cast %65 : vector<1x4x8xf32> to vector<4x8xf32>
    %cst_53 = arith.constant dense<0.000000e+00> : vector<32x8xf32>
    %67 = tpu.matmul %64, %66, %cst_53 {dimension_numbers = #tpu.dot_dimension_numbers<[1], [0], [0], [1], [0, 0, 1, 1], [], []>} : vector<32x4xf32>, vector<4x8xf32>, vector<32x8xf32> -> vector<32x8xf32>
    %68 = arith.addf %62, %67 : vector<32x8xf32>
    %69 = vector.extract_strided_slice %1 {offsets = [1, 1, 0], sizes = [4, 8, 4], strides = [1, 1, 1]} : vector<5x9x4xf32> to vector<4x8x4xf32>
    %70 = vector.shape_cast %69 : vector<4x8x4xf32> to vector<32x4xf32>
    %c10 = arith.constant 10 : index
    %c0_54 = arith.constant 0 : index
    %c0_55 = arith.constant 0 : index
    %71 = vector.load %arg3[%c10, %c0_54, %c0_55] : memref<16x4x8xf32, #tpu.memory_space<vmem>>, vector<1x4x8xf32>
    %72 = vector.shape_cast %71 : vector<1x4x8xf32> to vector<4x8xf32>
    %cst_56 = arith.constant dense<0.000000e+00> : vector<32x8xf32>
    %73 = tpu.matmul %70, %72, %cst_56 {dimension_numbers = #tpu.dot_dimension_numbers<[1], [0], [0], [1], [0, 0, 1, 1], [], []>} : vector<32x4xf32>, vector<4x8xf32>, vector<32x8xf32> -> vector<32x8xf32>
    %74 = arith.addf %68, %73 : vector<32x8xf32>
    %75 = vector.extract_strided_slice %3 {offsets = [1, 1, 0], sizes = [4, 8, 4], strides = [1, 1, 1]} : vector<5x9x4xf32> to vector<4x8x4xf32>
    %76 = vector.shape_cast %75 : vector<4x8x4xf32> to vector<32x4xf32>
    %c11 = arith.constant 11 : index
    %c0_57 = arith.constant 0 : index
    %c0_58 = arith.constant 0 : index
    %77 = vector.load %arg3[%c11, %c0_57, %c0_58] : memref<16x4x8xf32, #tpu.memory_space<vmem>>, vector<1x4x8xf32>
    %78 = vector.shape_cast %77 : vector<1x4x8xf32> to vector<4x8xf32>
    %cst_59 = arith.constant dense<0.000000e+00> : vector<32x8xf32>
    %79 = tpu.matmul %76, %78, %cst_59 {dimension_numbers = #tpu.dot_dimension_numbers<[1], [0], [0], [1], [0, 0, 1, 1], [], []>} : vector<32x4xf32>, vector<4x8xf32>, vector<32x8xf32> -> vector<32x8xf32>
    %80 = arith.addf %74, %79 : vector<32x8xf32>
    %81 = vector.extract_strided_slice %5 {offsets = [1, 0, 0], sizes = [4, 8, 4], strides = [1, 1, 1]} : vector<5x9x4xf32> to vector<4x8x4xf32>
    %82 = vector.shape_cast %81 : vector<4x8x4xf32> to vector<32x4xf32>
    %c12 = arith.constant 12 : index
    %c0_60 = arith.constant 0 : index
    %c0_61 = arith.constant 0 : index
    %83 = vector.load %arg3[%c12, %c0_60, %c0_61] : memref<16x4x8xf32, #tpu.memory_space<vmem>>, vector<1x4x8xf32>
    %84 = vector.shape_cast %83 : vector<1x4x8xf32> to vector<4x8xf32>
    %cst_62 = arith.constant dense<0.000000e+00> : vector<32x8xf32>
    %85 = tpu.matmul %82, %84, %cst_62 {dimension_numbers = #tpu.dot_dimension_numbers<[1], [0], [0], [1], [0, 0, 1, 1], [], []>} : vector<32x4xf32>, vector<4x8xf32>, vector<32x8xf32> -> vector<32x8xf32>
    %86 = arith.addf %80, %85 : vector<32x8xf32>
    %87 = vector.extract_strided_slice %7 {offsets = [1, 0, 0], sizes = [4, 8, 4], strides = [1, 1, 1]} : vector<5x9x4xf32> to vector<4x8x4xf32>
    %88 = vector.shape_cast %87 : vector<4x8x4xf32> to vector<32x4xf32>
    %c13 = arith.constant 13 : index
    %c0_63 = arith.constant 0 : index
    %c0_64 = arith.constant 0 : index
    %89 = vector.load %arg3[%c13, %c0_63, %c0_64] : memref<16x4x8xf32, #tpu.memory_space<vmem>>, vector<1x4x8xf32>
    %90 = vector.shape_cast %89 : vector<1x4x8xf32> to vector<4x8xf32>
    %cst_65 = arith.constant dense<0.000000e+00> : vector<32x8xf32>
    %91 = tpu.matmul %88, %90, %cst_65 {dimension_numbers = #tpu.dot_dimension_numbers<[1], [0], [0], [1], [0, 0, 1, 1], [], []>} : vector<32x4xf32>, vector<4x8xf32>, vector<32x8xf32> -> vector<32x8xf32>
    %92 = arith.addf %86, %91 : vector<32x8xf32>
    %93 = vector.extract_strided_slice %5 {offsets = [1, 1, 0], sizes = [4, 8, 4], strides = [1, 1, 1]} : vector<5x9x4xf32> to vector<4x8x4xf32>
    %94 = vector.shape_cast %93 : vector<4x8x4xf32> to vector<32x4xf32>
    %c14 = arith.constant 14 : index
    %c0_66 = arith.constant 0 : index
    %c0_67 = arith.constant 0 : index
    %95 = vector.load %arg3[%c14, %c0_66, %c0_67] : memref<16x4x8xf32, #tpu.memory_space<vmem>>, vector<1x4x8xf32>
    %96 = vector.shape_cast %95 : vector<1x4x8xf32> to vector<4x8xf32>
    %cst_68 = arith.constant dense<0.000000e+00> : vector<32x8xf32>
    %97 = tpu.matmul %94, %96, %cst_68 {dimension_numbers = #tpu.dot_dimension_numbers<[1], [0], [0], [1], [0, 0, 1, 1], [], []>} : vector<32x4xf32>, vector<4x8xf32>, vector<32x8xf32> -> vector<32x8xf32>
    %98 = arith.addf %92, %97 : vector<32x8xf32>
    %99 = vector.extract_strided_slice %7 {offsets = [1, 1, 0], sizes = [4, 8, 4], strides = [1, 1, 1]} : vector<5x9x4xf32> to vector<4x8x4xf32>
    %100 = vector.shape_cast %99 : vector<4x8x4xf32> to vector<32x4xf32>
    %c15 = arith.constant 15 : index
    %c0_69 = arith.constant 0 : index
    %c0_70 = arith.constant 0 : index
    %101 = vector.load %arg3[%c15, %c0_69, %c0_70] : memref<16x4x8xf32, #tpu.memory_space<vmem>>, vector<1x4x8xf32>
    %102 = vector.shape_cast %101 : vector<1x4x8xf32> to vector<4x8xf32>
    %cst_71 = arith.constant dense<0.000000e+00> : vector<32x8xf32>
    %103 = tpu.matmul %100, %102, %cst_71 {dimension_numbers = #tpu.dot_dimension_numbers<[1], [0], [0], [1], [0, 0, 1, 1], [], []>} : vector<32x4xf32>, vector<4x8xf32>, vector<32x8xf32> -> vector<32x8xf32>
    %104 = arith.addf %98, %103 : vector<32x8xf32>
    %c0_72 = arith.constant 0 : index
    %c0_73 = arith.constant 0 : index
    %105 = vector.load %arg4[%c0_72, %c0_73] : memref<1x8xf32, #tpu.memory_space<vmem>>, vector<1x8xf32>
    %106 = vector.broadcast %105 : vector<1x8xf32> to vector<32x8xf32>
    %107 = arith.addf %104, %106 : vector<32x8xf32>
    %cst_74 = arith.constant 0.000000e+00 : f32
    %108 = vector.broadcast %cst_74 : f32 to vector<32x8xf32>
    %109 = arith.maximumf %107, %108 : vector<32x8xf32>
    %110 = vector.shape_cast %109 : vector<32x8xf32> to vector<4x8x8xf32>
    %c0_75 = arith.constant 0 : index
    %c0_76 = arith.constant 0 : index
    %c0_77 = arith.constant 0 : index
    %c0_78 = arith.constant 0 : index
    %111 = vector.load %arg5[%c0_75, %c0_76, %c0_77, %c0_78] : memref<1x4x8x8xf32, #tpu.memory_space<vmem>>, vector<1x4x8x8xf32>
    %112 = vector.shape_cast %111 : vector<1x4x8x8xf32> to vector<4x8x8xf32>
    %113 = vector.shape_cast %110 : vector<4x8x8xf32> to vector<1x4x8x8xf32>
    tpu.vector_store %arg5[%c0_75, %c0_76, %c0_77, %c0_78], %113 {strides = array<i32>} : memref<1x4x8x8xf32, #tpu.memory_space<vmem>>, vector<1x4x8x8xf32>,
    return
  }
  func.func @transform_0(%arg0: i32, %arg1: i32) -> (i32, i32, i32, i32, i32, i32) {
    %c0_i32 = arith.constant 0 : i32
    %c0_i32_0 = arith.constant 0 : i32
    %c0_i32_1 = arith.constant 0 : i32
    %c0_i32_2 = arith.constant 0 : i32
    %c0_i32_3 = arith.constant 0 : i32
    return %arg0, %arg1, %c0_i32, %c0_i32_0, %c0_i32_1, %c0_i32_2 : i32, i32, i32, i32, i32, i32
  }
  func.func @transform_1(%arg0: i32, %arg1: i32) -> (i32, i32, i32) {
    %c0_i32 = arith.constant 0 : i32
    %c0_i32_0 = arith.constant 0 : i32
    %c0_i32_1 = arith.constant 0 : i32
    %c0_i32_2 = arith.constant 0 : i32
    return %c0_i32, %c0_i32_0, %c0_i32_1 : i32, i32, i32
  }
  func.func @transform_2(%arg0: i32, %arg1: i32) -> (i32, i32) {
    %c0_i32 = arith.constant 0 : i32
    %c0_i32_0 = arith.constant 0 : i32
    %c0_i32_1 = arith.constant 0 : i32
    return %c0_i32, %c0_i32_0 : i32, i32
  }
  func.func @transform_3(%arg0: i32, %arg1: i32) -> (i32, i32, i32, i32) {
    %c0_i32 = arith.constant 0 : i32
    %c0_i32_0 = arith.constant 0 : i32
    %c0_i32_1 = arith.constant 0 : i32
    return %arg0, %arg1, %c0_i32, %c0_i32_0 : i32, i32, i32, i32
  }
}

module attributes {stable_mosaic.version = 11 : i64} {
  func.func @kernel(%arg0: i32, %arg1: i32, %arg2: memref<1x1x6x10x8xf32, #tpu.memory_space<vmem>>, %arg3: memref<9x8x16xf32, #tpu.memory_space<vmem>>, %arg4: memref<1x16xf32, #tpu.memory_space<vmem>>, %arg5: memref<1x4x8x16xf32, #tpu.memory_space<vmem>>, %arg6: memref<1x1x2x16xf32, #tpu.memory_space<vmem>>) attributes {dimension_semantics = [#tpu.dimension_semantics<parallel>, #tpu.dimension_semantics<parallel>], iteration_bounds = array<i64: 2, 2>, scalar_prefetch = 0 : i64, scratch_operands = 0 : i64, tpu.core_type = #tpu.core_type<tc>, window_params = [{transform_indices = @transform_0, window_bounds = array<i64: 1, 1, 6, 10, 8>}, {pipeline_mode = #tpu.pipeline_mode<synchronous>, transform_indices = @transform_1, window_bounds = array<i64: 9, 8, 16>}, {pipeline_mode = #tpu.pipeline_mode<synchronous>, transform_indices = @transform_2, window_bounds = array<i64: 1, 16>}, {transform_indices = @transform_3, window_bounds = array<i64: 1, 4, 8, 16>}, {transform_indices = @transform_4, window_bounds = array<i64: 1, 1, 2, 16>}]} {
    %c0 = arith.constant 0 : index
    %c0_0 = arith.constant 0 : index
    %c0_1 = arith.constant 0 : index
    %c0_2 = arith.constant 0 : index
    %c0_3 = arith.constant 0 : index
    %0 = vector.load %arg2[%c0, %c0_0, %c0_1, %c0_2, %c0_3] : memref<1x1x6x10x8xf32, #tpu.memory_space<vmem>>, vector<1x1x6x10x8xf32>
    %1 = vector.shape_cast %0 : vector<1x1x6x10x8xf32> to vector<6x10x8xf32>
    %cst = arith.constant 0.000000e+00 : f32
    %2 = vector.broadcast %cst : f32 to vector<32x16xf32>
    %3 = vector.extract_strided_slice %1 {offsets = [0, 0, 0], sizes = [4, 8, 8], strides = [1, 1, 1]} : vector<6x10x8xf32> to vector<4x8x8xf32>
    %4 = vector.shape_cast %3 : vector<4x8x8xf32> to vector<32x8xf32>
    %c0_4 = arith.constant 0 : index
    %c0_5 = arith.constant 0 : index
    %c0_6 = arith.constant 0 : index
    %5 = vector.load %arg3[%c0_4, %c0_5, %c0_6] : memref<9x8x16xf32, #tpu.memory_space<vmem>>, vector<1x8x16xf32>
    %6 = vector.shape_cast %5 : vector<1x8x16xf32> to vector<8x16xf32>
    %cst_7 = arith.constant dense<0.000000e+00> : vector<32x16xf32>
    %7 = tpu.matmul %4, %6, %cst_7 {dimension_numbers = #tpu.dot_dimension_numbers<[1], [0], [0], [1], [0, 0, 1, 1], [], []>} : vector<32x8xf32>, vector<8x16xf32>, vector<32x16xf32> -> vector<32x16xf32>
    %8 = arith.addf %2, %7 : vector<32x16xf32>
    %9 = vector.extract_strided_slice %1 {offsets = [0, 1, 0], sizes = [4, 8, 8], strides = [1, 1, 1]} : vector<6x10x8xf32> to vector<4x8x8xf32>
    %10 = vector.shape_cast %9 : vector<4x8x8xf32> to vector<32x8xf32>
    %c1 = arith.constant 1 : index
    %c0_8 = arith.constant 0 : index
    %c0_9 = arith.constant 0 : index
    %11 = vector.load %arg3[%c1, %c0_8, %c0_9] : memref<9x8x16xf32, #tpu.memory_space<vmem>>, vector<1x8x16xf32>
    %12 = vector.shape_cast %11 : vector<1x8x16xf32> to vector<8x16xf32>
    %cst_10 = arith.constant dense<0.000000e+00> : vector<32x16xf32>
    %13 = tpu.matmul %10, %12, %cst_10 {dimension_numbers = #tpu.dot_dimension_numbers<[1], [0], [0], [1], [0, 0, 1, 1], [], []>} : vector<32x8xf32>, vector<8x16xf32>, vector<32x16xf32> -> vector<32x16xf32>
    %14 = arith.addf %8, %13 : vector<32x16xf32>
    %15 = vector.extract_strided_slice %1 {offsets = [0, 2, 0], sizes = [4, 8, 8], strides = [1, 1, 1]} : vector<6x10x8xf32> to vector<4x8x8xf32>
    %16 = vector.shape_cast %15 : vector<4x8x8xf32> to vector<32x8xf32>
    %c2 = arith.constant 2 : index
    %c0_11 = arith.constant 0 : index
    %c0_12 = arith.constant 0 : index
    %17 = vector.load %arg3[%c2, %c0_11, %c0_12] : memref<9x8x16xf32, #tpu.memory_space<vmem>>, vector<1x8x16xf32>
    %18 = vector.shape_cast %17 : vector<1x8x16xf32> to vector<8x16xf32>
    %cst_13 = arith.constant dense<0.000000e+00> : vector<32x16xf32>
    %19 = tpu.matmul %16, %18, %cst_13 {dimension_numbers = #tpu.dot_dimension_numbers<[1], [0], [0], [1], [0, 0, 1, 1], [], []>} : vector<32x8xf32>, vector<8x16xf32>, vector<32x16xf32> -> vector<32x16xf32>
    %20 = arith.addf %14, %19 : vector<32x16xf32>
    %21 = vector.extract_strided_slice %1 {offsets = [1, 0, 0], sizes = [4, 8, 8], strides = [1, 1, 1]} : vector<6x10x8xf32> to vector<4x8x8xf32>
    %22 = vector.shape_cast %21 : vector<4x8x8xf32> to vector<32x8xf32>
    %c3 = arith.constant 3 : index
    %c0_14 = arith.constant 0 : index
    %c0_15 = arith.constant 0 : index
    %23 = vector.load %arg3[%c3, %c0_14, %c0_15] : memref<9x8x16xf32, #tpu.memory_space<vmem>>, vector<1x8x16xf32>
    %24 = vector.shape_cast %23 : vector<1x8x16xf32> to vector<8x16xf32>
    %cst_16 = arith.constant dense<0.000000e+00> : vector<32x16xf32>
    %25 = tpu.matmul %22, %24, %cst_16 {dimension_numbers = #tpu.dot_dimension_numbers<[1], [0], [0], [1], [0, 0, 1, 1], [], []>} : vector<32x8xf32>, vector<8x16xf32>, vector<32x16xf32> -> vector<32x16xf32>
    %26 = arith.addf %20, %25 : vector<32x16xf32>
    %27 = vector.extract_strided_slice %1 {offsets = [1, 1, 0], sizes = [4, 8, 8], strides = [1, 1, 1]} : vector<6x10x8xf32> to vector<4x8x8xf32>
    %28 = vector.shape_cast %27 : vector<4x8x8xf32> to vector<32x8xf32>
    %c4 = arith.constant 4 : index
    %c0_17 = arith.constant 0 : index
    %c0_18 = arith.constant 0 : index
    %29 = vector.load %arg3[%c4, %c0_17, %c0_18] : memref<9x8x16xf32, #tpu.memory_space<vmem>>, vector<1x8x16xf32>
    %30 = vector.shape_cast %29 : vector<1x8x16xf32> to vector<8x16xf32>
    %cst_19 = arith.constant dense<0.000000e+00> : vector<32x16xf32>
    %31 = tpu.matmul %28, %30, %cst_19 {dimension_numbers = #tpu.dot_dimension_numbers<[1], [0], [0], [1], [0, 0, 1, 1], [], []>} : vector<32x8xf32>, vector<8x16xf32>, vector<32x16xf32> -> vector<32x16xf32>
    %32 = arith.addf %26, %31 : vector<32x16xf32>
    %33 = vector.extract_strided_slice %1 {offsets = [1, 2, 0], sizes = [4, 8, 8], strides = [1, 1, 1]} : vector<6x10x8xf32> to vector<4x8x8xf32>
    %34 = vector.shape_cast %33 : vector<4x8x8xf32> to vector<32x8xf32>
    %c5 = arith.constant 5 : index
    %c0_20 = arith.constant 0 : index
    %c0_21 = arith.constant 0 : index
    %35 = vector.load %arg3[%c5, %c0_20, %c0_21] : memref<9x8x16xf32, #tpu.memory_space<vmem>>, vector<1x8x16xf32>
    %36 = vector.shape_cast %35 : vector<1x8x16xf32> to vector<8x16xf32>
    %cst_22 = arith.constant dense<0.000000e+00> : vector<32x16xf32>
    %37 = tpu.matmul %34, %36, %cst_22 {dimension_numbers = #tpu.dot_dimension_numbers<[1], [0], [0], [1], [0, 0, 1, 1], [], []>} : vector<32x8xf32>, vector<8x16xf32>, vector<32x16xf32> -> vector<32x16xf32>
    %38 = arith.addf %32, %37 : vector<32x16xf32>
    %39 = vector.extract_strided_slice %1 {offsets = [2, 0, 0], sizes = [4, 8, 8], strides = [1, 1, 1]} : vector<6x10x8xf32> to vector<4x8x8xf32>
    %40 = vector.shape_cast %39 : vector<4x8x8xf32> to vector<32x8xf32>
    %c6 = arith.constant 6 : index
    %c0_23 = arith.constant 0 : index
    %c0_24 = arith.constant 0 : index
    %41 = vector.load %arg3[%c6, %c0_23, %c0_24] : memref<9x8x16xf32, #tpu.memory_space<vmem>>, vector<1x8x16xf32>
    %42 = vector.shape_cast %41 : vector<1x8x16xf32> to vector<8x16xf32>
    %cst_25 = arith.constant dense<0.000000e+00> : vector<32x16xf32>
    %43 = tpu.matmul %40, %42, %cst_25 {dimension_numbers = #tpu.dot_dimension_numbers<[1], [0], [0], [1], [0, 0, 1, 1], [], []>} : vector<32x8xf32>, vector<8x16xf32>, vector<32x16xf32> -> vector<32x16xf32>
    %44 = arith.addf %38, %43 : vector<32x16xf32>
    %45 = vector.extract_strided_slice %1 {offsets = [2, 1, 0], sizes = [4, 8, 8], strides = [1, 1, 1]} : vector<6x10x8xf32> to vector<4x8x8xf32>
    %46 = vector.shape_cast %45 : vector<4x8x8xf32> to vector<32x8xf32>
    %c7 = arith.constant 7 : index
    %c0_26 = arith.constant 0 : index
    %c0_27 = arith.constant 0 : index
    %47 = vector.load %arg3[%c7, %c0_26, %c0_27] : memref<9x8x16xf32, #tpu.memory_space<vmem>>, vector<1x8x16xf32>
    %48 = vector.shape_cast %47 : vector<1x8x16xf32> to vector<8x16xf32>
    %cst_28 = arith.constant dense<0.000000e+00> : vector<32x16xf32>
    %49 = tpu.matmul %46, %48, %cst_28 {dimension_numbers = #tpu.dot_dimension_numbers<[1], [0], [0], [1], [0, 0, 1, 1], [], []>} : vector<32x8xf32>, vector<8x16xf32>, vector<32x16xf32> -> vector<32x16xf32>
    %50 = arith.addf %44, %49 : vector<32x16xf32>
    %51 = vector.extract_strided_slice %1 {offsets = [2, 2, 0], sizes = [4, 8, 8], strides = [1, 1, 1]} : vector<6x10x8xf32> to vector<4x8x8xf32>
    %52 = vector.shape_cast %51 : vector<4x8x8xf32> to vector<32x8xf32>
    %c8 = arith.constant 8 : index
    %c0_29 = arith.constant 0 : index
    %c0_30 = arith.constant 0 : index
    %53 = vector.load %arg3[%c8, %c0_29, %c0_30] : memref<9x8x16xf32, #tpu.memory_space<vmem>>, vector<1x8x16xf32>
    %54 = vector.shape_cast %53 : vector<1x8x16xf32> to vector<8x16xf32>
    %cst_31 = arith.constant dense<0.000000e+00> : vector<32x16xf32>
    %55 = tpu.matmul %52, %54, %cst_31 {dimension_numbers = #tpu.dot_dimension_numbers<[1], [0], [0], [1], [0, 0, 1, 1], [], []>} : vector<32x8xf32>, vector<8x16xf32>, vector<32x16xf32> -> vector<32x16xf32>
    %56 = arith.addf %50, %55 : vector<32x16xf32>
    %c0_32 = arith.constant 0 : index
    %c0_33 = arith.constant 0 : index
    %57 = vector.load %arg4[%c0_32, %c0_33] : memref<1x16xf32, #tpu.memory_space<vmem>>, vector<1x16xf32>
    %58 = vector.broadcast %57 : vector<1x16xf32> to vector<32x16xf32>
    %59 = arith.addf %56, %58 : vector<32x16xf32>
    %cst_34 = arith.constant 1.000000e+00 : f32
    %60 = vector.broadcast %cst_34 : f32 to vector<1x32xf32>
    %cst_35 = arith.constant dense<0.000000e+00> : vector<1x16xf32>
    %61 = tpu.matmul %60, %59, %cst_35 {dimension_numbers = #tpu.dot_dimension_numbers<[1], [0], [0], [1], [0, 0, 1, 1], [], []>} : vector<1x32xf32>, vector<32x16xf32>, vector<1x16xf32> -> vector<1x16xf32>
    %62 = arith.mulf %59, %59 : vector<32x16xf32>
    %cst_36 = arith.constant dense<0.000000e+00> : vector<1x16xf32>
    %63 = tpu.matmul %60, %62, %cst_36 {dimension_numbers = #tpu.dot_dimension_numbers<[1], [0], [0], [1], [0, 0, 1, 1], [], []>} : vector<1x32xf32>, vector<32x16xf32>, vector<1x16xf32> -> vector<1x16xf32>
    %64 = tpu.concatenate %61, %63 in 0 : vector<1x16xf32>, vector<1x16xf32> -> vector<2x16xf32>
    %c0_37 = arith.constant 0 : index
    %c0_38 = arith.constant 0 : index
    %c0_39 = arith.constant 0 : index
    %c0_40 = arith.constant 0 : index
    %65 = vector.load %arg6[%c0_37, %c0_38, %c0_39, %c0_40] : memref<1x1x2x16xf32, #tpu.memory_space<vmem>>, vector<1x1x2x16xf32>
    %66 = vector.shape_cast %65 : vector<1x1x2x16xf32> to vector<2x16xf32>
    %67 = vector.shape_cast %64 : vector<2x16xf32> to vector<1x1x2x16xf32>
    tpu.vector_store %arg6[%c0_37, %c0_38, %c0_39, %c0_40], %67 {strides = array<i32>} : memref<1x1x2x16xf32, #tpu.memory_space<vmem>>, vector<1x1x2x16xf32>,
    %68 = vector.shape_cast %59 : vector<32x16xf32> to vector<4x8x16xf32>
    %c0_41 = arith.constant 0 : index
    %c0_42 = arith.constant 0 : index
    %c0_43 = arith.constant 0 : index
    %c0_44 = arith.constant 0 : index
    %69 = vector.load %arg5[%c0_41, %c0_42, %c0_43, %c0_44] : memref<1x4x8x16xf32, #tpu.memory_space<vmem>>, vector<1x4x8x16xf32>
    %70 = vector.shape_cast %69 : vector<1x4x8x16xf32> to vector<4x8x16xf32>
    %71 = vector.shape_cast %68 : vector<4x8x16xf32> to vector<1x4x8x16xf32>
    tpu.vector_store %arg5[%c0_41, %c0_42, %c0_43, %c0_44], %71 {strides = array<i32>} : memref<1x4x8x16xf32, #tpu.memory_space<vmem>>, vector<1x4x8x16xf32>,
    return
  }
  func.func @transform_0(%arg0: i32, %arg1: i32) -> (i32, i32, i32, i32, i32) {
    %c0_i32 = arith.constant 0 : i32
    %c0_i32_0 = arith.constant 0 : i32
    %c0_i32_1 = arith.constant 0 : i32
    %c0_i32_2 = arith.constant 0 : i32
    return %arg0, %arg1, %c0_i32, %c0_i32_0, %c0_i32_1 : i32, i32, i32, i32, i32
  }
  func.func @transform_1(%arg0: i32, %arg1: i32) -> (i32, i32, i32) {
    %c0_i32 = arith.constant 0 : i32
    %c0_i32_0 = arith.constant 0 : i32
    %c0_i32_1 = arith.constant 0 : i32
    %c0_i32_2 = arith.constant 0 : i32
    return %c0_i32, %c0_i32_0, %c0_i32_1 : i32, i32, i32
  }
  func.func @transform_2(%arg0: i32, %arg1: i32) -> (i32, i32) {
    %c0_i32 = arith.constant 0 : i32
    %c0_i32_0 = arith.constant 0 : i32
    %c0_i32_1 = arith.constant 0 : i32
    return %c0_i32, %c0_i32_0 : i32, i32
  }
  func.func @transform_3(%arg0: i32, %arg1: i32) -> (i32, i32, i32, i32) {
    %c0_i32 = arith.constant 0 : i32
    %c0_i32_0 = arith.constant 0 : i32
    %c0_i32_1 = arith.constant 0 : i32
    return %arg0, %arg1, %c0_i32, %c0_i32_0 : i32, i32, i32, i32
  }
  func.func @transform_4(%arg0: i32, %arg1: i32) -> (i32, i32, i32, i32) {
    %c0_i32 = arith.constant 0 : i32
    %c0_i32_0 = arith.constant 0 : i32
    %c0_i32_1 = arith.constant 0 : i32
    return %arg0, %arg1, %c0_i32, %c0_i32_0 : i32, i32, i32, i32
  }
}

</mosaic_0001>

<llo_original>
// kernel: tile.8
$region0: #{tile.8}
  #allocation0 [shape = 's32[1]{0}', space=sflag, size = 0x4, scoped, tag = 'scoped memory for tile.8']
  %s0 = inlined_call_operand.vmem [shape: f32[4], index: 0, kind: input, shape index: {}]
  %s1 = inlined_call_operand.vmem [shape: f32[4,4], index: 1, kind: output, shape index: {}]
  // Predicated region
  $region2: #{tile.8} parent=0 // pred_check
    _
  $region3: #{tile.8} parent=0 // pred_check_branch
    %3 = sbr.rel (0) target = $region5
  $region4: #{tile.8} parent=0 // pred_region
    _
  $region5: #{tile.8} parent=0 // pred_fallthru
    _
  %v4 = vld [vmem:[%s0] ss:$0 sm:$0xff]
  %5 = vst [vmem:[%s1] sm:$0xf] %v4

// kernel: tile.9
$region0: #{tile.9}
  %s0 = inlined_call_operand.vmem [shape: f32[4,4], index: 0, kind: input, shape index: {}]
  %s1 = inlined_call_operand.vmem [shape: f32[1,16], index: 1, kind: output, shape index: {}]
  $region1: #{tile.9} parent=0
    #allocation0 [shape = 'u8[4096]{0}', space=vmem, size = 0x1000, scoped, tag = 'scoped mem for output reshape']
    #allocation1 [shape = 'u8[4096]{0}', space=vmem, size = 0x1000, scoped, tag = 'scoped mem for input reshape']
    %s3 = sshllo.u32 0, 4
    %v4 = vld [vmem:[%s0] sm:%s3]
    %5 = vst [vmem:[#allocation1] sm:%s3] %v4
    %v6 = vld [vmem:[#allocation1] sm:$0x1]
    %vm7 = vcmask 31744
    %8 = vst.msk [vmem:[#allocation0] sm:$0x1] %vm7, %v6
    %s9 = scalar_lea.vmem [#allocation1], 3
    %v10 = vld [vmem:[%s9] sm:$0x1]
    %11 = vrot.lane.b32.xlu0 %v10, 12
    %v12 = vpop.permute.xlu0 %11
    %vm13 = vcmask 130144
    %14 = vst.msk [vmem:[#allocation0] sm:$0x1] %vm13, %v12
    %s15 = scalar_lea.vmem [#allocation1], 2
    %v16 = vld [vmem:[%s15] sm:$0x1]
    %17 = vrot.lane.b32.xlu0 %v16, 8
    %v18 = vpop.permute.xlu0 %17
    %vm19 = vcmask 97344
    %20 = vst.msk [vmem:[#allocation0] sm:$0x1] %vm19, %v18
    %s21 = scalar_lea.vmem [#allocation1], 1
    %v22 = vld [vmem:[%s21] sm:$0x1]
    %23 = vrot.lane.b32.xlu0 %v22, 4
    %v24 = vpop.permute.xlu0 %23
    %vm25 = vcmask 64544
    %26 = vst.msk [vmem:[#allocation0] sm:$0x1] %vm25, %v24
    %s28 = sshllo.u32 0, 1
    %v30 = vld [vmem:[#allocation0] sm:%s28]
    %s31 = sshllo.u32 0, 1
    %32 = vst [vmem:[%s1] sm:%s31] %v30

// kernel: squeeze.34
$region0: #{squeeze.34}
  %s0 = inlined_call_operand.vmem [shape: f32[16], index: 0, kind: input, shape index: {}]
  %s1 = inlined_call_operand.vmem [shape: f32[4,4], index: 1, kind: output, shape index: {}]
  $region1: #{squeeze.34} parent=0
    #allocation0 [shape = 'u8[4096]{0}', space=vmem, size = 0x1000, scoped, tag = 'scoped mem for output reshape']
    #allocation1 [shape = 'u8[4096]{0}', space=vmem, size = 0x1000, scoped, tag = 'scoped mem for input reshape']
    %s3 = sshllo.u32 0, 1
    %v4 = vld [vmem:[%s0] sm:%s3]
    %5 = vst [vmem:[#allocation1] sm:%s3] %v4
    %v6 = vld [vmem:[#allocation1] sm:$0x1]
    %vm7 = vcmask 31744
    %8 = vst.msk [vmem:[#allocation0] sm:$0x1] %vm7, %v6
    %v9 = vld [vmem:[#allocation1] sm:$0x1]
    %10 = vrot.lane.b32.xlu0 %v9, 124
    %v11 = vpop.permute.xlu0 %10
    %vm12 = vcmask 31744
    %s13 = scalar_lea.vmem [#allocation0], 1
    %14 = vst.msk [vmem:[%s13] sm:$0x1] %vm12, %v11
    %v15 = vld [vmem:[#allocation1] sm:$0x1]
    %16 = vrot.lane.b32.xlu0 %v15, 120
    %v17 = vpop.permute.xlu0 %16
    %vm18 = vcmask 31744
    %s19 = scalar_lea.vmem [#allocation0], 2
    %20 = vst.msk [vmem:[%s19] sm:$0x1] %vm18, %v17
    %v21 = vld [vmem:[#allocation1] sm:$0x1]
    %22 = vrot.lane.b32.xlu0 %v21, 116
    %v23 = vpop.permute.xlu0 %22
    %vm24 = vcmask 31744
    %s25 = scalar_lea.vmem [#allocation0], 3
    %26 = vst.msk [vmem:[%s25] sm:$0x1] %vm24, %v23
    %s28 = sshllo.u32 0, 4
    %v30 = vld [vmem:[#allocation0] sm:%s28]
    %s31 = sshllo.u32 0, 4
    %32 = vst [vmem:[%s1] sm:%s31] %v30

// kernel: unet_layer_forward.2
$region0: #{unet_layer_forward.2}
  #allocation0 [shape = 'u32[]', space=smem, size = 0x4, offset = 0x4, fixed_abs, tag = 'smem constant byte address 0x4 - core index']
  #allocation1 [shape = 'u32[144,128]{1,0:T(1,128)}', space=vmem, size = 0x12000, scoped, tag = 'internal scratch']
  %s0 = inlined_call_operand.vmem [shape: f32[2,2,4,5,9,4], index: 0, kind: input, shape index: {}]
  %s1 = inlined_call_operand.vmem [shape: f32[16,4,8], index: 1, kind: input, shape index: {}]
  %s2 = inlined_call_operand.vmem [shape: f32[1,8], index: 2, kind: input, shape index: {}]
  %s3 = inlined_call_operand.vmem [shape: f32[2,8,8,8], index: 3, kind: output, shape index: {}]
  %s4 = sld [smem:[#allocation0]]
  $region45: #{unet_layer_forward.2} parent=0
    _
  %s6 = ssub.s32 1, %s4
  %s7 = scalar_select 0, %s6, %s4
  loop: start=0, step=1, limit=6
  $region2: #{unet_layer_forward.2} parent=0 // loop_pre_header
    _
  $region3: #{unet_layer_forward.2} parent=0 // loop_header
    %s9 = sphi 0, %s13
    %p10 = scmp.ge.s32.totalorder %s9, 6
    %s16 = sphi 0, %s28
    %s17 = sphi 0, %s24
    %s18 = sphi 0, %s16
    %s19 = sphi 0, %s17
    %s20 = sphi 0, %s18
    %s21 = sphi 0, %s19
    %s33 = sphi 0, %s35
    %s36 = sphi 0, %s33
    %s37 = sphi 0, %s36
    %s53 = sphi 0, %s37
    %s57 = sphi 0, %s57
    %s59 = sphi 0, %s57
    %s60 = sphi 0, %s59
    %s74 = sphi 0, %s60
    %s78 = sphi 0, %s78
    %s80 = sphi 0, %s78
    %s81 = sphi 0, %s80
    %s95 = sphi 0, %s81
    %s103 = sphi 0, %s105
    %s106 = sphi 0, %s103
    %s107 = sphi 0, %s106
    %s123 = sphi 0, %s107
  $region4: #{unet_layer_forward.2} parent=0 // loop_header_branch
    %12 = sbr.rel (%p10) target = $region8
  $region5: #{unet_layer_forward.2} parent=0 // loop_body
    %s14 = ssub.s32 %s9, 1
    %s15 = ssub.s32 %s9, 2
    %s22 = sadd.s32 1, %s17
    %p23 = scmp.ge.s32.totalorder %s22, 2
    %s24 = scalar_select %p23, 0, %s22
    %s25 = sadd.s32 1, %s16
    %s26 = scalar_select %p23, %s25, %s16
    %p27 = scmp.ge.s32.totalorder %s26, 2
    %s28 = scalar_select %p27, 0, %s26
    %s29 = ssub.s32 %s16, %s28
    %s30 = ssub.s32 %s17, %s24
    %s31 = sor.u32 %s29, %s30
    %p32 = scmp.eq.s32.totalorder %s31, 0
    %s34 = sadd.s32 %s33, 1
    %s35 = scalar_select %p32, %s33, %s34
    %p38 = pneg %p32
    %p39 = scmp.eq.s32.totalorder %s9, 3
    %p40 = por %p38, %p39
    %p41 = scmp.ne.s32.totalorder %s33, %s36
    %p42 = scmp.eq.s32.totalorder %s9, 0
    %p43 = por %p41, %p42
    %p44 = scmp.ne.s32.totalorder %s33, %s36
    %p45 = scmp.eq.s32.totalorder %s14, 3
    %p46 = por %p44, %p45
    %p47 = scmp.ne.s32.totalorder %s36, %s37
    %p48 = scmp.eq.s32.totalorder %s14, 0
    %p49 = por %p47, %p48
    %p50 = scmp.ne.s32.totalorder %s36, %s37
    %p51 = scmp.eq.s32.totalorder %s15, 3
    %p52 = por %p50, %p51
    %p54 = scmp.ne.s32.totalorder %s37, %s53
    %p55 = scmp.eq.s32.totalorder %s15, 0
    %p56 = por %p54, %p55
    %s58 = sadd.s32 %s57, 1
    %p61 = scmp.eq.s32.totalorder %s9, 3
    %p62 = scmp.ne.s32.totalorder %s57, %s59
    %p63 = scmp.eq.s32.totalorder %s9, 0
    %p64 = por %p62, %p63
    %p65 = scmp.ne.s32.totalorder %s57, %s59
    %p66 = scmp.eq.s32.totalorder %s14, 3
    %p67 = por %p65, %p66
    %p68 = scmp.ne.s32.totalorder %s59, %s60
    %p69 = scmp.eq.s32.totalorder %s14, 0
    %p70 = por %p68, %p69
    %p71 = scmp.ne.s32.totalorder %s59, %s60
    %p72 = scmp.eq.s32.totalorder %s15, 3
    %p73 = por %p71, %p72
    %p75 = scmp.ne.s32.totalorder %s60, %s74
    %p76 = scmp.eq.s32.totalorder %s15, 0
    %p77 = por %p75, %p76
    %s79 = sadd.s32 %s78, 1
    %p82 = scmp.eq.s32.totalorder %s9, 3
    %p83 = scmp.ne.s32.totalorder %s78, %s80
    %p84 = scmp.eq.s32.totalorder %s9, 0
    %p85 = por %p83, %p84
    %p86 = scmp.ne.s32.totalorder %s78, %s80
    %p87 = scmp.eq.s32.totalorder %s14, 3
    %p88 = por %p86, %p87
    %p89 = scmp.ne.s32.totalorder %s80, %s81
    %p90 = scmp.eq.s32.totalorder %s14, 0
    %p91 = por %p89, %p90
    %p92 = scmp.ne.s32.totalorder %s80, %s81
    %p93 = scmp.eq.s32.totalorder %s15, 3
    %p94 = por %p92, %p93
    %p96 = scmp.ne.s32.totalorder %s81, %s95
    %p97 = scmp.eq.s32.totalorder %s15, 0
    %p98 = por %p96, %p97
    %s99 = ssub.s32 %s16, %s28
    %s100 = ssub.s32 %s17, %s24
    %s101 = sor.u32 %s99, %s100
    %p102 = scmp.eq.s32.totalorder %s101, 0
    %s104 = sadd.s32 %s103, 1
    %s105 = scalar_select %p102, %s103, %s104
    %p108 = pneg %p102
    %p109 = scmp.eq.s32.totalorder %s9, 3
    %p110 = por %p108, %p109
    %p111 = scmp.ne.s32.totalorder %s103, %s106
    %p112 = scmp.eq.s32.totalorder %s9, 0
    %p113 = por %p111, %p112
    %p114 = scmp.ne.s32.totalorder %s103, %s106
    %p115 = scmp.eq.s32.totalorder %s14, 3
    %p116 = por %p114, %p115
    %p117 = scmp.ne.s32.totalorder %s106, %s107
    %p118 = scmp.eq.s32.totalorder %s14, 0
    %p119 = por %p117, %p118
    %p120 = scmp.ne.s32.totalorder %s106, %s107
    %p121 = scmp.eq.s32.totalorder %s15, 3
    %p122 = por %p120, %p121
    %p124 = scmp.ne.s32.totalorder %s107, %s123
    %p125 = scmp.eq.s32.totalorder %s15, 0
    %p126 = por %p124, %p125
    %p127 = scmp.le.s32.totalorder 1, %s9
    %p128 = scmp.lt.s32.totalorder %s9, 5
    %p129 = pnand %p127, %p128
    %p130 = pneg %p129
    // Predicated region
    $region9: #{unet_layer_forward.2} parent=5 // pred_check
      _
    $region10: #{unet_layer_forward.2} parent=5 // pred_check_branch
      %132 = sbr.rel (%p129) target = $region12
    $region11: #{unet_layer_forward.2} parent=5 // pred_region
      %s133 = ssub.s32 %s9, 1
      // Predicated region
      $region13: #{unet_layer_forward.2} parent=11 // pred_check
        %p134 = pneg %p70
      $region14: #{unet_layer_forward.2} parent=11 // pred_check_branch
        %136 = sbr.rel (%p134) target = $region16
      $region15: #{unet_layer_forward.2} parent=11 // pred_region
        _
      $region16: #{unet_layer_forward.2} parent=11 // pred_fallthru
        _
      // Predicated region
      $region17: #{unet_layer_forward.2} parent=11 // pred_check
        %p137 = pneg %p91
      $region18: #{unet_layer_forward.2} parent=11 // pred_check_branch
        %139 = sbr.rel (%p137) target = $region20
      $region19: #{unet_layer_forward.2} parent=11 // pred_region
        _
      $region20: #{unet_layer_forward.2} parent=11 // pred_fallthru
        _
    $region12: #{unet_layer_forward.2} parent=5 // pred_fallthru
      _
    %p140 = scmp.lt.s32.totalorder %s9, 4
    // Predicated region
    $region21: #{unet_layer_forward.2} parent=5 // pred_check
      %p141 = pneg %p140
    $region22: #{unet_layer_forward.2} parent=5 // pred_check_branch
      %143 = sbr.rel (%p141) target = $region24
    $region23: #{unet_layer_forward.2} parent=5 // pred_region
      // Predicated region
      $region25: #{unet_layer_forward.2} parent=23 // pred_check
        %p144 = pneg %p43
      $region26: #{unet_layer_forward.2} parent=23 // pred_check_branch
        %146 = sbr.rel (%p144) target = $region28
      $region27: #{unet_layer_forward.2} parent=23 // pred_region
        %p147 = scmp.lt.s32.totalorder %s16, 1
        %s148 = scalar_select %p147, %s16, 1
        %p149 = scmp.lt.s32.totalorder %s17, 1
        %s150 = scalar_select %p149, %s17, 1
        %s151 = smul.addr %s150, 40
        %s152 = smul.addr %s148, 80
        %s153 = sadd.s32 %s151, %s152
        %s154 = smul.addr %s153, 8
        %s155 = scalar_lea.vmem %s0, %s154
      $region28: #{unet_layer_forward.2} parent=23 // pred_fallthru
        _
    $region24: #{unet_layer_forward.2} parent=5 // pred_fallthru
      _
    %p156 = scmp.le.s32.totalorder 1, %s9
    %p157 = scmp.lt.s32.totalorder %s9, 5
    %p158 = pnand %p156, %p157
    %p159 = pneg %p158
    // Predicated region
    $region29: #{unet_layer_forward.2} parent=5 // pred_check
      _
    $region30: #{unet_layer_forward.2} parent=5 // pred_check_branch
      %161 = sbr.rel (%p158) target = $region32
    $region31: #{unet_layer_forward.2} parent=5 // pred_region
      %s162 = ssub.s32 %s9, 1
      %p163 = scmp.lt.s32.totalorder %s18, 1
      %s164 = scalar_select %p163, %s18, 1
      %p165 = scmp.lt.s32.totalorder %s19, 1
      %s166 = scalar_select %p165, %s19, 1
      %s167 = smul.addr %s166, 40
      %s168 = smul.addr %s164, 80
      %s169 = sadd.s32 %s167, %s168
      %s170 = smul.addr %s169, 8
      %s171 = scalar_lea.vmem %s0, %s170
      %p172 = pneg %p49
      %p173 = pneg %p46
      %p174 = pneg %p70
      %p175 = pneg %p67
      %p176 = pneg %p91
      %p177 = pneg %p88
      %p178 = pneg %p119
      %p179 = pneg %p116
      %s180 = smul.u32 4, %s19
      %p181 = scmp.lt.s32.totalorder %s18, 1
      %s182 = scalar_select %p181, %s18, 1
      %p183 = scmp.lt.s32.totalorder %s180, 7
      %s184 = scalar_select %p183, %s180, 7
      %s185 = smul.addr %s182, 8
      %s186 = sadd.s32 %s184, %s185
      %s187 = smul.addr %s186, 8
      %s188 = scalar_lea.vmem %s3, %s187
      %p189 = scmp.lt.s32.totalorder %s18, 1
      %s190 = scalar_select %p189, %s18, 1
      %p191 = scmp.lt.s32.totalorder %s19, 1
      %s192 = scalar_select %p191, %s19, 1
      %s193 = smul.addr %s192, 40
      %s194 = smul.addr %s190, 80
      %s195 = sadd.s32 %s193, %s194
      %s196 = smul.addr %s195, 8
      %s197 = scalar_lea.vmem %s0, %s196
      %s198 = smul.u32 4, %s19
      %p199 = scmp.lt.s32.totalorder %s18, 1
      %s200 = scalar_select %p199, %s18, 1
      %p201 = scmp.lt.s32.totalorder %s198, 7
      %s202 = scalar_select %p201, %s198, 7
      %s203 = smul.addr %s200, 8
      %s204 = sadd.s32 %s202, %s203
      %s205 = smul.addr %s204, 8
      %s206 = scalar_lea.vmem %s3, %s205
      %s207 = smul.u32 4, %s19
      %v208 = vld [vmem:[%s197] sm:$0xff]
      %v209 = vld [vmem:[%s197 + $0x8] sm:$0x1]
      %v210 = vld [vmem:[%s197 + $0x10] sm:$0xff]
      %v211 = vld [vmem:[%s197 + $0x18] sm:$0x1]
      %v212 = vld [vmem:[%s197 + $0x20] sm:$0xff]
      %v213 = vld [vmem:[%s197 + $0x28] sm:$0x1]
      %v214 = vld [vmem:[%s197 + $0x30] sm:$0xff]
      %v215 = vld [vmem:[%s197 + $0x38] sm:$0x1]
      %v216 = vld [vmem:[%s197 + $0x40] sm:$0xff]
      %v217 = vld [vmem:[%s197 + $0x48] sm:$0x1]
      %s218 = scalar_lea.vmem %s197, 80
      %v219 = vld [vmem:[%s218] sm:$0xff]
      %v220 = vld [vmem:[%s218 + $0x8] sm:$0x1]
      %v221 = vld [vmem:[%s218 + $0x10] sm:$0xff]
      %v222 = vld [vmem:[%s218 + $0x18] sm:$0x1]
      %v223 = vld [vmem:[%s218 + $0x20] sm:$0xff]
      %v224 = vld [vmem:[%s218 + $0x28] sm:$0x1]
      %v225 = vld [vmem:[%s218 + $0x30] sm:$0xff]
      %v226 = vld [vmem:[%s218 + $0x38] sm:$0x1]
      %v227 = vld [vmem:[%s218 + $0x40] sm:$0xff]
      %v228 = vld [vmem:[%s218 + $0x48] sm:$0x1]
      %s229 = scalar_lea.vmem %s197, 160
      %v230 = vld [vmem:[%s229] sm:$0xff]
      %v231 = vld [vmem:[%s229 + $0x8] sm:$0x1]
      %v232 = vld [vmem:[%s229 + $0x10] sm:$0xff]
      %v233 = vld [vmem:[%s229 + $0x18] sm:$0x1]
      %v234 = vld [vmem:[%s229 + $0x20] sm:$0xff]
      %v235 = vld [vmem:[%s229 + $0x28] sm:$0x1]
      %v236 = vld [vmem:[%s229 + $0x30] sm:$0xff]
      %v237 = vld [vmem:[%s229 + $0x38] sm:$0x1]
      %v238 = vld [vmem:[%s229 + $0x40] sm:$0xff]
      %v239 = vld [vmem:[%s229 + $0x48] sm:$0x1]
      %s240 = scalar_lea.vmem %s197, 240
      %v241 = vld [vmem:[%s240] sm:$0xff]
      %v242 = vld [vmem:[%s240 + $0x8] sm:$0x1]
      %v243 = vld [vmem:[%s240 + $0x10] sm:$0xff]
      %v244 = vld [vmem:[%s240 + $0x18] sm:$0x1]
      %v245 = vld [vmem:[%s240 + $0x20] sm:$0xff]
      %v246 = vld [vmem:[%s240 + $0x28] sm:$0x1]
      %v247 = vld [vmem:[%s240 + $0x30] sm:$0xff]
      %v248 = vld [vmem:[%s240 + $0x38] sm:$0x1]
      %v249 = vld [vmem:[%s240 + $0x40] sm:$0xff]
      %v250 = vld [vmem:[%s240 + $0x48] sm:$0x1]
      %v251 = vld [vmem:[%s1] sm:$0xf]
      %s252 = scalar_lea.vmem %s1, 4
      %v253 = vld [vmem:[%s252] sm:$0xf]
      %vm254 = vcmask 31744
      %v256 = vsel %vm254, %v219, 0
      %v259 = vsel %vm254, %v221, 0
      %v262 = vsel %vm254, %v223, 0
      %v265 = vsel %vm254, %v225, 0
      %vm267 = vcmask 1043456
      %v269 = vsel %vm267, %v253, 0
      %271 = vmatprep.subr.mxu0 0.0
      %272 = vmatpush1.msra.mxu0 %v269
      %273 = vmatprep.subr.mxu0 0.0
      %274 = vmatpush1.msra.mxu0 0.0
      %275 = vmatprep.subr.mxu0 0.0
      %276 = vmatpush1.msra.mxu0 0.0
      %277 = vmatprep.subr.mxu0 0.0
      %278 = vmatpush1.msra.mxu0 0.0
      %279 = vmatprep.subr.mxu0 0.0
      %280 = vmatpush1.msra.mxu0 0.0
      %281 = vmatprep.subr.mxu0 0.0
      %282 = vmatpush1.msra.mxu0 0.0
      %283 = vmatprep.subr.mxu0 0.0
      %284 = vmatpush1.msra.mxu0 0.0
      %285 = vmatprep.subr.mxu0 0.0
      %286 = vmatpush1.msra.mxu0 0.0
      %287 = vmatprep.subr.mxu0 0.0
      %288 = vmatpush1.msra.mxu0 0.0
      %289 = vmatprep.subr.mxu0 0.0
      %290 = vmatpush1.msra.mxu0 0.0
      %291 = vmatprep.subr.mxu0 0.0
      %292 = vmatpush1.msra.mxu0 0.0
      %293 = vmatprep.subr.mxu0 0.0
      %294 = vmatpush1.msra.mxu0 0.0
      %295 = vmatprep.subr.mxu0 0.0
      %296 = vmatpush1.msra.mxu0 0.0
      %297 = vmatprep.subr.mxu0 0.0
      %298 = vmatpush1.msra.mxu0 0.0
      %299 = vmatprep.subr.mxu0 0.0
      %300 = vmatpush1.msra.mxu0 0.0
      %301 = vmatprep.subr.mxu0 0.0
      %302 = vmatpush1.msra.mxu0 0.0
      %303 = vmatprep.subr.mxu0 0.0
      %304 = vmatpush1.msra.mxu0 0.0
      %305 = vmatprep.subr.mxu0 0.0
      %306 = vmatpush1.msra.mxu0 0.0
      %307 = vmatprep.subr.mxu0 0.0
      %308 = vmatpush1.msra.mxu0 0.0
      %309 = vmatprep.subr.mxu0 0.0
      %310 = vmatpush1.msra.mxu0 0.0
      %311 = vmatprep.subr.mxu0 0.0
      %312 = vmatpush1.msra.mxu0 0.0
      %313 = vmatprep.subr.mxu0 0.0
      %314 = vmatpush1.msra.mxu0 0.0
      %315 = vmatprep.subr.mxu0 0.0
      %316 = vmatpush1.msra.mxu0 0.0
      %317 = vmatprep.subr.mxu0 0.0
      %318 = vmatpush1.msra.mxu0 0.0
      %319 = vmatprep.subr.mxu0 0.0
      %320 = vmatpush1.msra.mxu0 0.0
      %321 = vmatprep.subr.mxu0 0.0
      %322 = vmatpush1.msra.mxu0 0.0
      %323 = vmatprep.subr.mxu0 0.0
      %324 = vmatpush1.msra.mxu0 0.0
      %325 = vmatprep.subr.mxu0 0.0
      %326 = vmatpush1.msra.mxu0 0.0
      %327 = vmatprep.subr.mxu0 0.0
      %328 = vmatpush1.msra.mxu0 0.0
      %329 = vmatprep.subr.mxu0 0.0
      %330 = vmatpush1.msra.mxu0 0.0
      %331 = vmatprep.subr.mxu0 0.0
      %332 = vmatpush1.msra.mxu0 0.0
      %333 = vmatprep.subr.mxu0 0.0
      %334 = vmatpush1.msra.mxu0 0.0
      %335 = vmatprep.mubr.f32.mxu0 0.0
      %336 = vmatmul.mubr.f32.gmra.mrb[0].mxu0 %v256
      %v337 = vpop.f32.mrb[0].mxu0
      %v338 = vadd.f32 0.0, %v337
      %v339 = vpop.f32.mrb[0].mxu0
      %340 = vmatprep.mubr.f32.mxu0 0.0
      %341 = vmatmul.mubr.f32.gmra.mrb[0].mxu0 %v259
      %v342 = vpop.f32.mrb[0].mxu0
      %v343 = vadd.f32 0.0, %v342
      %v344 = vpop.f32.mrb[0].mxu0
      %345 = vmatprep.mubr.f32.mxu0 0.0
      %346 = vmatmul.mubr.f32.gmra.mrb[0].mxu0 %v262
      %v347 = vpop.f32.mrb[0].mxu0
      %v348 = vadd.f32 0.0, %v347
      %v349 = vpop.f32.mrb[0].mxu0
      %350 = vmatprep.mubr.f32.mxu0 0.0
      %351 = vmatmul.mubr.f32.gmra.mrb[0].mxu0 %v265
      %v352 = vpop.f32.mrb[0].mxu0
      %v353 = vadd.f32 0.0, %v352
      %v354 = vpop.f32.mrb[0].mxu0
      %355 = vdwg.mxu0
      %v357 = vsel %vm254, %v208, 0
      %v360 = vsel %vm254, %v210, 0
      %v363 = vsel %vm254, %v212, 0
      %v366 = vsel %vm254, %v214, 0
      %v369 = vsel %vm267, %v251, 0
      %371 = vmatprep.subr.mxu0 0.0
      %372 = vmatpush1.msra.mxu0 %v369
      %373 = vmatprep.subr.mxu0 0.0
      %374 = vmatpush1.msra.mxu0 0.0
      %375 = vmatprep.subr.mxu0 0.0
      %376 = vmatpush1.msra.mxu0 0.0
      %377 = vmatprep.subr.mxu0 0.0
      %378 = vmatpush1.msra.mxu0 0.0
      %379 = vmatprep.subr.mxu0 0.0
      %380 = vmatpush1.msra.mxu0 0.0
      %381 = vmatprep.subr.mxu0 0.0
      %382 = vmatpush1.msra.mxu0 0.0
      %383 = vmatprep.subr.mxu0 0.0
      %384 = vmatpush1.msra.mxu0 0.0
      %385 = vmatprep.subr.mxu0 0.0
      %386 = vmatpush1.msra.mxu0 0.0
      %387 = vmatprep.subr.mxu0 0.0
      %388 = vmatpush1.msra.mxu0 0.0
      %389 = vmatprep.subr.mxu0 0.0
      %390 = vmatpush1.msra.mxu0 0.0
      %391 = vmatprep.subr.mxu0 0.0
      %392 = vmatpush1.msra.mxu0 0.0
      %393 = vmatprep.subr.mxu0 0.0
      %394 = vmatpush1.msra.mxu0 0.0
      %395 = vmatprep.subr.mxu0 0.0
      %396 = vmatpush1.msra.mxu0 0.0
      %397 = vmatprep.subr.mxu0 0.0
      %398 = vmatpush1.msra.mxu0 0.0
      %399 = vmatprep.subr.mxu0 0.0
      %400 = vmatpush1.msra.mxu0 0.0
      %401 = vmatprep.subr.mxu0 0.0
      %402 = vmatpush1.msra.mxu0 0.0
      %403 = vmatprep.subr.mxu0 0.0
      %404 = vmatpush1.msra.mxu0 0.0
      %405 = vmatprep.subr.mxu0 0.0
      %406 = vmatpush1.msra.mxu0 0.0
      %407 = vmatprep.subr.mxu0 0.0
      %408 = vmatpush1.msra.mxu0 0.0
      %409 = vmatprep.subr.mxu0 0.0
      %410 = vmatpush1.msra.mxu0 0.0
      %411 = vmatprep.subr.mxu0 0.0
      %412 = vmatpush1.msra.mxu0 0.0
      %413 = vmatprep.subr.mxu0 0.0
      %414 = vmatpush1.msra.mxu0 0.0
      %415 = vmatprep.subr.mxu0 0.0
      %416 = vmatpush1.msra.mxu0 0.0
      %417 = vmatprep.subr.mxu0 0.0
      %418 = vmatpush1.msra.mxu0 0.0
      %419 = vmatprep.subr.mxu0 0.0
      %420 = vmatpush1.msra.mxu0 0.0
      %421 = vmatprep.subr.mxu0 0.0
      %422 = vmatpush1.msra.mxu0 0.0
      %423 = vmatprep.subr.mxu0 0.0
      %424 = vmatpush1.msra.mxu0 0.0
      %425 = vmatprep.subr.mxu0 0.0
      %426 = vmatpush1.msra.mxu0 0.0
      %427 = vmatprep.subr.mxu0 0.0
      %428 = vmatpush1.msra.mxu0 0.0
      %429 = vmatprep.subr.mxu0 0.0
      %430 = vmatpush1.msra.mxu0 0.0
      %431 = vmatprep.subr.mxu0 0.0
      %432 = vmatpush1.msra.mxu0 0.0
      %433 = vmatprep.subr.mxu0 0.0
      %434 = vmatpush1.msra.mxu0 0.0
      %435 = vmatprep.mubr.f32.mxu0 0.0
      %436 = vmatmul.mubr.f32.gmra.mrb[0].mxu0 %v357
      %v437 = vpop.f32.mrb[0].mxu0
      %v438 = vadd.f32 %v338, %v437
      %v439 = vpop.f32.mrb[0].mxu0
      %440 = vmatprep.mubr.f32.mxu0 0.0
      %441 = vmatmul.mubr.f32.gmra.mrb[0].mxu0 %v360
      %v442 = vpop.f32.mrb[0].mxu0
      %v443 = vadd.f32 %v343, %v442
      %v444 = vpop.f32.mrb[0].mxu0
      %445 = vmatprep.mubr.f32.mxu0 0.0
      %446 = vmatmul.mubr.f32.gmra.mrb[0].mxu0 %v363
      %v447 = vpop.f32.mrb[0].mxu0
      %v448 = vadd.f32 %v348, %v447
      %v449 = vpop.f32.mrb[0].mxu0
      %450 = vmatprep.mubr.f32.mxu0 0.0
      %451 = vmatmul.mubr.f32.gmra.mrb[0].mxu0 %v366
      %v452 = vpop.f32.mrb[0].mxu0
      %v453 = vadd.f32 %v353, %v452
      %v454 = vpop.f32.mrb[0].mxu0
      %455 = vdwg.mxu0
      %vm460 = vcmask 1046528
      %v461 = vrot.slane %v208, 1
      %v462 = vrot.slane %v209, 1
      %v463 = vsel %vm460, %v461, %v462
      %v464 = vrot.slane %v210, 1
      %v465 = vrot.slane %v211, 1
      %v466 = vsel %vm460, %v464, %v465
      %v467 = vrot.slane %v212, 1
      %v468 = vrot.slane %v213, 1
      %v469 = vsel %vm460, %v467, %v468
      %v470 = vrot.slane %v214, 1
      %v471 = vrot.slane %v215, 1
      %v472 = vsel %vm460, %v470, %v471
      %s473 = scalar_lea.vmem %s1, 8
      %v474 = vld [vmem:[%s473] sm:$0xf]
      %v475 = vsel %vm254, %v463, 0
      %v477 = vsel %vm254, %v466, 0
      %v479 = vsel %vm254, %v469, 0
      %v481 = vsel %vm254, %v472, 0
      %v484 = vsel %vm267, %v474, 0
      %486 = vmatprep.subr.mxu0 0.0
      %487 = vmatpush1.msra.mxu0 %v484
      %488 = vmatprep.subr.mxu0 0.0
      %489 = vmatpush1.msra.mxu0 0.0
      %490 = vmatprep.subr.mxu0 0.0
      %491 = vmatpush1.msra.mxu0 0.0
      %492 = vmatprep.subr.mxu0 0.0
      %493 = vmatpush1.msra.mxu0 0.0
      %494 = vmatprep.subr.mxu0 0.0
      %495 = vmatpush1.msra.mxu0 0.0
      %496 = vmatprep.subr.mxu0 0.0
      %497 = vmatpush1.msra.mxu0 0.0
      %498 = vmatprep.subr.mxu0 0.0
      %499 = vmatpush1.msra.mxu0 0.0
      %500 = vmatprep.subr.mxu0 0.0
      %501 = vmatpush1.msra.mxu0 0.0
      %502 = vmatprep.subr.mxu0 0.0
      %503 = vmatpush1.msra.mxu0 0.0
      %504 = vmatprep.subr.mxu0 0.0
      %505 = vmatpush1.msra.mxu0 0.0
      %506 = vmatprep.subr.mxu0 0.0
      %507 = vmatpush1.msra.mxu0 0.0
      %508 = vmatprep.subr.mxu0 0.0
      %509 = vmatpush1.msra.mxu0 0.0
      %510 = vmatprep.subr.mxu0 0.0
      %511 = vmatpush1.msra.mxu0 0.0
      %512 = vmatprep.subr.mxu0 0.0
      %513 = vmatpush1.msra.mxu0 0.0
      %514 = vmatprep.subr.mxu0 0.0
      %515 = vmatpush1.msra.mxu0 0.0
      %516 = vmatprep.subr.mxu0 0.0
      %517 = vmatpush1.msra.mxu0 0.0
      %518 = vmatprep.subr.mxu0 0.0
      %519 = vmatpush1.msra.mxu0 0.0
      %520 = vmatprep.subr.mxu0 0.0
      %521 = vmatpush1.msra.mxu0 0.0
      %522 = vmatprep.subr.mxu0 0.0
      %523 = vmatpush1.msra.mxu0 0.0
      %524 = vmatprep.subr.mxu0 0.0
      %525 = vmatpush1.msra.mxu0 0.0
      %526 = vmatprep.subr.mxu0 0.0
      %527 = vmatpush1.msra.mxu0 0.0
      %528 = vmatprep.subr.mxu0 0.0
      %529 = vmatpush1.msra.mxu0 0.0
      %530 = vmatprep.subr.mxu0 0.0
      %531 = vmatpush1.msra.mxu0 0.0
      %532 = vmatprep.subr.mxu0 0.0
      %533 = vmatpush1.msra.mxu0 0.0
      %534 = vmatprep.subr.mxu0 0.0
      %535 = vmatpush1.msra.mxu0 0.0
      %536 = vmatprep.subr.mxu0 0.0
      %537 = vmatpush1.msra.mxu0 0.0
      %538 = vmatprep.subr.mxu0 0.0
      %539 = vmatpush1.msra.mxu0 0.0
      %540 = vmatprep.subr.mxu0 0.0
      %541 = vmatpush1.msra.mxu0 0.0
      %542 = vmatprep.subr.mxu0 0.0
      %543 = vmatpush1.msra.mxu0 0.0
      %544 = vmatprep.subr.mxu0 0.0
      %545 = vmatpush1.msra.mxu0 0.0
      %546 = vmatprep.subr.mxu0 0.0
      %547 = vmatpush1.msra.mxu0 0.0
      %548 = vmatprep.subr.mxu0 0.0
      %549 = vmatpush1.msra.mxu0 0.0
      %550 = vmatprep.mubr.f32.mxu0 0.0
      %551 = vmatmul.mubr.f32.gmra.mrb[0].mxu0 %v475
      %v552 = vpop.f32.mrb[0].mxu0
      %v553 = vadd.f32 0.0, %v552
      %v554 = vpop.f32.mrb[0].mxu0
      %555 = vmatprep.mubr.f32.mxu0 0.0
      %556 = vmatmul.mubr.f32.gmra.mrb[0].mxu0 %v477
      %v557 = vpop.f32.mrb[0].mxu0
      %v558 = vadd.f32 0.0, %v557
      %v559 = vpop.f32.mrb[0].mxu0
      %560 = vmatprep.mubr.f32.mxu0 0.0
      %561 = vmatmul.mubr.f32.gmra.mrb[0].mxu0 %v479
      %v562 = vpop.f32.mrb[0].mxu0
      %v563 = vadd.f32 0.0, %v562
      %v564 = vpop.f32.mrb[0].mxu0
      %565 = vmatprep.mubr.f32.mxu0 0.0
      %566 = vmatmul.mubr.f32.gmra.mrb[0].mxu0 %v481
      %v567 = vpop.f32.mrb[0].mxu0
      %v568 = vadd.f32 0.0, %v567
      %v569 = vpop.f32.mrb[0].mxu0
      %570 = vdwg.mxu0
      %v571 = vadd.f32 %v438, %v553
      %v572 = vadd.f32 %v443, %v558
      %v573 = vadd.f32 %v448, %v563
      %v574 = vadd.f32 %v453, %v568
      %v579 = vrot.slane %v219, 1
      %v580 = vrot.slane %v220, 1
      %v581 = vsel %vm460, %v579, %v580
      %v582 = vrot.slane %v221, 1
      %v583 = vrot.slane %v222, 1
      %v584 = vsel %vm460, %v582, %v583
      %v585 = vrot.slane %v223, 1
      %v586 = vrot.slane %v224, 1
      %v587 = vsel %vm460, %v585, %v586
      %v588 = vrot.slane %v225, 1
      %v589 = vrot.slane %v226, 1
      %v590 = vsel %vm460, %v588, %v589
      %s591 = scalar_lea.vmem %s1, 12
      %v592 = vld [vmem:[%s591] sm:$0xf]
      %v593 = vsel %vm254, %v581, 0
      %v595 = vsel %vm254, %v584, 0
      %v597 = vsel %vm254, %v587, 0
      %v599 = vsel %vm254, %v590, 0
      %v602 = vsel %vm267, %v592, 0
      %604 = vmatprep.subr.mxu0 0.0
      %605 = vmatpush1.msra.mxu0 %v602
      %606 = vmatprep.subr.mxu0 0.0
      %607 = vmatpush1.msra.mxu0 0.0
      %608 = vmatprep.subr.mxu0 0.0
      %609 = vmatpush1.msra.mxu0 0.0
      %610 = vmatprep.subr.mxu0 0.0
      %611 = vmatpush1.msra.mxu0 0.0
      %612 = vmatprep.subr.mxu0 0.0
      %613 = vmatpush1.msra.mxu0 0.0
      %614 = vmatprep.subr.mxu0 0.0
      %615 = vmatpush1.msra.mxu0 0.0
      %616 = vmatprep.subr.mxu0 0.0
      %617 = vmatpush1.msra.mxu0 0.0
      %618 = vmatprep.subr.mxu0 0.0
      %619 = vmatpush1.msra.mxu0 0.0
      %620 = vmatprep.subr.mxu0 0.0
      %621 = vmatpush1.msra.mxu0 0.0
      %622 = vmatprep.subr.mxu0 0.0
      %623 = vmatpush1.msra.mxu0 0.0
      %624 = vmatprep.subr.mxu0 0.0
      %625 = vmatpush1.msra.mxu0 0.0
      %626 = vmatprep.subr.mxu0 0.0
      %627 = vmatpush1.msra.mxu0 0.0
      %628 = vmatprep.subr.mxu0 0.0
      %629 = vmatpush1.msra.mxu0 0.0
      %630 = vmatprep.subr.mxu0 0.0
      %631 = vmatpush1.msra.mxu0 0.0
      %632 = vmatprep.subr.mxu0 0.0
      %633 = vmatpush1.msra.mxu0 0.0
      %634 = vmatprep.subr.mxu0 0.0
      %635 = vmatpush1.msra.mxu0 0.0
      %636 = vmatprep.subr.mxu0 0.0
      %637 = vmatpush1.msra.mxu0 0.0
      %638 = vmatprep.subr.mxu0 0.0
      %639 = vmatpush1.msra.mxu0 0.0
      %640 = vmatprep.subr.mxu0 0.0
      %641 = vmatpush1.msra.mxu0 0.0
      %642 = vmatprep.subr.mxu0 0.0
      %643 = vmatpush1.msra.mxu0 0.0
      %644 = vmatprep.subr.mxu0 0.0
      %645 = vmatpush1.msra.mxu0 0.0
      %646 = vmatprep.subr.mxu0 0.0
      %647 = vmatpush1.msra.mxu0 0.0
      %648 = vmatprep.subr.mxu0 0.0
      %649 = vmatpush1.msra.mxu0 0.0
      %650 = vmatprep.subr.mxu0 0.0
      %651 = vmatpush1.msra.mxu0 0.0
      %652 = vmatprep.subr.mxu0 0.0
      %653 = vmatpush1.msra.mxu0 0.0
      %654 = vmatprep.subr.mxu0 0.0
      %655 = vmatpush1.msra.mxu0 0.0
      %656 = vmatprep.subr.mxu0 0.0
      %657 = vmatpush1.msra.mxu0 0.0
      %658 = vmatprep.subr.mxu0 0.0
      %659 = vmatpush1.msra.mxu0 0.0
      %660 = vmatprep.subr.mxu0 0.0
      %661 = vmatpush1.msra.mxu0 0.0
      %662 = vmatprep.subr.mxu0 0.0
      %663 = vmatpush1.msra.mxu0 0.0
      %664 = vmatprep.subr.mxu0 0.0
      %665 = vmatpush1.msra.mxu0 0.0
      %666 = vmatprep.subr.mxu0 0.0
      %667 = vmatpush1.msra.mxu0 0.0
      %668 = vmatprep.mubr.f32.mxu0 0.0
      %669 = vmatmul.mubr.f32.gmra.mrb[0].mxu0 %v593
      %v670 = vpop.f32.mrb[0].mxu0
      %v671 = vadd.f32 0.0, %v670
      %v672 = vpop.f32.mrb[0].mxu0
      %673 = vmatprep.mubr.f32.mxu0 0.0
      %674 = vmatmul.mubr.f32.gmra.mrb[0].mxu0 %v595
      %v675 = vpop.f32.mrb[0].mxu0
      %v676 = vadd.f32 0.0, %v675
      %v677 = vpop.f32.mrb[0].mxu0
      %678 = vmatprep.mubr.f32.mxu0 0.0
      %679 = vmatmul.mubr.f32.gmra.mrb[0].mxu0 %v597
      %v680 = vpop.f32.mrb[0].mxu0
      %v681 = vadd.f32 0.0, %v680
      %v682 = vpop.f32.mrb[0].mxu0
      %683 = vmatprep.mubr.f32.mxu0 0.0
      %684 = vmatmul.mubr.f32.gmra.mrb[0].mxu0 %v599
      %v685 = vpop.f32.mrb[0].mxu0
      %v686 = vadd.f32 0.0, %v685
      %v687 = vpop.f32.mrb[0].mxu0
      %688 = vdwg.mxu0
      %v689 = vadd.f32 %v571, %v671
      %v690 = vadd.f32 %v572, %v676
      %v691 = vadd.f32 %v573, %v681
      %v692 = vadd.f32 %v574, %v686
      %s693 = scalar_lea.vmem %s1, 16
      %v694 = vld [vmem:[%s693] sm:$0xf]
      %v696 = vsel %vm254, %v230, 0
      %v699 = vsel %vm254, %v232, 0
      %v702 = vsel %vm254, %v234, 0
      %v705 = vsel %vm254, %v236, 0
      %v708 = vsel %vm267, %v694, 0
      %710 = vmatprep.subr.mxu0 0.0
      %711 = vmatpush1.msra.mxu0 %v708
      %712 = vmatprep.subr.mxu0 0.0
      %713 = vmatpush1.msra.mxu0 0.0
      %714 = vmatprep.subr.mxu0 0.0
      %715 = vmatpush1.msra.mxu0 0.0
      %716 = vmatprep.subr.mxu0 0.0
      %717 = vmatpush1.msra.mxu0 0.0
      %718 = vmatprep.subr.mxu0 0.0
      %719 = vmatpush1.msra.mxu0 0.0
      %720 = vmatprep.subr.mxu0 0.0
      %721 = vmatpush1.msra.mxu0 0.0
      %722 = vmatprep.subr.mxu0 0.0
      %723 = vmatpush1.msra.mxu0 0.0
      %724 = vmatprep.subr.mxu0 0.0
      %725 = vmatpush1.msra.mxu0 0.0
      %726 = vmatprep.subr.mxu0 0.0
      %727 = vmatpush1.msra.mxu0 0.0
      %728 = vmatprep.subr.mxu0 0.0
      %729 = vmatpush1.msra.mxu0 0.0
      %730 = vmatprep.subr.mxu0 0.0
      %731 = vmatpush1.msra.mxu0 0.0
      %732 = vmatprep.subr.mxu0 0.0
      %733 = vmatpush1.msra.mxu0 0.0
      %734 = vmatprep.subr.mxu0 0.0
      %735 = vmatpush1.msra.mxu0 0.0
      %736 = vmatprep.subr.mxu0 0.0
      %737 = vmatpush1.msra.mxu0 0.0
      %738 = vmatprep.subr.mxu0 0.0
      %739 = vmatpush1.msra.mxu0 0.0
      %740 = vmatprep.subr.mxu0 0.0
      %741 = vmatpush1.msra.mxu0 0.0
      %742 = vmatprep.subr.mxu0 0.0
      %743 = vmatpush1.msra.mxu0 0.0
      %744 = vmatprep.subr.mxu0 0.0
      %745 = vmatpush1.msra.mxu0 0.0
      %746 = vmatprep.subr.mxu0 0.0
      %747 = vmatpush1.msra.mxu0 0.0
      %748 = vmatprep.subr.mxu0 0.0
      %749 = vmatpush1.msra.mxu0 0.0
      %750 = vmatprep.subr.mxu0 0.0
      %751 = vmatpush1.msra.mxu0 0.0
      %752 = vmatprep.subr.mxu0 0.0
      %753 = vmatpush1.msra.mxu0 0.0
      %754 = vmatprep.subr.mxu0 0.0
      %755 = vmatpush1.msra.mxu0 0.0
      %756 = vmatprep.subr.mxu0 0.0
      %757 = vmatpush1.msra.mxu0 0.0
      %758 = vmatprep.subr.mxu0 0.0
      %759 = vmatpush1.msra.mxu0 0.0
      %760 = vmatprep.subr.mxu0 0.0
      %761 = vmatpush1.msra.mxu0 0.0
      %762 = vmatprep.subr.mxu0 0.0
      %763 = vmatpush1.msra.mxu0 0.0
      %764 = vmatprep.subr.mxu0 0.0
      %765 = vmatpush1.msra.mxu0 0.0
      %766 = vmatprep.subr.mxu0 0.0
      %767 = vmatpush1.msra.mxu0 0.0
      %768 = vmatprep.subr.mxu0 0.0
      %769 = vmatpush1.msra.mxu0 0.0
      %770 = vmatprep.subr.mxu0 0.0
      %771 = vmatpush1.msra.mxu0 0.0
      %772 = vmatprep.subr.mxu0 0.0
      %773 = vmatpush1.msra.mxu0 0.0
      %774 = vmatprep.mubr.f32.mxu0 0.0
      %775 = vmatmul.mubr.f32.gmra.mrb[0].mxu0 %v696
      %v776 = vpop.f32.mrb[0].mxu0
      %v777 = vadd.f32 0.0, %v776
      %v778 = vpop.f32.mrb[0].mxu0
      %779 = vmatprep.mubr.f32.mxu0 0.0
      %780 = vmatmul.mubr.f32.gmra.mrb[0].mxu0 %v699
      %v781 = vpop.f32.mrb[0].mxu0
      %v782 = vadd.f32 0.0, %v781
      %v783 = vpop.f32.mrb[0].mxu0
      %784 = vmatprep.mubr.f32.mxu0 0.0
      %785 = vmatmul.mubr.f32.gmra.mrb[0].mxu0 %v702
      %v786 = vpop.f32.mrb[0].mxu0
      %v787 = vadd.f32 0.0, %v786
      %v788 = vpop.f32.mrb[0].mxu0
      %789 = vmatprep.mubr.f32.mxu0 0.0
      %790 = vmatmul.mubr.f32.gmra.mrb[0].mxu0 %v705
      %v791 = vpop.f32.mrb[0].mxu0
      %v792 = vadd.f32 0.0, %v791
      %v793 = vpop.f32.mrb[0].mxu0
      %794 = vdwg.mxu0
      %v795 = vadd.f32 %v689, %v777
      %v796 = vadd.f32 %v690, %v782
      %v797 = vadd.f32 %v691, %v787
      %v798 = vadd.f32 %v692, %v792
      %s799 = scalar_lea.vmem %s1, 20
      %v800 = vld [vmem:[%s799] sm:$0xf]
      %v802 = vsel %vm254, %v241, 0
      %v805 = vsel %vm254, %v243, 0
      %v808 = vsel %vm254, %v245, 0
      %v811 = vsel %vm254, %v247, 0
      %v814 = vsel %vm267, %v800, 0
      %816 = vmatprep.subr.mxu0 0.0
      %817 = vmatpush1.msra.mxu0 %v814
      %818 = vmatprep.subr.mxu0 0.0
      %819 = vmatpush1.msra.mxu0 0.0
      %820 = vmatprep.subr.mxu0 0.0
      %821 = vmatpush1.msra.mxu0 0.0
      %822 = vmatprep.subr.mxu0 0.0
      %823 = vmatpush1.msra.mxu0 0.0
      %824 = vmatprep.subr.mxu0 0.0
      %825 = vmatpush1.msra.mxu0 0.0
      %826 = vmatprep.subr.mxu0 0.0
      %827 = vmatpush1.msra.mxu0 0.0
      %828 = vmatprep.subr.mxu0 0.0
      %829 = vmatpush1.msra.mxu0 0.0
      %830 = vmatprep.subr.mxu0 0.0
      %831 = vmatpush1.msra.mxu0 0.0
      %832 = vmatprep.subr.mxu0 0.0
      %833 = vmatpush1.msra.mxu0 0.0
      %834 = vmatprep.subr.mxu0 0.0
      %835 = vmatpush1.msra.mxu0 0.0
      %836 = vmatprep.subr.mxu0 0.0
      %837 = vmatpush1.msra.mxu0 0.0
      %838 = vmatprep.subr.mxu0 0.0
      %839 = vmatpush1.msra.mxu0 0.0
      %840 = vmatprep.subr.mxu0 0.0
      %841 = vmatpush1.msra.mxu0 0.0
      %842 = vmatprep.subr.mxu0 0.0
      %843 = vmatpush1.msra.mxu0 0.0
      %844 = vmatprep.subr.mxu0 0.0
      %845 = vmatpush1.msra.mxu0 0.0
      %846 = vmatprep.subr.mxu0 0.0
      %847 = vmatpush1.msra.mxu0 0.0
      %848 = vmatprep.subr.mxu0 0.0
      %849 = vmatpush1.msra.mxu0 0.0
      %850 = vmatprep.subr.mxu0 0.0
      %851 = vmatpush1.msra.mxu0 0.0
      %852 = vmatprep.subr.mxu0 0.0
      %853 = vmatpush1.msra.mxu0 0.0
      %854 = vmatprep.subr.mxu0 0.0
      %855 = vmatpush1.msra.mxu0 0.0
      %856 = vmatprep.subr.mxu0 0.0
      %857 = vmatpush1.msra.mxu0 0.0
      %858 = vmatprep.subr.mxu0 0.0
      %859 = vmatpush1.msra.mxu0 0.0
      %860 = vmatprep.subr.mxu0 0.0
      %861 = vmatpush1.msra.mxu0 0.0
      %862 = vmatprep.subr.mxu0 0.0
      %863 = vmatpush1.msra.mxu0 0.0
      %864 = vmatprep.subr.mxu0 0.0
      %865 = vmatpush1.msra.mxu0 0.0
      %866 = vmatprep.subr.mxu0 0.0
      %867 = vmatpush1.msra.mxu0 0.0
      %868 = vmatprep.subr.mxu0 0.0
      %869 = vmatpush1.msra.mxu0 0.0
      %870 = vmatprep.subr.mxu0 0.0
      %871 = vmatpush1.msra.mxu0 0.0
      %872 = vmatprep.subr.mxu0 0.0
      %873 = vmatpush1.msra.mxu0 0.0
      %874 = vmatprep.subr.mxu0 0.0
      %875 = vmatpush1.msra.mxu0 0.0
      %876 = vmatprep.subr.mxu0 0.0
      %877 = vmatpush1.msra.mxu0 0.0
      %878 = vmatprep.subr.mxu0 0.0
      %879 = vmatpush1.msra.mxu0 0.0
      %880 = vmatprep.mubr.f32.mxu0 0.0
      %881 = vmatmul.mubr.f32.gmra.mrb[0].mxu0 %v802
      %v882 = vpop.f32.mrb[0].mxu0
      %v883 = vadd.f32 0.0, %v882
      %v884 = vpop.f32.mrb[0].mxu0
      %885 = vmatprep.mubr.f32.mxu0 0.0
      %886 = vmatmul.mubr.f32.gmra.mrb[0].mxu0 %v805
      %v887 = vpop.f32.mrb[0].mxu0
      %v888 = vadd.f32 0.0, %v887
      %v889 = vpop.f32.mrb[0].mxu0
      %890 = vmatprep.mubr.f32.mxu0 0.0
      %891 = vmatmul.mubr.f32.gmra.mrb[0].mxu0 %v808
      %v892 = vpop.f32.mrb[0].mxu0
      %v893 = vadd.f32 0.0, %v892
      %v894 = vpop.f32.mrb[0].mxu0
      %895 = vmatprep.mubr.f32.mxu0 0.0
      %896 = vmatmul.mubr.f32.gmra.mrb[0].mxu0 %v811
      %v897 = vpop.f32.mrb[0].mxu0
      %v898 = vadd.f32 0.0, %v897
      %v899 = vpop.f32.mrb[0].mxu0
      %900 = vdwg.mxu0
      %v901 = vadd.f32 %v795, %v883
      %v902 = vadd.f32 %v796, %v888
      %v903 = vadd.f32 %v797, %v893
      %v904 = vadd.f32 %v798, %v898
      %v909 = vrot.slane %v230, 1
      %v910 = vrot.slane %v231, 1
      %v911 = vsel %vm460, %v909, %v910
      %v912 = vrot.slane %v232, 1
      %v913 = vrot.slane %v233, 1
      %v914 = vsel %vm460, %v912, %v913
      %v915 = vrot.slane %v234, 1
      %v916 = vrot.slane %v235, 1
      %v917 = vsel %vm460, %v915, %v916
      %v918 = vrot.slane %v236, 1
      %v919 = vrot.slane %v237, 1
      %v920 = vsel %vm460, %v918, %v919
      %s921 = scalar_lea.vmem %s1, 24
      %v922 = vld [vmem:[%s921] sm:$0xf]
      %v923 = vsel %vm254, %v911, 0
      %v925 = vsel %vm254, %v914, 0
      %v927 = vsel %vm254, %v917, 0
      %v929 = vsel %vm254, %v920, 0
      %v932 = vsel %vm267, %v922, 0
      %934 = vmatprep.subr.mxu0 0.0
      %935 = vmatpush1.msra.mxu0 %v932
      %936 = vmatprep.subr.mxu0 0.0
      %937 = vmatpush1.msra.mxu0 0.0
      %938 = vmatprep.subr.mxu0 0.0
      %939 = vmatpush1.msra.mxu0 0.0
      %940 = vmatprep.subr.mxu0 0.0
      %941 = vmatpush1.msra.mxu0 0.0
      %942 = vmatprep.subr.mxu0 0.0
      %943 = vmatpush1.msra.mxu0 0.0
      %944 = vmatprep.subr.mxu0 0.0
      %945 = vmatpush1.msra.mxu0 0.0
      %946 = vmatprep.subr.mxu0 0.0
      %947 = vmatpush1.msra.mxu0 0.0
      %948 = vmatprep.subr.mxu0 0.0
      %949 = vmatpush1.msra.mxu0 0.0
      %950 = vmatprep.subr.mxu0 0.0
      %951 = vmatpush1.msra.mxu0 0.0
      %952 = vmatprep.subr.mxu0 0.0
      %953 = vmatpush1.msra.mxu0 0.0
      %954 = vmatprep.subr.mxu0 0.0
      %955 = vmatpush1.msra.mxu0 0.0
      %956 = vmatprep.subr.mxu0 0.0
      %957 = vmatpush1.msra.mxu0 0.0
      %958 = vmatprep.subr.mxu0 0.0
      %959 = vmatpush1.msra.mxu0 0.0
      %960 = vmatprep.subr.mxu0 0.0
      %961 = vmatpush1.msra.mxu0 0.0
      %962 = vmatprep.subr.mxu0 0.0
      %963 = vmatpush1.msra.mxu0 0.0
      %964 = vmatprep.subr.mxu0 0.0
      %965 = vmatpush1.msra.mxu0 0.0
      %966 = vmatprep.subr.mxu0 0.0
      %967 = vmatpush1.msra.mxu0 0.0
      %968 = vmatprep.subr.mxu0 0.0
      %969 = vmatpush1.msra.mxu0 0.0
      %970 = vmatprep.subr.mxu0 0.0
      %971 = vmatpush1.msra.mxu0 0.0
      %972 = vmatprep.subr.mxu0 0.0
      %973 = vmatpush1.msra.mxu0 0.0
      %974 = vmatprep.subr.mxu0 0.0
      %975 = vmatpush1.msra.mxu0 0.0
      %976 = vmatprep.subr.mxu0 0.0
      %977 = vmatpush1.msra.mxu0 0.0
      %978 = vmatprep.subr.mxu0 0.0
      %979 = vmatpush1.msra.mxu0 0.0
      %980 = vmatprep.subr.mxu0 0.0
      %981 = vmatpush1.msra.mxu0 0.0
      %982 = vmatprep.subr.mxu0 0.0
      %983 = vmatpush1.msra.mxu0 0.0
      %984 = vmatprep.subr.mxu0 0.0
      %985 = vmatpush1.msra.mxu0 0.0
      %986 = vmatprep.subr.mxu0 0.0
      %987 = vmatpush1.msra.mxu0 0.0
      %988 = vmatprep.subr.mxu0 0.0
      %989 = vmatpush1.msra.mxu0 0.0
      %990 = vmatprep.subr.mxu0 0.0
      %991 = vmatpush1.msra.mxu0 0.0
      %992 = vmatprep.subr.mxu0 0.0
      %993 = vmatpush1.msra.mxu0 0.0
      %994 = vmatprep.subr.mxu0 0.0
      %995 = vmatpush1.msra.mxu0 0.0
      %996 = vmatprep.subr.mxu0 0.0
      %997 = vmatpush1.msra.mxu0 0.0
      %998 = vmatprep.mubr.f32.mxu0 0.0
      %999 = vmatmul.mubr.f32.gmra.mrb[0].mxu0 %v923
      %v1000 = vpop.f32.mrb[0].mxu0
      %v1001 = vadd.f32 0.0, %v1000
      %v1002 = vpop.f32.mrb[0].mxu0
      %1003 = vmatprep.mubr.f32.mxu0 0.0
      %1004 = vmatmul.mubr.f32.gmra.mrb[0].mxu0 %v925
      %v1005 = vpop.f32.mrb[0].mxu0
      %v1006 = vadd.f32 0.0, %v1005
      %v1007 = vpop.f32.mrb[0].mxu0
      %1008 = vmatprep.mubr.f32.mxu0 0.0
      %1009 = vmatmul.mubr.f32.gmra.mrb[0].mxu0 %v927
      %v1010 = vpop.f32.mrb[0].mxu0
      %v1011 = vadd.f32 0.0, %v1010
      %v1012 = vpop.f32.mrb[0].mxu0
      %1013 = vmatprep.mubr.f32.mxu0 0.0
      %1014 = vmatmul.mubr.f32.gmra.mrb[0].mxu0 %v929
      %v1015 = vpop.f32.mrb[0].mxu0
      %v1016 = vadd.f32 0.0, %v1015
      %v1017 = vpop.f32.mrb[0].mxu0
      %1018 = vdwg.mxu0
      %v1019 = vadd.f32 %v901, %v1001
      %v1020 = vadd.f32 %v902, %v1006
      %v1021 = vadd.f32 %v903, %v1011
      %v1022 = vadd.f32 %v904, %v1016
      %v1027 = vrot.slane %v241, 1
      %v1028 = vrot.slane %v242, 1
      %v1029 = vsel %vm460, %v1027, %v1028
      %v1030 = vrot.slane %v243, 1
      %v1031 = vrot.slane %v244, 1
      %v1032 = vsel %vm460, %v1030, %v1031
      %v1033 = vrot.slane %v245, 1
      %v1034 = vrot.slane %v246, 1
      %v1035 = vsel %vm460, %v1033, %v1034
      %v1036 = vrot.slane %v247, 1
      %v1037 = vrot.slane %v248, 1
      %v1038 = vsel %vm460, %v1036, %v1037
      %s1039 = scalar_lea.vmem %s1, 28
      %v1040 = vld [vmem:[%s1039] sm:$0xf]
      %v1041 = vsel %vm254, %v1029, 0
      %v1043 = vsel %vm254, %v1032, 0
      %v1045 = vsel %vm254, %v1035, 0
      %v1047 = vsel %vm254, %v1038, 0
      %v1050 = vsel %vm267, %v1040, 0
      %1052 = vmatprep.subr.mxu0 0.0
      %1053 = vmatpush1.msra.mxu0 %v1050
      %1054 = vmatprep.subr.mxu0 0.0
      %1055 = vmatpush1.msra.mxu0 0.0
      %1056 = vmatprep.subr.mxu0 0.0
      %1057 = vmatpush1.msra.mxu0 0.0
      %1058 = vmatprep.subr.mxu0 0.0
      %1059 = vmatpush1.msra.mxu0 0.0
      %1060 = vmatprep.subr.mxu0 0.0
      %1061 = vmatpush1.msra.mxu0 0.0
      %1062 = vmatprep.subr.mxu0 0.0
      %1063 = vmatpush1.msra.mxu0 0.0
      %1064 = vmatprep.subr.mxu0 0.0
      %1065 = vmatpush1.msra.mxu0 0.0
      %1066 = vmatprep.subr.mxu0 0.0
      %1067 = vmatpush1.msra.mxu0 0.0
      %1068 = vmatprep.subr.mxu0 0.0
      %1069 = vmatpush1.msra.mxu0 0.0
      %1070 = vmatprep.subr.mxu0 0.0
      %1071 = vmatpush1.msra.mxu0 0.0
      %1072 = vmatprep.subr.mxu0 0.0
      %1073 = vmatpush1.msra.mxu0 0.0
      %1074 = vmatprep.subr.mxu0 0.0
      %1075 = vmatpush1.msra.mxu0 0.0
      %1076 = vmatprep.subr.mxu0 0.0
      %1077 = vmatpush1.msra.mxu0 0.0
      %1078 = vmatprep.subr.mxu0 0.0
      %1079 = vmatpush1.msra.mxu0 0.0
      %1080 = vmatprep.subr.mxu0 0.0
      %1081 = vmatpush1.msra.mxu0 0.0
      %1082 = vmatprep.subr.mxu0 0.0
      %1083 = vmatpush1.msra.mxu0 0.0
      %1084 = vmatprep.subr.mxu0 0.0
      %1085 = vmatpush1.msra.mxu0 0.0
      %1086 = vmatprep.subr.mxu0 0.0
      %1087 = vmatpush1.msra.mxu0 0.0
      %1088 = vmatprep.subr.mxu0 0.0
      %1089 = vmatpush1.msra.mxu0 0.0
      %1090 = vmatprep.subr.mxu0 0.0
      %1091 = vmatpush1.msra.mxu0 0.0
      %1092 = vmatprep.subr.mxu0 0.0
      %1093 = vmatpush1.msra.mxu0 0.0
      %1094 = vmatprep.subr.mxu0 0.0
      %1095 = vmatpush1.msra.mxu0 0.0
      %1096 = vmatprep.subr.mxu0 0.0
      %1097 = vmatpush1.msra.mxu0 0.0
      %1098 = vmatprep.subr.mxu0 0.0
      %1099 = vmatpush1.msra.mxu0 0.0
      %1100 = vmatprep.subr.mxu0 0.0
      %1101 = vmatpush1.msra.mxu0 0.0
      %1102 = vmatprep.subr.mxu0 0.0
      %1103 = vmatpush1.msra.mxu0 0.0
      %1104 = vmatprep.subr.mxu0 0.0
      %1105 = vmatpush1.msra.mxu0 0.0
      %1106 = vmatprep.subr.mxu0 0.0
      %1107 = vmatpush1.msra.mxu0 0.0
      %1108 = vmatprep.subr.mxu0 0.0
      %1109 = vmatpush1.msra.mxu0 0.0
      %1110 = vmatprep.subr.mxu0 0.0
      %1111 = vmatpush1.msra.mxu0 0.0
      %1112 = vmatprep.subr.mxu0 0.0
      %1113 = vmatpush1.msra.mxu0 0.0
      %1114 = vmatprep.subr.mxu0 0.0
      %1115 = vmatpush1.msra.mxu0 0.0
      %1116 = vmatprep.mubr.f32.mxu0 0.0
      %1117 = vmatmul.mubr.f32.gmra.mrb[0].mxu0 %v1041
      %v1118 = vpop.f32.mrb[0].mxu0
      %v1119 = vadd.f32 0.0, %v1118
      %v1120 = vpop.f32.mrb[0].mxu0
      %1121 = vmatprep.mubr.f32.mxu0 0.0
      %1122 = vmatmul.mubr.f32.gmra.mrb[0].mxu0 %v1043
      %v1123 = vpop.f32.mrb[0].mxu0
      %v1124 = vadd.f32 0.0, %v1123
      %v1125 = vpop.f32.mrb[0].mxu0
      %1126 = vmatprep.mubr.f32.mxu0 0.0
      %1127 = vmatmul.mubr.f32.gmra.mrb[0].mxu0 %v1045
      %v1128 = vpop.f32.mrb[0].mxu0
      %v1129 = vadd.f32 0.0, %v1128
      %v1130 = vpop.f32.mrb[0].mxu0
      %1131 = vmatprep.mubr.f32.mxu0 0.0
      %1132 = vmatmul.mubr.f32.gmra.mrb[0].mxu0 %v1047
      %v1133 = vpop.f32.mrb[0].mxu0
      %v1134 = vadd.f32 0.0, %v1133
      %v1135 = vpop.f32.mrb[0].mxu0
      %1136 = vdwg.mxu0
      %v1137 = vadd.f32 %v1019, %v1119
      %v1138 = vadd.f32 %v1020, %v1124
      %v1139 = vadd.f32 %v1021, %v1129
      %v1140 = vadd.f32 %v1022, %v1134
      %s1141 = scalar_lea.vmem %s1, 32
      %v1142 = vld [vmem:[%s1141] sm:$0xf]
      %v1144 = vsel %vm254, %v216, 0
      %v1147 = vsel %vm267, %v1142, 0
      %1149 = vmatprep.subr.mxu0 0.0
      %1150 = vmatpush1.msra.mxu0 %v1147
      %1151 = vmatprep.subr.mxu0 0.0
      %1152 = vmatpush1.msra.mxu0 0.0
      %1153 = vmatprep.subr.mxu0 0.0
      %1154 = vmatpush1.msra.mxu0 0.0
      %1155 = vmatprep.subr.mxu0 0.0
      %1156 = vmatpush1.msra.mxu0 0.0
      %1157 = vmatprep.subr.mxu0 0.0
      %1158 = vmatpush1.msra.mxu0 0.0
      %1159 = vmatprep.subr.mxu0 0.0
      %1160 = vmatpush1.msra.mxu0 0.0
      %1161 = vmatprep.subr.mxu0 0.0
      %1162 = vmatpush1.msra.mxu0 0.0
      %1163 = vmatprep.subr.mxu0 0.0
      %1164 = vmatpush1.msra.mxu0 0.0
      %1165 = vmatprep.subr.mxu0 0.0
      %1166 = vmatpush1.msra.mxu0 0.0
      %1167 = vmatprep.subr.mxu0 0.0
      %1168 = vmatpush1.msra.mxu0 0.0
      %1169 = vmatprep.subr.mxu0 0.0
      %1170 = vmatpush1.msra.mxu0 0.0
      %1171 = vmatprep.subr.mxu0 0.0
      %1172 = vmatpush1.msra.mxu0 0.0
      %1173 = vmatprep.subr.mxu0 0.0
      %1174 = vmatpush1.msra.mxu0 0.0
      %1175 = vmatprep.subr.mxu0 0.0
      %1176 = vmatpush1.msra.mxu0 0.0
      %1177 = vmatprep.subr.mxu0 0.0
      %1178 = vmatpush1.msra.mxu0 0.0
      %1179 = vmatprep.subr.mxu0 0.0
      %1180 = vmatpush1.msra.mxu0 0.0
      %1181 = vmatprep.subr.mxu0 0.0
      %1182 = vmatpush1.msra.mxu0 0.0
      %1183 = vmatprep.subr.mxu0 0.0
      %1184 = vmatpush1.msra.mxu0 0.0
      %1185 = vmatprep.subr.mxu0 0.0
      %1186 = vmatpush1.msra.mxu0 0.0
      %1187 = vmatprep.subr.mxu0 0.0
      %1188 = vmatpush1.msra.mxu0 0.0
      %1189 = vmatprep.subr.mxu0 0.0
      %1190 = vmatpush1.msra.mxu0 0.0
      %1191 = vmatprep.subr.mxu0 0.0
      %1192 = vmatpush1.msra.mxu0 0.0
      %1193 = vmatprep.subr.mxu0 0.0
      %1194 = vmatpush1.msra.mxu0 0.0
      %1195 = vmatprep.subr.mxu0 0.0
      %1196 = vmatpush1.msra.mxu0 0.0
      %1197 = vmatprep.subr.mxu0 0.0
      %1198 = vmatpush1.msra.mxu0 0.0
      %1199 = vmatprep.subr.mxu0 0.0
      %1200 = vmatpush1.msra.mxu0 0.0
      %1201 = vmatprep.subr.mxu0 0.0
      %1202 = vmatpush1.msra.mxu0 0.0
      %1203 = vmatprep.subr.mxu0 0.0
      %1204 = vmatpush1.msra.mxu0 0.0
      %1205 = vmatprep.subr.mxu0 0.0
      %1206 = vmatpush1.msra.mxu0 0.0
      %1207 = vmatprep.subr.mxu0 0.0
      %1208 = vmatpush1.msra.mxu0 0.0
      %1209 = vmatprep.subr.mxu0 0.0
      %1210 = vmatpush1.msra.mxu0 0.0
      %1211 = vmatprep.subr.mxu0 0.0
      %1212 = vmatpush1.msra.mxu0 0.0
      %1213 = vmatprep.mubr.f32.mxu0 0.0
      %1214 = vmatmul.mubr.f32.gmra.mrb[0].mxu0 %v360
      %v1215 = vpop.f32.mrb[0].mxu0
      %v1216 = vadd.f32 0.0, %v1215
      %v1217 = vpop.f32.mrb[0].mxu0
      %1218 = vmatprep.mubr.f32.mxu0 0.0
      %1219 = vmatmul.mubr.f32.gmra.mrb[0].mxu0 %v363
      %v1220 = vpop.f32.mrb[0].mxu0
      %v1221 = vadd.f32 0.0, %v1220
      %v1222 = vpop.f32.mrb[0].mxu0
      %1223 = vmatprep.mubr.f32.mxu0 0.0
      %1224 = vmatmul.mubr.f32.gmra.mrb[0].mxu0 %v366
      %v1225 = vpop.f32.mrb[0].mxu0
      %v1226 = vadd.f32 0.0, %v1225
      %v1227 = vpop.f32.mrb[0].mxu0
      %1228 = vmatprep.mubr.f32.mxu0 0.0
      %1229 = vmatmul.mubr.f32.gmra.mrb[0].mxu0 %v1144
      %v1230 = vpop.f32.mrb[0].mxu0
      %v1231 = vadd.f32 0.0, %v1230
      %v1232 = vpop.f32.mrb[0].mxu0
      %1233 = vdwg.mxu0
      %v1234 = vadd.f32 %v1137, %v1216
      %v1235 = vadd.f32 %v1138, %v1221
      %v1236 = vadd.f32 %v1139, %v1226
      %v1237 = vadd.f32 %v1140, %v1231
      %s1238 = scalar_lea.vmem %s1, 36
      %v1239 = vld [vmem:[%s1238] sm:$0xf]
      %v1241 = vsel %vm254, %v227, 0
      %v1244 = vsel %vm267, %v1239, 0
      %1246 = vmatprep.subr.mxu0 0.0
      %1247 = vmatpush1.msra.mxu0 %v1244
      %1248 = vmatprep.subr.mxu0 0.0
      %1249 = vmatpush1.msra.mxu0 0.0
      %1250 = vmatprep.subr.mxu0 0.0
      %1251 = vmatpush1.msra.mxu0 0.0
      %1252 = vmatprep.subr.mxu0 0.0
      %1253 = vmatpush1.msra.mxu0 0.0
      %1254 = vmatprep.subr.mxu0 0.0
      %1255 = vmatpush1.msra.mxu0 0.0
      %1256 = vmatprep.subr.mxu0 0.0
      %1257 = vmatpush1.msra.mxu0 0.0
      %1258 = vmatprep.subr.mxu0 0.0
      %1259 = vmatpush1.msra.mxu0 0.0
      %1260 = vmatprep.subr.mxu0 0.0
      %1261 = vmatpush1.msra.mxu0 0.0
      %1262 = vmatprep.subr.mxu0 0.0
      %1263 = vmatpush1.msra.mxu0 0.0
      %1264 = vmatprep.subr.mxu0 0.0
      %1265 = vmatpush1.msra.mxu0 0.0
      %1266 = vmatprep.subr.mxu0 0.0
      %1267 = vmatpush1.msra.mxu0 0.0
      %1268 = vmatprep.subr.mxu0 0.0
      %1269 = vmatpush1.msra.mxu0 0.0
      %1270 = vmatprep.subr.mxu0 0.0
      %1271 = vmatpush1.msra.mxu0 0.0
      %1272 = vmatprep.subr.mxu0 0.0
      %1273 = vmatpush1.msra.mxu0 0.0
      %1274 = vmatprep.subr.mxu0 0.0
      %1275 = vmatpush1.msra.mxu0 0.0
      %1276 = vmatprep.subr.mxu0 0.0
      %1277 = vmatpush1.msra.mxu0 0.0
      %1278 = vmatprep.subr.mxu0 0.0
      %1279 = vmatpush1.msra.mxu0 0.0
      %1280 = vmatprep.subr.mxu0 0.0
      %1281 = vmatpush1.msra.mxu0 0.0
      %1282 = vmatprep.subr.mxu0 0.0
      %1283 = vmatpush1.msra.mxu0 0.0
      %1284 = vmatprep.subr.mxu0 0.0
      %1285 = vmatpush1.msra.mxu0 0.0
      %1286 = vmatprep.subr.mxu0 0.0
      %1287 = vmatpush1.msra.mxu0 0.0
      %1288 = vmatprep.subr.mxu0 0.0
      %1289 = vmatpush1.msra.mxu0 0.0
      %1290 = vmatprep.subr.mxu0 0.0
      %1291 = vmatpush1.msra.mxu0 0.0
      %1292 = vmatprep.subr.mxu0 0.0
      %1293 = vmatpush1.msra.mxu0 0.0
      %1294 = vmatprep.subr.mxu0 0.0
      %1295 = vmatpush1.msra.mxu0 0.0
      %1296 = vmatprep.subr.mxu0 0.0
      %1297 = vmatpush1.msra.mxu0 0.0
      %1298 = vmatprep.subr.mxu0 0.0
      %1299 = vmatpush1.msra.mxu0 0.0
      %1300 = vmatprep.subr.mxu0 0.0
      %1301 = vmatpush1.msra.mxu0 0.0
      %1302 = vmatprep.subr.mxu0 0.0
      %1303 = vmatpush1.msra.mxu0 0.0
      %1304 = vmatprep.subr.mxu0 0.0
      %1305 = vmatpush1.msra.mxu0 0.0
      %1306 = vmatprep.subr.mxu0 0.0
      %1307 = vmatpush1.msra.mxu0 0.0
      %1308 = vmatprep.subr.mxu0 0.0
      %1309 = vmatpush1.msra.mxu0 0.0
      %1310 = vmatprep.mubr.f32.mxu0 0.0
      %1311 = vmatmul.mubr.f32.gmra.mrb[0].mxu0 %v259
      %v1312 = vpop.f32.mrb[0].mxu0
      %v1313 = vadd.f32 0.0, %v1312
      %v1314 = vpop.f32.mrb[0].mxu0
      %1315 = vmatprep.mubr.f32.mxu0 0.0
      %1316 = vmatmul.mubr.f32.gmra.mrb[0].mxu0 %v262
      %v1317 = vpop.f32.mrb[0].mxu0
      %v1318 = vadd.f32 0.0, %v1317
      %v1319 = vpop.f32.mrb[0].mxu0
      %1320 = vmatprep.mubr.f32.mxu0 0.0
      %1321 = vmatmul.mubr.f32.gmra.mrb[0].mxu0 %v265
      %v1322 = vpop.f32.mrb[0].mxu0
      %v1323 = vadd.f32 0.0, %v1322
      %v1324 = vpop.f32.mrb[0].mxu0
      %1325 = vmatprep.mubr.f32.mxu0 0.0
      %1326 = vmatmul.mubr.f32.gmra.mrb[0].mxu0 %v1241
      %v1327 = vpop.f32.mrb[0].mxu0
      %v1328 = vadd.f32 0.0, %v1327
      %v1329 = vpop.f32.mrb[0].mxu0
      %1330 = vdwg.mxu0
      %v1331 = vadd.f32 %v1234, %v1313
      %v1332 = vadd.f32 %v1235, %v1318
      %v1333 = vadd.f32 %v1236, %v1323
      %v1334 = vadd.f32 %v1237, %v1328
      %v1336 = vrot.slane %v216, 1
      %v1337 = vrot.slane %v217, 1
      %v1338 = vsel %vm460, %v1336, %v1337
      %s1339 = scalar_lea.vmem %s1, 40
      %v1340 = vld [vmem:[%s1339] sm:$0xf]
      %v1341 = vsel %vm254, %v1338, 0
      %v1344 = vsel %vm267, %v1340, 0
      %1346 = vmatprep.subr.mxu0 0.0
      %1347 = vmatpush1.msra.mxu0 %v1344
      %1348 = vmatprep.subr.mxu0 0.0
      %1349 = vmatpush1.msra.mxu0 0.0
      %1350 = vmatprep.subr.mxu0 0.0
      %1351 = vmatpush1.msra.mxu0 0.0
      %1352 = vmatprep.subr.mxu0 0.0
      %1353 = vmatpush1.msra.mxu0 0.0
      %1354 = vmatprep.subr.mxu0 0.0
      %1355 = vmatpush1.msra.mxu0 0.0
      %1356 = vmatprep.subr.mxu0 0.0
      %1357 = vmatpush1.msra.mxu0 0.0
      %1358 = vmatprep.subr.mxu0 0.0
      %1359 = vmatpush1.msra.mxu0 0.0
      %1360 = vmatprep.subr.mxu0 0.0
      %1361 = vmatpush1.msra.mxu0 0.0
      %1362 = vmatprep.subr.mxu0 0.0
      %1363 = vmatpush1.msra.mxu0 0.0
      %1364 = vmatprep.subr.mxu0 0.0
      %1365 = vmatpush1.msra.mxu0 0.0
      %1366 = vmatprep.subr.mxu0 0.0
      %1367 = vmatpush1.msra.mxu0 0.0
      %1368 = vmatprep.subr.mxu0 0.0
      %1369 = vmatpush1.msra.mxu0 0.0
      %1370 = vmatprep.subr.mxu0 0.0
      %1371 = vmatpush1.msra.mxu0 0.0
      %1372 = vmatprep.subr.mxu0 0.0
      %1373 = vmatpush1.msra.mxu0 0.0
      %1374 = vmatprep.subr.mxu0 0.0
      %1375 = vmatpush1.msra.mxu0 0.0
      %1376 = vmatprep.subr.mxu0 0.0
      %1377 = vmatpush1.msra.mxu0 0.0
      %1378 = vmatprep.subr.mxu0 0.0
      %1379 = vmatpush1.msra.mxu0 0.0
      %1380 = vmatprep.subr.mxu0 0.0
      %1381 = vmatpush1.msra.mxu0 0.0
      %1382 = vmatprep.subr.mxu0 0.0
      %1383 = vmatpush1.msra.mxu0 0.0
      %1384 = vmatprep.subr.mxu0 0.0
      %1385 = vmatpush1.msra.mxu0 0.0
      %1386 = vmatprep.subr.mxu0 0.0
      %1387 = vmatpush1.msra.mxu0 0.0
      %1388 = vmatprep.subr.mxu0 0.0
      %1389 = vmatpush1.msra.mxu0 0.0
      %1390 = vmatprep.subr.mxu0 0.0
      %1391 = vmatpush1.msra.mxu0 0.0
      %1392 = vmatprep.subr.mxu0 0.0
      %1393 = vmatpush1.msra.mxu0 0.0
      %1394 = vmatprep.subr.mxu0 0.0
      %1395 = vmatpush1.msra.mxu0 0.0
      %1396 = vmatprep.subr.mxu0 0.0
      %1397 = vmatpush1.msra.mxu0 0.0
      %1398 = vmatprep.subr.mxu0 0.0
      %1399 = vmatpush1.msra.mxu0 0.0
      %1400 = vmatprep.subr.mxu0 0.0
      %1401 = vmatpush1.msra.mxu0 0.0
      %1402 = vmatprep.subr.mxu0 0.0
      %1403 = vmatpush1.msra.mxu0 0.0
      %1404 = vmatprep.subr.mxu0 0.0
      %1405 = vmatpush1.msra.mxu0 0.0
      %1406 = vmatprep.subr.mxu0 0.0
      %1407 = vmatpush1.msra.mxu0 0.0
      %1408 = vmatprep.subr.mxu0 0.0
      %1409 = vmatpush1.msra.mxu0 0.0
      %1410 = vmatprep.mubr.f32.mxu0 0.0
      %1411 = vmatmul.mubr.f32.gmra.mrb[0].mxu0 %v477
      %v1412 = vpop.f32.mrb[0].mxu0
      %v1413 = vadd.f32 0.0, %v1412
      %v1414 = vpop.f32.mrb[0].mxu0
      %1415 = vmatprep.mubr.f32.mxu0 0.0
      %1416 = vmatmul.mubr.f32.gmra.mrb[0].mxu0 %v479
      %v1417 = vpop.f32.mrb[0].mxu0
      %v1418 = vadd.f32 0.0, %v1417
      %v1419 = vpop.f32.mrb[0].mxu0
      %1420 = vmatprep.mubr.f32.mxu0 0.0
      %1421 = vmatmul.mubr.f32.gmra.mrb[0].mxu0 %v481
      %v1422 = vpop.f32.mrb[0].mxu0
      %v1423 = vadd.f32 0.0, %v1422
      %v1424 = vpop.f32.mrb[0].mxu0
      %1425 = vmatprep.mubr.f32.mxu0 0.0
      %1426 = vmatmul.mubr.f32.gmra.mrb[0].mxu0 %v1341
      %v1427 = vpop.f32.mrb[0].mxu0
      %v1428 = vadd.f32 0.0, %v1427
      %v1429 = vpop.f32.mrb[0].mxu0
      %1430 = vdwg.mxu0
      %v1431 = vadd.f32 %v1331, %v1413
      %v1432 = vadd.f32 %v1332, %v1418
      %v1433 = vadd.f32 %v1333, %v1423
      %v1434 = vadd.f32 %v1334, %v1428
      %v1436 = vrot.slane %v227, 1
      %v1437 = vrot.slane %v228, 1
      %v1438 = vsel %vm460, %v1436, %v1437
      %s1439 = scalar_lea.vmem %s1, 44
      %v1440 = vld [vmem:[%s1439] sm:$0xf]
      %v1441 = vsel %vm254, %v1438, 0
      %v1444 = vsel %vm267, %v1440, 0
      %1446 = vmatprep.subr.mxu0 0.0
      %1447 = vmatpush1.msra.mxu0 %v1444
      %1448 = vmatprep.subr.mxu0 0.0
      %1449 = vmatpush1.msra.mxu0 0.0
      %1450 = vmatprep.subr.mxu0 0.0
      %1451 = vmatpush1.msra.mxu0 0.0
      %1452 = vmatprep.subr.mxu0 0.0
      %1453 = vmatpush1.msra.mxu0 0.0
      %1454 = vmatprep.subr.mxu0 0.0
      %1455 = vmatpush1.msra.mxu0 0.0
      %1456 = vmatprep.subr.mxu0 0.0
      %1457 = vmatpush1.msra.mxu0 0.0
      %1458 = vmatprep.subr.mxu0 0.0
      %1459 = vmatpush1.msra.mxu0 0.0
      %1460 = vmatprep.subr.mxu0 0.0
      %1461 = vmatpush1.msra.mxu0 0.0
      %1462 = vmatprep.subr.mxu0 0.0
      %1463 = vmatpush1.msra.mxu0 0.0
      %1464 = vmatprep.subr.mxu0 0.0
      %1465 = vmatpush1.msra.mxu0 0.0
      %1466 = vmatprep.subr.mxu0 0.0
      %1467 = vmatpush1.msra.mxu0 0.0
      %1468 = vmatprep.subr.mxu0 0.0
      %1469 = vmatpush1.msra.mxu0 0.0
      %1470 = vmatprep.subr.mxu0 0.0
      %1471 = vmatpush1.msra.mxu0 0.0
      %1472 = vmatprep.subr.mxu0 0.0
      %1473 = vmatpush1.msra.mxu0 0.0
      %1474 = vmatprep.subr.mxu0 0.0
      %1475 = vmatpush1.msra.mxu0 0.0
      %1476 = vmatprep.subr.mxu0 0.0
      %1477 = vmatpush1.msra.mxu0 0.0
      %1478 = vmatprep.subr.mxu0 0.0
      %1479 = vmatpush1.msra.mxu0 0.0
      %1480 = vmatprep.subr.mxu0 0.0
      %1481 = vmatpush1.msra.mxu0 0.0
      %1482 = vmatprep.subr.mxu0 0.0
      %1483 = vmatpush1.msra.mxu0 0.0
      %1484 = vmatprep.subr.mxu0 0.0
      %1485 = vmatpush1.msra.mxu0 0.0
      %1486 = vmatprep.subr.mxu0 0.0
      %1487 = vmatpush1.msra.mxu0 0.0
      %1488 = vmatprep.subr.mxu0 0.0
      %1489 = vmatpush1.msra.mxu0 0.0
      %1490 = vmatprep.subr.mxu0 0.0
      %1491 = vmatpush1.msra.mxu0 0.0
      %1492 = vmatprep.subr.mxu0 0.0
      %1493 = vmatpush1.msra.mxu0 0.0
      %1494 = vmatprep.subr.mxu0 0.0
      %1495 = vmatpush1.msra.mxu0 0.0
      %1496 = vmatprep.subr.mxu0 0.0
      %1497 = vmatpush1.msra.mxu0 0.0
      %1498 = vmatprep.subr.mxu0 0.0
      %1499 = vmatpush1.msra.mxu0 0.0
      %1500 = vmatprep.subr.mxu0 0.0
      %1501 = vmatpush1.msra.mxu0 0.0
      %1502 = vmatprep.subr.mxu0 0.0
      %1503 = vmatpush1.msra.mxu0 0.0
      %1504 = vmatprep.subr.mxu0 0.0
      %1505 = vmatpush1.msra.mxu0 0.0
      %1506 = vmatprep.subr.mxu0 0.0
      %1507 = vmatpush1.msra.mxu0 0.0
      %1508 = vmatprep.subr.mxu0 0.0
      %1509 = vmatpush1.msra.mxu0 0.0
      %1510 = vmatprep.mubr.f32.mxu0 0.0
      %1511 = vmatmul.mubr.f32.gmra.mrb[0].mxu0 %v595
      %v1512 = vpop.f32.mrb[0].mxu0
      %v1513 = vadd.f32 0.0, %v1512
      %v1514 = vpop.f32.mrb[0].mxu0
      %1515 = vmatprep.mubr.f32.mxu0 0.0
      %1516 = vmatmul.mubr.f32.gmra.mrb[0].mxu0 %v597
      %v1517 = vpop.f32.mrb[0].mxu0
      %v1518 = vadd.f32 0.0, %v1517
      %v1519 = vpop.f32.mrb[0].mxu0
      %1520 = vmatprep.mubr.f32.mxu0 0.0
      %1521 = vmatmul.mubr.f32.gmra.mrb[0].mxu0 %v599
      %v1522 = vpop.f32.mrb[0].mxu0
      %v1523 = vadd.f32 0.0, %v1522
      %v1524 = vpop.f32.mrb[0].mxu0
      %1525 = vmatprep.mubr.f32.mxu0 0.0
      %1526 = vmatmul.mubr.f32.gmra.mrb[0].mxu0 %v1441
      %v1527 = vpop.f32.mrb[0].mxu0
      %v1528 = vadd.f32 0.0, %v1527
      %v1529 = vpop.f32.mrb[0].mxu0
      %1530 = vdwg.mxu0
      %v1531 = vadd.f32 %v1431, %v1513
      %v1532 = vadd.f32 %v1432, %v1518
      %v1533 = vadd.f32 %v1433, %v1523
      %v1534 = vadd.f32 %v1434, %v1528
      %s1535 = scalar_lea.vmem %s1, 48
      %v1536 = vld [vmem:[%s1535] sm:$0xf]
      %v1538 = vsel %vm254, %v238, 0
      %v1541 = vsel %vm267, %v1536, 0
      %1543 = vmatprep.subr.mxu0 0.0
      %1544 = vmatpush1.msra.mxu0 %v1541
      %1545 = vmatprep.subr.mxu0 0.0
      %1546 = vmatpush1.msra.mxu0 0.0
      %1547 = vmatprep.subr.mxu0 0.0
      %1548 = vmatpush1.msra.mxu0 0.0
      %1549 = vmatprep.subr.mxu0 0.0
      %1550 = vmatpush1.msra.mxu0 0.0
      %1551 = vmatprep.subr.mxu0 0.0
      %1552 = vmatpush1.msra.mxu0 0.0
      %1553 = vmatprep.subr.mxu0 0.0
      %1554 = vmatpush1.msra.mxu0 0.0
      %1555 = vmatprep.subr.mxu0 0.0
      %1556 = vmatpush1.msra.mxu0 0.0
      %1557 = vmatprep.subr.mxu0 0.0
      %1558 = vmatpush1.msra.mxu0 0.0
      %1559 = vmatprep.subr.mxu0 0.0
      %1560 = vmatpush1.msra.mxu0 0.0
      %1561 = vmatprep.subr.mxu0 0.0
      %1562 = vmatpush1.msra.mxu0 0.0
      %1563 = vmatprep.subr.mxu0 0.0
      %1564 = vmatpush1.msra.mxu0 0.0
      %1565 = vmatprep.subr.mxu0 0.0
      %1566 = vmatpush1.msra.mxu0 0.0
      %1567 = vmatprep.subr.mxu0 0.0
      %1568 = vmatpush1.msra.mxu0 0.0
      %1569 = vmatprep.subr.mxu0 0.0
      %1570 = vmatpush1.msra.mxu0 0.0
      %1571 = vmatprep.subr.mxu0 0.0
      %1572 = vmatpush1.msra.mxu0 0.0
      %1573 = vmatprep.subr.mxu0 0.0
      %1574 = vmatpush1.msra.mxu0 0.0
      %1575 = vmatprep.subr.mxu0 0.0
      %1576 = vmatpush1.msra.mxu0 0.0
      %1577 = vmatprep.subr.mxu0 0.0
      %1578 = vmatpush1.msra.mxu0 0.0
      %1579 = vmatprep.subr.mxu0 0.0
      %1580 = vmatpush1.msra.mxu0 0.0
      %1581 = vmatprep.subr.mxu0 0.0
      %1582 = vmatpush1.msra.mxu0 0.0
      %1583 = vmatprep.subr.mxu0 0.0
      %1584 = vmatpush1.msra.mxu0 0.0
      %1585 = vmatprep.subr.mxu0 0.0
      %1586 = vmatpush1.msra.mxu0 0.0
      %1587 = vmatprep.subr.mxu0 0.0
      %1588 = vmatpush1.msra.mxu0 0.0
      %1589 = vmatprep.subr.mxu0 0.0
      %1590 = vmatpush1.msra.mxu0 0.0
      %1591 = vmatprep.subr.mxu0 0.0
      %1592 = vmatpush1.msra.mxu0 0.0
      %1593 = vmatprep.subr.mxu0 0.0
      %1594 = vmatpush1.msra.mxu0 0.0
      %1595 = vmatprep.subr.mxu0 0.0
      %1596 = vmatpush1.msra.mxu0 0.0
      %1597 = vmatprep.subr.mxu0 0.0
      %1598 = vmatpush1.msra.mxu0 0.0
      %1599 = vmatprep.subr.mxu0 0.0
      %1600 = vmatpush1.msra.mxu0 0.0
      %1601 = vmatprep.subr.mxu0 0.0
      %1602 = vmatpush1.msra.mxu0 0.0
      %1603 = vmatprep.subr.mxu0 0.0
      %1604 = vmatpush1.msra.mxu0 0.0
      %1605 = vmatprep.subr.mxu0 0.0
      %1606 = vmatpush1.msra.mxu0 0.0
      %1607 = vmatprep.mubr.f32.mxu0 0.0
      %1608 = vmatmul.mubr.f32.gmra.mrb[0].mxu0 %v699
      %v1609 = vpop.f32.mrb[0].mxu0
      %v1610 = vadd.f32 0.0, %v1609
      %v1611 = vpop.f32.mrb[0].mxu0
      %1612 = vmatprep.mubr.f32.mxu0 0.0
      %1613 = vmatmul.mubr.f32.gmra.mrb[0].mxu0 %v702
      %v1614 = vpop.f32.mrb[0].mxu0
      %v1615 = vadd.f32 0.0, %v1614
      %v1616 = vpop.f32.mrb[0].mxu0
      %1617 = vmatprep.mubr.f32.mxu0 0.0
      %1618 = vmatmul.mubr.f32.gmra.mrb[0].mxu0 %v705
      %v1619 = vpop.f32.mrb[0].mxu0
      %v1620 = vadd.f32 0.0, %v1619
      %v1621 = vpop.f32.mrb[0].mxu0
      %1622 = vmatprep.mubr.f32.mxu0 0.0
      %1623 = vmatmul.mubr.f32.gmra.mrb[0].mxu0 %v1538
      %v1624 = vpop.f32.mrb[0].mxu0
      %v1625 = vadd.f32 0.0, %v1624
      %v1626 = vpop.f32.mrb[0].mxu0
      %1627 = vdwg.mxu0
      %v1628 = vadd.f32 %v1531, %v1610
      %v1629 = vadd.f32 %v1532, %v1615
      %v1630 = vadd.f32 %v1533, %v1620
      %v1631 = vadd.f32 %v1534, %v1625
      %s1632 = scalar_lea.vmem %s1, 52
      %v1633 = vld [vmem:[%s1632] sm:$0xf]
      %v1635 = vsel %vm254, %v249, 0
      %v1638 = vsel %vm267, %v1633, 0
      %1640 = vmatprep.subr.mxu0 0.0
      %1641 = vmatpush1.msra.mxu0 %v1638
      %1642 = vmatprep.subr.mxu0 0.0
      %1643 = vmatpush1.msra.mxu0 0.0
      %1644 = vmatprep.subr.mxu0 0.0
      %1645 = vmatpush1.msra.mxu0 0.0
      %1646 = vmatprep.subr.mxu0 0.0
      %1647 = vmatpush1.msra.mxu0 0.0
      %1648 = vmatprep.subr.mxu0 0.0
      %1649 = vmatpush1.msra.mxu0 0.0
      %1650 = vmatprep.subr.mxu0 0.0
      %1651 = vmatpush1.msra.mxu0 0.0
      %1652 = vmatprep.subr.mxu0 0.0
      %1653 = vmatpush1.msra.mxu0 0.0
      %1654 = vmatprep.subr.mxu0 0.0
      %1655 = vmatpush1.msra.mxu0 0.0
      %1656 = vmatprep.subr.mxu0 0.0
      %1657 = vmatpush1.msra.mxu0 0.0
      %1658 = vmatprep.subr.mxu0 0.0
      %1659 = vmatpush1.msra.mxu0 0.0
      %1660 = vmatprep.subr.mxu0 0.0
      %1661 = vmatpush1.msra.mxu0 0.0
      %1662 = vmatprep.subr.mxu0 0.0
      %1663 = vmatpush1.msra.mxu0 0.0
      %1664 = vmatprep.subr.mxu0 0.0
      %1665 = vmatpush1.msra.mxu0 0.0
      %1666 = vmatprep.subr.mxu0 0.0
      %1667 = vmatpush1.msra.mxu0 0.0
      %1668 = vmatprep.subr.mxu0 0.0
      %1669 = vmatpush1.msra.mxu0 0.0
      %1670 = vmatprep.subr.mxu0 0.0
      %1671 = vmatpush1.msra.mxu0 0.0
      %1672 = vmatprep.subr.mxu0 0.0
      %1673 = vmatpush1.msra.mxu0 0.0
      %1674 = vmatprep.subr.mxu0 0.0
      %1675 = vmatpush1.msra.mxu0 0.0
      %1676 = vmatprep.subr.mxu0 0.0
      %1677 = vmatpush1.msra.mxu0 0.0
      %1678 = vmatprep.subr.mxu0 0.0
      %1679 = vmatpush1.msra.mxu0 0.0
      %1680 = vmatprep.subr.mxu0 0.0
      %1681 = vmatpush1.msra.mxu0 0.0
      %1682 = vmatprep.subr.mxu0 0.0
      %1683 = vmatpush1.msra.mxu0 0.0
      %1684 = vmatprep.subr.mxu0 0.0
      %1685 = vmatpush1.msra.mxu0 0.0
      %1686 = vmatprep.subr.mxu0 0.0
      %1687 = vmatpush1.msra.mxu0 0.0
      %1688 = vmatprep.subr.mxu0 0.0
      %1689 = vmatpush1.msra.mxu0 0.0
      %1690 = vmatprep.subr.mxu0 0.0
      %1691 = vmatpush1.msra.mxu0 0.0
      %1692 = vmatprep.subr.mxu0 0.0
      %1693 = vmatpush1.msra.mxu0 0.0
      %1694 = vmatprep.subr.mxu0 0.0
      %1695 = vmatpush1.msra.mxu0 0.0
      %1696 = vmatprep.subr.mxu0 0.0
      %1697 = vmatpush1.msra.mxu0 0.0
      %1698 = vmatprep.subr.mxu0 0.0
      %1699 = vmatpush1.msra.mxu0 0.0
      %1700 = vmatprep.subr.mxu0 0.0
      %1701 = vmatpush1.msra.mxu0 0.0
      %1702 = vmatprep.subr.mxu0 0.0
      %1703 = vmatpush1.msra.mxu0 0.0
      %1704 = vmatprep.mubr.f32.mxu0 0.0
      %1705 = vmatmul.mubr.f32.gmra.mrb[0].mxu0 %v805
      %v1706 = vpop.f32.mrb[0].mxu0
      %v1707 = vadd.f32 0.0, %v1706
      %v1708 = vpop.f32.mrb[0].mxu0
      %1709 = vmatprep.mubr.f32.mxu0 0.0
      %1710 = vmatmul.mubr.f32.gmra.mrb[0].mxu0 %v808
      %v1711 = vpop.f32.mrb[0].mxu0
      %v1712 = vadd.f32 0.0, %v1711
      %v1713 = vpop.f32.mrb[0].mxu0
      %1714 = vmatprep.mubr.f32.mxu0 0.0
      %1715 = vmatmul.mubr.f32.gmra.mrb[0].mxu0 %v811
      %v1716 = vpop.f32.mrb[0].mxu0
      %v1717 = vadd.f32 0.0, %v1716
      %v1718 = vpop.f32.mrb[0].mxu0
      %1719 = vmatprep.mubr.f32.mxu0 0.0
      %1720 = vmatmul.mubr.f32.gmra.mrb[0].mxu0 %v1635
      %v1721 = vpop.f32.mrb[0].mxu0
      %v1722 = vadd.f32 0.0, %v1721
      %v1723 = vpop.f32.mrb[0].mxu0
      %1724 = vdwg.mxu0
      %v1725 = vadd.f32 %v1628, %v1707
      %v1726 = vadd.f32 %v1629, %v1712
      %v1727 = vadd.f32 %v1630, %v1717
      %v1728 = vadd.f32 %v1631, %v1722
      %v1730 = vrot.slane %v238, 1
      %v1731 = vrot.slane %v239, 1
      %v1732 = vsel %vm460, %v1730, %v1731
      %s1733 = scalar_lea.vmem %s1, 56
      %v1734 = vld [vmem:[%s1733] sm:$0xf]
      %v1735 = vsel %vm254, %v1732, 0
      %v1738 = vsel %vm267, %v1734, 0
      %1740 = vmatprep.subr.mxu0 0.0
      %1741 = vmatpush1.msra.mxu0 %v1738
      %1742 = vmatprep.subr.mxu0 0.0
      %1743 = vmatpush1.msra.mxu0 0.0
      %1744 = vmatprep.subr.mxu0 0.0
      %1745 = vmatpush1.msra.mxu0 0.0
      %1746 = vmatprep.subr.mxu0 0.0
      %1747 = vmatpush1.msra.mxu0 0.0
      %1748 = vmatprep.subr.mxu0 0.0
      %1749 = vmatpush1.msra.mxu0 0.0
      %1750 = vmatprep.subr.mxu0 0.0
      %1751 = vmatpush1.msra.mxu0 0.0
      %1752 = vmatprep.subr.mxu0 0.0
      %1753 = vmatpush1.msra.mxu0 0.0
      %1754 = vmatprep.subr.mxu0 0.0
      %1755 = vmatpush1.msra.mxu0 0.0
      %1756 = vmatprep.subr.mxu0 0.0
      %1757 = vmatpush1.msra.mxu0 0.0
      %1758 = vmatprep.subr.mxu0 0.0
      %1759 = vmatpush1.msra.mxu0 0.0
      %1760 = vmatprep.subr.mxu0 0.0
      %1761 = vmatpush1.msra.mxu0 0.0
      %1762 = vmatprep.subr.mxu0 0.0
      %1763 = vmatpush1.msra.mxu0 0.0
      %1764 = vmatprep.subr.mxu0 0.0
      %1765 = vmatpush1.msra.mxu0 0.0
      %1766 = vmatprep.subr.mxu0 0.0
      %1767 = vmatpush1.msra.mxu0 0.0
      %1768 = vmatprep.subr.mxu0 0.0
      %1769 = vmatpush1.msra.mxu0 0.0
      %1770 = vmatprep.subr.mxu0 0.0
      %1771 = vmatpush1.msra.mxu0 0.0
      %1772 = vmatprep.subr.mxu0 0.0
      %1773 = vmatpush1.msra.mxu0 0.0
      %1774 = vmatprep.subr.mxu0 0.0
      %1775 = vmatpush1.msra.mxu0 0.0
      %1776 = vmatprep.subr.mxu0 0.0
      %1777 = vmatpush1.msra.mxu0 0.0
      %1778 = vmatprep.subr.mxu0 0.0
      %1779 = vmatpush1.msra.mxu0 0.0
      %1780 = vmatprep.subr.mxu0 0.0
      %1781 = vmatpush1.msra.mxu0 0.0
      %1782 = vmatprep.subr.mxu0 0.0
      %1783 = vmatpush1.msra.mxu0 0.0
      %1784 = vmatprep.subr.mxu0 0.0
      %1785 = vmatpush1.msra.mxu0 0.0
      %1786 = vmatprep.subr.mxu0 0.0
      %1787 = vmatpush1.msra.mxu0 0.0
      %1788 = vmatprep.subr.mxu0 0.0
      %1789 = vmatpush1.msra.mxu0 0.0
      %1790 = vmatprep.subr.mxu0 0.0
      %1791 = vmatpush1.msra.mxu0 0.0
      %1792 = vmatprep.subr.mxu0 0.0
      %1793 = vmatpush1.msra.mxu0 0.0
      %1794 = vmatprep.subr.mxu0 0.0
      %1795 = vmatpush1.msra.mxu0 0.0
      %1796 = vmatprep.subr.mxu0 0.0
      %1797 = vmatpush1.msra.mxu0 0.0
      %1798 = vmatprep.subr.mxu0 0.0
      %1799 = vmatpush1.msra.mxu0 0.0
      %1800 = vmatprep.subr.mxu0 0.0
      %1801 = vmatpush1.msra.mxu0 0.0
      %1802 = vmatprep.subr.mxu0 0.0
      %1803 = vmatpush1.msra.mxu0 0.0
      %1804 = vmatprep.mubr.f32.mxu0 0.0
      %1805 = vmatmul.mubr.f32.gmra.mrb[0].mxu0 %v925
      %v1806 = vpop.f32.mrb[0].mxu0
      %v1807 = vadd.f32 0.0, %v1806
      %v1808 = vpop.f32.mrb[0].mxu0
      %1809 = vmatprep.mubr.f32.mxu0 0.0
      %1810 = vmatmul.mubr.f32.gmra.mrb[0].mxu0 %v927
      %v1811 = vpop.f32.mrb[0].mxu0
      %v1812 = vadd.f32 0.0, %v1811
      %v1813 = vpop.f32.mrb[0].mxu0
      %1814 = vmatprep.mubr.f32.mxu0 0.0
      %1815 = vmatmul.mubr.f32.gmra.mrb[0].mxu0 %v929
      %v1816 = vpop.f32.mrb[0].mxu0
      %v1817 = vadd.f32 0.0, %v1816
      %v1818 = vpop.f32.mrb[0].mxu0
      %1819 = vmatprep.mubr.f32.mxu0 0.0
      %1820 = vmatmul.mubr.f32.gmra.mrb[0].mxu0 %v1735
      %v1821 = vpop.f32.mrb[0].mxu0
      %v1822 = vadd.f32 0.0, %v1821
      %v1823 = vpop.f32.mrb[0].mxu0
      %1824 = vdwg.mxu0
      %v1825 = vadd.f32 %v1725, %v1807
      %v1826 = vadd.f32 %v1726, %v1812
      %v1827 = vadd.f32 %v1727, %v1817
      %v1828 = vadd.f32 %v1728, %v1822
      %v1830 = vrot.slane %v249, 1
      %v1831 = vrot.slane %v250, 1
      %v1832 = vsel %vm460, %v1830, %v1831
      %s1833 = scalar_lea.vmem %s1, 60
      %v1834 = vld [vmem:[%s1833] sm:$0xf]
      %v1835 = vsel %vm254, %v1832, 0
      %v1838 = vsel %vm267, %v1834, 0
      %1840 = vmatprep.subr.mxu0 0.0
      %1841 = vmatpush1.msra.mxu0 %v1838
      %1842 = vmatprep.subr.mxu0 0.0
      %1843 = vmatpush1.msra.mxu0 0.0
      %1844 = vmatprep.subr.mxu0 0.0
      %1845 = vmatpush1.msra.mxu0 0.0
      %1846 = vmatprep.subr.mxu0 0.0
      %1847 = vmatpush1.msra.mxu0 0.0
      %1848 = vmatprep.subr.mxu0 0.0
      %1849 = vmatpush1.msra.mxu0 0.0
      %1850 = vmatprep.subr.mxu0 0.0
      %1851 = vmatpush1.msra.mxu0 0.0
      %1852 = vmatprep.subr.mxu0 0.0
      %1853 = vmatpush1.msra.mxu0 0.0
      %1854 = vmatprep.subr.mxu0 0.0
      %1855 = vmatpush1.msra.mxu0 0.0
      %1856 = vmatprep.subr.mxu0 0.0
      %1857 = vmatpush1.msra.mxu0 0.0
      %1858 = vmatprep.subr.mxu0 0.0
      %1859 = vmatpush1.msra.mxu0 0.0
      %1860 = vmatprep.subr.mxu0 0.0
      %1861 = vmatpush1.msra.mxu0 0.0
      %1862 = vmatprep.subr.mxu0 0.0
      %1863 = vmatpush1.msra.mxu0 0.0
      %1864 = vmatprep.subr.mxu0 0.0
      %1865 = vmatpush1.msra.mxu0 0.0
      %1866 = vmatprep.subr.mxu0 0.0
      %1867 = vmatpush1.msra.mxu0 0.0
      %1868 = vmatprep.subr.mxu0 0.0
      %1869 = vmatpush1.msra.mxu0 0.0
      %1870 = vmatprep.subr.mxu0 0.0
      %1871 = vmatpush1.msra.mxu0 0.0
      %1872 = vmatprep.subr.mxu0 0.0
      %1873 = vmatpush1.msra.mxu0 0.0
      %1874 = vmatprep.subr.mxu0 0.0
      %1875 = vmatpush1.msra.mxu0 0.0
      %1876 = vmatprep.subr.mxu0 0.0
      %1877 = vmatpush1.msra.mxu0 0.0
      %1878 = vmatprep.subr.mxu0 0.0
      %1879 = vmatpush1.msra.mxu0 0.0
      %1880 = vmatprep.subr.mxu0 0.0
      %1881 = vmatpush1.msra.mxu0 0.0
      %1882 = vmatprep.subr.mxu0 0.0
      %1883 = vmatpush1.msra.mxu0 0.0
      %1884 = vmatprep.subr.mxu0 0.0
      %1885 = vmatpush1.msra.mxu0 0.0
      %1886 = vmatprep.subr.mxu0 0.0
      %1887 = vmatpush1.msra.mxu0 0.0
      %1888 = vmatprep.subr.mxu0 0.0
      %1889 = vmatpush1.msra.mxu0 0.0
      %1890 = vmatprep.subr.mxu0 0.0
      %1891 = vmatpush1.msra.mxu0 0.0
      %1892 = vmatprep.subr.mxu0 0.0
      %1893 = vmatpush1.msra.mxu0 0.0
      %1894 = vmatprep.subr.mxu0 0.0
      %1895 = vmatpush1.msra.mxu0 0.0
      %1896 = vmatprep.subr.mxu0 0.0
      %1897 = vmatpush1.msra.mxu0 0.0
      %1898 = vmatprep.subr.mxu0 0.0
      %1899 = vmatpush1.msra.mxu0 0.0
      %1900 = vmatprep.subr.mxu0 0.0
      %1901 = vmatpush1.msra.mxu0 0.0
      %1902 = vmatprep.subr.mxu0 0.0
      %1903 = vmatpush1.msra.mxu0 0.0
      %1904 = vmatprep.mubr.f32.mxu0 0.0
      %1905 = vmatmul.mubr.f32.gmra.mrb[0].mxu0 %v1043
      %v1906 = vpop.f32.mrb[0].mxu0
      %v1907 = vadd.f32 0.0, %v1906
      %v1908 = vpop.f32.mrb[0].mxu0
      %1909 = vmatprep.mubr.f32.mxu0 0.0
      %1910 = vmatmul.mubr.f32.gmra.mrb[0].mxu0 %v1045
      %v1911 = vpop.f32.mrb[0].mxu0
      %v1912 = vadd.f32 0.0, %v1911
      %v1913 = vpop.f32.mrb[0].mxu0
      %1914 = vmatprep.mubr.f32.mxu0 0.0
      %1915 = vmatmul.mubr.f32.gmra.mrb[0].mxu0 %v1047
      %v1916 = vpop.f32.mrb[0].mxu0
      %v1917 = vadd.f32 0.0, %v1916
      %v1918 = vpop.f32.mrb[0].mxu0
      %1919 = vmatprep.mubr.f32.mxu0 0.0
      %1920 = vmatmul.mubr.f32.gmra.mrb[0].mxu0 %v1835
      %v1921 = vpop.f32.mrb[0].mxu0
      %v1922 = vadd.f32 0.0, %v1921
      %v1923 = vpop.f32.mrb[0].mxu0
      %1924 = vdwg.mxu0
      %v1925 = vadd.f32 %v1825, %v1907
      %v1926 = vadd.f32 %v1826, %v1912
      %v1927 = vadd.f32 %v1827, %v1917
      %v1928 = vadd.f32 %v1828, %v1922
      %v1929 = vld [vmem:[%s2] sm:$0x1]
      %v1931 = vlaneseq
      %v1932 = vshrl.u32 %v1931, 7
      %v1933 = vsub.s32 0, %v1932
      %v1934 = vrot.slane %v1929, %v1933
      %v1936 = vadd.f32 %v1925, %v1934
      %v1937 = vadd.f32 %v1926, %v1934
      %v1938 = vadd.f32 %v1927, %v1934
      %v1939 = vadd.f32 %v1928, %v1934
      %v1940 = vmax.f32 %v1936, 0.0
      %v1941 = vmax.f32 %v1937, 0.0
      %v1942 = vmax.f32 %v1938, 0.0
      %v1943 = vmax.f32 %v1939, 0.0
      %vm1944 = vcmask 64512
      %1945 = vst.msk [vmem:[%s206] sm:$0xff] %vm1944, %v1940
      %1946 = vst.msk [vmem:[%s206 + $0x8] sm:$0xff] %vm1944, %v1941
      %1947 = vst.msk [vmem:[%s206 + $0x10] sm:$0xff] %vm1944, %v1942
      %1948 = vst.msk [vmem:[%s206 + $0x18] sm:$0xff] %vm1944, %v1943
      %s1949 = smul.u32 4, %s19
      %p1950 = scmp.lt.s32.totalorder %s18, 1
      %s1951 = scalar_select %p1950, %s18, 1
      %p1952 = scmp.lt.s32.totalorder %s1949, 7
      %s1953 = scalar_select %p1952, %s1949, 7
      %s1954 = smul.addr %s1951, 8
      %s1955 = sadd.s32 %s1953, %s1954
      %s1956 = smul.addr %s1955, 8
      %s1957 = scalar_lea.vmem %s3, %s1956
      // Predicated region
      $region33: #{unet_layer_forward.2} parent=31 // pred_check
        %p1958 = pneg %p116
      $region34: #{unet_layer_forward.2} parent=31 // pred_check_branch
        %1960 = sbr.rel (%p1958) target = $region36
      $region35: #{unet_layer_forward.2} parent=31 // pred_region
        %s1961 = smul.u32 4, %s19
      $region36: #{unet_layer_forward.2} parent=31 // pred_fallthru
        _
    $region32: #{unet_layer_forward.2} parent=5 // pred_fallthru
      _
    %p1962 = scmp.le.s32.totalorder 2, %s9
    // Predicated region
    $region37: #{unet_layer_forward.2} parent=5 // pred_check
      %p1963 = pneg %p1962
    $region38: #{unet_layer_forward.2} parent=5 // pred_check_branch
      %1965 = sbr.rel (%p1963) target = $region40
    $region39: #{unet_layer_forward.2} parent=5 // pred_region
      %s1966 = ssub.s32 %s9, 2
      // Predicated region
      $region41: #{unet_layer_forward.2} parent=39 // pred_check
        %p1967 = pneg %p122
      $region42: #{unet_layer_forward.2} parent=39 // pred_check_branch
        %1969 = sbr.rel (%p1967) target = $region44
      $region43: #{unet_layer_forward.2} parent=39 // pred_region
        %s1970 = smul.u32 4, %s21
        %p1971 = scmp.lt.s32.totalorder %s20, 1
        %s1972 = scalar_select %p1971, %s20, 1
        %p1973 = scmp.lt.s32.totalorder %s1970, 7
        %s1974 = scalar_select %p1973, %s1970, 7
        %s1975 = smul.addr %s1972, 8
        %s1976 = sadd.s32 %s1974, %s1975
        %s1977 = smul.addr %s1976, 8
        %s1978 = scalar_lea.vmem %s3, %s1977
      $region44: #{unet_layer_forward.2} parent=39 // pred_fallthru
        _
    $region40: #{unet_layer_forward.2} parent=5 // pred_fallthru
      _
  $region6: #{unet_layer_forward.2} parent=0 // loop_footer
    %s13 = sadd.s32 1, %s9
  $region7: #{unet_layer_forward.2} parent=0 // loop_footer_branch
    %8 = sbr.rel target = $region3
  $region8: #{unet_layer_forward.2} parent=0 // loop_exit
    _

// kernel: unet_layer_forward.3
$region0: #{unet_layer_forward.3}
  #allocation0 [shape = 'u32[]', space=smem, size = 0x4, offset = 0x4, fixed_abs, tag = 'smem constant byte address 0x4 - core index']
  #allocation1 [shape = 'u32[144,128]{1,0:T(1,128)}', space=vmem, size = 0x12000, scoped, tag = 'internal scratch']
  %s0 = inlined_call_operand.vmem [shape: f32[2,2,6,10,8], index: 0, kind: input, shape index: {}]
  %s1 = inlined_call_operand.vmem [shape: f32[9,8,16], index: 1, kind: input, shape index: {}]
  %s2 = inlined_call_operand.vmem [shape: f32[1,16], index: 2, kind: input, shape index: {}]
  %s3 = inlined_call_operand.vmem [shape: f32[2,8,8,16], index: 3, kind: output, shape index: {0}]
  %s4 = inlined_call_operand.vmem [shape: f32[2,2,2,16], index: 4, kind: output, shape index: {1}]
  %5 = xla_tuple %s3, %s4
  %s6 = sld [smem:[#allocation0]]
  $region53: #{unet_layer_forward.3} parent=0
    _
  %s8 = ssub.s32 1, %s6
  %s9 = scalar_select 0, %s8, %s6
  loop: start=0, step=1, limit=6
  $region2: #{unet_layer_forward.3} parent=0 // loop_pre_header
    _
  $region3: #{unet_layer_forward.3} parent=0 // loop_header
    %s11 = sphi 0, %s15
    %p12 = scmp.ge.s32.totalorder %s11, 6
    %s18 = sphi 0, %s30
    %s19 = sphi 0, %s26
    %s20 = sphi 0, %s18
    %s21 = sphi 0, %s19
    %s22 = sphi 0, %s20
    %s23 = sphi 0, %s21
    %s35 = sphi 0, %s37
    %s38 = sphi 0, %s35
    %s39 = sphi 0, %s38
    %s55 = sphi 0, %s39
    %s59 = sphi 0, %s59
    %s61 = sphi 0, %s59
    %s62 = sphi 0, %s61
    %s76 = sphi 0, %s62
    %s80 = sphi 0, %s80
    %s82 = sphi 0, %s80
    %s83 = sphi 0, %s82
    %s97 = sphi 0, %s83
    %s105 = sphi 0, %s107
    %s108 = sphi 0, %s105
    %s109 = sphi 0, %s108
    %s125 = sphi 0, %s109
    %s133 = sphi 0, %s135
    %s136 = sphi 0, %s133
    %s137 = sphi 0, %s136
    %s153 = sphi 0, %s137
  $region4: #{unet_layer_forward.3} parent=0 // loop_header_branch
    %14 = sbr.rel (%p12) target = $region8
  $region5: #{unet_layer_forward.3} parent=0 // loop_body
    %s16 = ssub.s32 %s11, 1
    %s17 = ssub.s32 %s11, 2
    %s24 = sadd.s32 1, %s19
    %p25 = scmp.ge.s32.totalorder %s24, 2
    %s26 = scalar_select %p25, 0, %s24
    %s27 = sadd.s32 1, %s18
    %s28 = scalar_select %p25, %s27, %s18
    %p29 = scmp.ge.s32.totalorder %s28, 2
    %s30 = scalar_select %p29, 0, %s28
    %s31 = ssub.s32 %s18, %s30
    %s32 = ssub.s32 %s19, %s26
    %s33 = sor.u32 %s31, %s32
    %p34 = scmp.eq.s32.totalorder %s33, 0
    %s36 = sadd.s32 %s35, 1
    %s37 = scalar_select %p34, %s35, %s36
    %p40 = pneg %p34
    %p41 = scmp.eq.s32.totalorder %s11, 3
    %p42 = por %p40, %p41
    %p43 = scmp.ne.s32.totalorder %s35, %s38
    %p44 = scmp.eq.s32.totalorder %s11, 0
    %p45 = por %p43, %p44
    %p46 = scmp.ne.s32.totalorder %s35, %s38
    %p47 = scmp.eq.s32.totalorder %s16, 3
    %p48 = por %p46, %p47
    %p49 = scmp.ne.s32.totalorder %s38, %s39
    %p50 = scmp.eq.s32.totalorder %s16, 0
    %p51 = por %p49, %p50
    %p52 = scmp.ne.s32.totalorder %s38, %s39
    %p53 = scmp.eq.s32.totalorder %s17, 3
    %p54 = por %p52, %p53
    %p56 = scmp.ne.s32.totalorder %s39, %s55
    %p57 = scmp.eq.s32.totalorder %s17, 0
    %p58 = por %p56, %p57
    %s60 = sadd.s32 %s59, 1
    %p63 = scmp.eq.s32.totalorder %s11, 3
    %p64 = scmp.ne.s32.totalorder %s59, %s61
    %p65 = scmp.eq.s32.totalorder %s11, 0
    %p66 = por %p64, %p65
    %p67 = scmp.ne.s32.totalorder %s59, %s61
    %p68 = scmp.eq.s32.totalorder %s16, 3
    %p69 = por %p67, %p68
    %p70 = scmp.ne.s32.totalorder %s61, %s62
    %p71 = scmp.eq.s32.totalorder %s16, 0
    %p72 = por %p70, %p71
    %p73 = scmp.ne.s32.totalorder %s61, %s62
    %p74 = scmp.eq.s32.totalorder %s17, 3
    %p75 = por %p73, %p74
    %p77 = scmp.ne.s32.totalorder %s62, %s76
    %p78 = scmp.eq.s32.totalorder %s17, 0
    %p79 = por %p77, %p78
    %s81 = sadd.s32 %s80, 1
    %p84 = scmp.eq.s32.totalorder %s11, 3
    %p85 = scmp.ne.s32.totalorder %s80, %s82
    %p86 = scmp.eq.s32.totalorder %s11, 0
    %p87 = por %p85, %p86
    %p88 = scmp.ne.s32.totalorder %s80, %s82
    %p89 = scmp.eq.s32.totalorder %s16, 3
    %p90 = por %p88, %p89
    %p91 = scmp.ne.s32.totalorder %s82, %s83
    %p92 = scmp.eq.s32.totalorder %s16, 0
    %p93 = por %p91, %p92
    %p94 = scmp.ne.s32.totalorder %s82, %s83
    %p95 = scmp.eq.s32.totalorder %s17, 3
    %p96 = por %p94, %p95
    %p98 = scmp.ne.s32.totalorder %s83, %s97
    %p99 = scmp.eq.s32.totalorder %s17, 0
    %p100 = por %p98, %p99
    %s101 = ssub.s32 %s18, %s30
    %s102 = ssub.s32 %s19, %s26
    %s103 = sor.u32 %s101, %s102
    %p104 = scmp.eq.s32.totalorder %s103, 0
    %s106 = sadd.s32 %s105, 1
    %s107 = scalar_select %p104, %s105, %s106
    %p110 = pneg %p104
    %p111 = scmp.eq.s32.totalorder %s11, 3
    %p112 = por %p110, %p111
    %p113 = scmp.ne.s32.totalorder %s105, %s108
    %p114 = scmp.eq.s32.totalorder %s11, 0
    %p115 = por %p113, %p114
    %p116 = scmp.ne.s32.totalorder %s105, %s108
    %p117 = scmp.eq.s32.totalorder %s16, 3
    %p118 = por %p116, %p117
    %p119 = scmp.ne.s32.totalorder %s108, %s109
    %p120 = scmp.eq.s32.totalorder %s16, 0
    %p121 = por %p119, %p120
    %p122 = scmp.ne.s32.totalorder %s108, %s109
    %p123 = scmp.eq.s32.totalorder %s17, 3
    %p124 = por %p122, %p123
    %p126 = scmp.ne.s32.totalorder %s109, %s125
    %p127 = scmp.eq.s32.totalorder %s17, 0
    %p128 = por %p126, %p127
    %s129 = ssub.s32 %s18, %s30
    %s130 = ssub.s32 %s19, %s26
    %s131 = sor.u32 %s129, %s130
    %p132 = scmp.eq.s32.totalorder %s131, 0
    %s134 = sadd.s32 %s133, 1
    %s135 = scalar_select %p132, %s133, %s134
    %p138 = pneg %p132
    %p139 = scmp.eq.s32.totalorder %s11, 3
    %p140 = por %p138, %p139
    %p141 = scmp.ne.s32.totalorder %s133, %s136
    %p142 = scmp.eq.s32.totalorder %s11, 0
    %p143 = por %p141, %p142
    %p144 = scmp.ne.s32.totalorder %s133, %s136
    %p145 = scmp.eq.s32.totalorder %s16, 3
    %p146 = por %p144, %p145
    %p147 = scmp.ne.s32.totalorder %s136, %s137
    %p148 = scmp.eq.s32.totalorder %s16, 0
    %p149 = por %p147, %p148
    %p150 = scmp.ne.s32.totalorder %s136, %s137
    %p151 = scmp.eq.s32.totalorder %s17, 3
    %p152 = por %p150, %p151
    %p154 = scmp.ne.s32.totalorder %s137, %s153
    %p155 = scmp.eq.s32.totalorder %s17, 0
    %p156 = por %p154, %p155
    %p157 = scmp.le.s32.totalorder 1, %s11
    %p158 = scmp.lt.s32.totalorder %s11, 5
    %p159 = pnand %p157, %p158
    %p160 = pneg %p159
    // Predicated region
    $region9: #{unet_layer_forward.3} parent=5 // pred_check
      _
    $region10: #{unet_layer_forward.3} parent=5 // pred_check_branch
      %162 = sbr.rel (%p159) target = $region12
    $region11: #{unet_layer_forward.3} parent=5 // pred_region
      %s163 = ssub.s32 %s11, 1
      // Predicated region
      $region13: #{unet_layer_forward.3} parent=11 // pred_check
        %p164 = pneg %p72
      $region14: #{unet_layer_forward.3} parent=11 // pred_check_branch
        %166 = sbr.rel (%p164) target = $region16
      $region15: #{unet_layer_forward.3} parent=11 // pred_region
        _
      $region16: #{unet_layer_forward.3} parent=11 // pred_fallthru
        _
      // Predicated region
      $region17: #{unet_layer_forward.3} parent=11 // pred_check
        %p167 = pneg %p93
      $region18: #{unet_layer_forward.3} parent=11 // pred_check_branch
        %169 = sbr.rel (%p167) target = $region20
      $region19: #{unet_layer_forward.3} parent=11 // pred_region
        _
      $region20: #{unet_layer_forward.3} parent=11 // pred_fallthru
        _
    $region12: #{unet_layer_forward.3} parent=5 // pred_fallthru
      _
    %p170 = scmp.lt.s32.totalorder %s11, 4
    // Predicated region
    $region21: #{unet_layer_forward.3} parent=5 // pred_check
      %p171 = pneg %p170
    $region22: #{unet_layer_forward.3} parent=5 // pred_check_branch
      %173 = sbr.rel (%p171) target = $region24
    $region23: #{unet_layer_forward.3} parent=5 // pred_region
      // Predicated region
      $region25: #{unet_layer_forward.3} parent=23 // pred_check
        %p174 = pneg %p45
      $region26: #{unet_layer_forward.3} parent=23 // pred_check_branch
        %176 = sbr.rel (%p174) target = $region28
      $region27: #{unet_layer_forward.3} parent=23 // pred_region
        %p177 = scmp.lt.s32.totalorder %s18, 1
        %s178 = scalar_select %p177, %s18, 1
        %p179 = scmp.lt.s32.totalorder %s19, 1
        %s180 = scalar_select %p179, %s19, 1
        %s181 = smul.addr %s180, 12
        %s182 = smul.addr %s178, 24
        %s183 = sadd.s32 %s181, %s182
        %s184 = smul.addr %s183, 8
        %s185 = scalar_lea.vmem %s0, %s184
      $region28: #{unet_layer_forward.3} parent=23 // pred_fallthru
        _
    $region24: #{unet_layer_forward.3} parent=5 // pred_fallthru
      _
    %p186 = scmp.le.s32.totalorder 1, %s11
    %p187 = scmp.lt.s32.totalorder %s11, 5
    %p188 = pnand %p186, %p187
    %p189 = pneg %p188
    // Predicated region
    $region29: #{unet_layer_forward.3} parent=5 // pred_check
      _
    $region30: #{unet_layer_forward.3} parent=5 // pred_check_branch
      %191 = sbr.rel (%p188) target = $region32
    $region31: #{unet_layer_forward.3} parent=5 // pred_region
      %s192 = ssub.s32 %s11, 1
      %p193 = scmp.lt.s32.totalorder %s20, 1
      %s194 = scalar_select %p193, %s20, 1
      %p195 = scmp.lt.s32.totalorder %s21, 1
      %s196 = scalar_select %p195, %s21, 1
      %s197 = smul.addr %s196, 12
      %s198 = smul.addr %s194, 24
      %s199 = sadd.s32 %s197, %s198
      %s200 = smul.addr %s199, 8
      %s201 = scalar_lea.vmem %s0, %s200
      %p202 = pneg %p51
      %p203 = pneg %p48
      %p204 = pneg %p72
      %p205 = pneg %p69
      %p206 = pneg %p93
      %p207 = pneg %p90
      %p208 = pneg %p121
      %p209 = pneg %p118
      %s210 = smul.u32 4, %s21
      %p211 = scmp.lt.s32.totalorder %s20, 1
      %s212 = scalar_select %p211, %s20, 1
      %p213 = scmp.lt.s32.totalorder %s210, 7
      %s214 = scalar_select %p213, %s210, 7
      %s215 = smul.addr %s212, 8
      %s216 = sadd.s32 %s214, %s215
      %s217 = smul.addr %s216, 8
      %s218 = scalar_lea.vmem %s3, %s217
      %p219 = pneg %p149
      %p220 = pneg %p146
      %p221 = scmp.lt.s32.totalorder %s20, 1
      %s222 = scalar_select %p221, %s20, 1
      %p223 = scmp.lt.s32.totalorder %s21, 1
      %s224 = scalar_select %p223, %s21, 1
      %s225 = smul.addr %s222, 2
      %s226 = sadd.s32 %s224, %s225
      %s227 = smul.addr %s226, 2
      %s228 = scalar_lea.vmem %s4, %s227
      %p229 = scmp.lt.s32.totalorder %s20, 1
      %s230 = scalar_select %p229, %s20, 1
      %p231 = scmp.lt.s32.totalorder %s21, 1
      %s232 = scalar_select %p231, %s21, 1
      %s233 = smul.addr %s232, 12
      %s234 = smul.addr %s230, 24
      %s235 = sadd.s32 %s233, %s234
      %s236 = smul.addr %s235, 8
      %s237 = scalar_lea.vmem %s0, %s236
      %s238 = smul.u32 4, %s21
      %p239 = scmp.lt.s32.totalorder %s20, 1
      %s240 = scalar_select %p239, %s20, 1
      %p241 = scmp.lt.s32.totalorder %s238, 7
      %s242 = scalar_select %p241, %s238, 7
      %s243 = smul.addr %s240, 8
      %s244 = sadd.s32 %s242, %s243
      %s245 = smul.addr %s244, 8
      %s246 = scalar_lea.vmem %s3, %s245
      %s247 = smul.u32 4, %s21
      %p248 = scmp.lt.s32.totalorder %s20, 1
      %s249 = scalar_select %p248, %s20, 1
      %p250 = scmp.lt.s32.totalorder %s21, 1
      %s251 = scalar_select %p250, %s21, 1
      %s252 = smul.addr %s249, 2
      %s253 = sadd.s32 %s251, %s252
      %s254 = smul.addr %s253, 2
      %s255 = scalar_lea.vmem %s4, %s254
      %v256 = vld [vmem:[%s237] sm:$0xff]
      %v257 = vld [vmem:[%s237 + $0x8] sm:$0x3]
      %v258 = vld [vmem:[%s237 + $0x10] sm:$0xff]
      %v259 = vld [vmem:[%s237 + $0x18] sm:$0x3]
      %v260 = vld [vmem:[%s237 + $0x20] sm:$0xff]
      %v261 = vld [vmem:[%s237 + $0x28] sm:$0x3]
      %v262 = vld [vmem:[%s237 + $0x30] sm:$0xff]
      %v263 = vld [vmem:[%s237 + $0x38] sm:$0x3]
      %v264 = vld [vmem:[%s237 + $0x40] sm:$0xff]
      %v265 = vld [vmem:[%s237 + $0x48] sm:$0x3]
      %v266 = vld [vmem:[%s237 + $0x50] sm:$0xff]
      %v267 = vld [vmem:[%s237 + $0x58] sm:$0x3]
      %v268 = vld [vmem:[%s1] sm:$0xff]
      %vm277 = vcmask 1046528
      %v278 = vrot.slane %v256, 1
      %v279 = vrot.slane %v257, 1
      %v280 = vsel %vm277, %v278, %v279
      %v281 = vrot.slane %v258, 1
      %v282 = vrot.slane %v259, 1
      %v283 = vsel %vm277, %v281, %v282
      %v284 = vrot.slane %v260, 1
      %v285 = vrot.slane %v261, 1
      %v286 = vsel %vm277, %v284, %v285
      %v287 = vrot.slane %v262, 1
      %v288 = vrot.slane %v263, 1
      %v289 = vsel %vm277, %v287, %v288
      %s290 = scalar_lea.vmem %s1, 8
      %v291 = vld [vmem:[%s290] sm:$0xff]
      %vm292 = vcmask 64512
      %v293 = vsel %vm292, %v280, 0
      %v295 = vsel %vm292, %v283, 0
      %v297 = vsel %vm292, %v286, 0
      %v299 = vsel %vm292, %v289, 0
      %301 = vmatprep.subr.mxu0 0.0
      %302 = vmatpush1.msra.mxu0 %v291
      %303 = vmatprep.subr.mxu0 0.0
      %304 = vmatpush1.msra.mxu0 0.0
      %305 = vmatprep.subr.mxu0 0.0
      %306 = vmatpush1.msra.mxu0 0.0
      %307 = vmatprep.subr.mxu0 0.0
      %308 = vmatpush1.msra.mxu0 0.0
      %309 = vmatprep.subr.mxu0 0.0
      %310 = vmatpush1.msra.mxu0 0.0
      %311 = vmatprep.subr.mxu0 0.0
      %312 = vmatpush1.msra.mxu0 0.0
      %313 = vmatprep.subr.mxu0 0.0
      %314 = vmatpush1.msra.mxu0 0.0
      %315 = vmatprep.subr.mxu0 0.0
      %316 = vmatpush1.msra.mxu0 0.0
      %317 = vmatprep.subr.mxu0 0.0
      %318 = vmatpush1.msra.mxu0 0.0
      %319 = vmatprep.subr.mxu0 0.0
      %320 = vmatpush1.msra.mxu0 0.0
      %321 = vmatprep.subr.mxu0 0.0
      %322 = vmatpush1.msra.mxu0 0.0
      %323 = vmatprep.subr.mxu0 0.0
      %324 = vmatpush1.msra.mxu0 0.0
      %325 = vmatprep.subr.mxu0 0.0
      %326 = vmatpush1.msra.mxu0 0.0
      %327 = vmatprep.subr.mxu0 0.0
      %328 = vmatpush1.msra.mxu0 0.0
      %329 = vmatprep.subr.mxu0 0.0
      %330 = vmatpush1.msra.mxu0 0.0
      %331 = vmatprep.subr.mxu0 0.0
      %332 = vmatpush1.msra.mxu0 0.0
      %333 = vmatprep.subr.mxu0 0.0
      %334 = vmatpush1.msra.mxu0 0.0
      %335 = vmatprep.subr.mxu0 0.0
      %336 = vmatpush1.msra.mxu0 0.0
      %337 = vmatprep.subr.mxu0 0.0
      %338 = vmatpush1.msra.mxu0 0.0
      %339 = vmatprep.subr.mxu0 0.0
      %340 = vmatpush1.msra.mxu0 0.0
      %341 = vmatprep.subr.mxu0 0.0
      %342 = vmatpush1.msra.mxu0 0.0
      %343 = vmatprep.subr.mxu0 0.0
      %344 = vmatpush1.msra.mxu0 0.0
      %345 = vmatprep.subr.mxu0 0.0
      %346 = vmatpush1.msra.mxu0 0.0
      %347 = vmatprep.subr.mxu0 0.0
      %348 = vmatpush1.msra.mxu0 0.0
      %349 = vmatprep.subr.mxu0 0.0
      %350 = vmatpush1.msra.mxu0 0.0
      %351 = vmatprep.subr.mxu0 0.0
      %352 = vmatpush1.msra.mxu0 0.0
      %353 = vmatprep.subr.mxu0 0.0
      %354 = vmatpush1.msra.mxu0 0.0
      %355 = vmatprep.subr.mxu0 0.0
      %356 = vmatpush1.msra.mxu0 0.0
      %357 = vmatprep.subr.mxu0 0.0
      %358 = vmatpush1.msra.mxu0 0.0
      %359 = vmatprep.subr.mxu0 0.0
      %360 = vmatpush1.msra.mxu0 0.0
      %361 = vmatprep.subr.mxu0 0.0
      %362 = vmatpush1.msra.mxu0 0.0
      %363 = vmatprep.subr.mxu0 0.0
      %364 = vmatpush1.msra.mxu0 0.0
      %365 = vmatprep.mubr.f32.mxu0 0.0
      %366 = vmatmul.mubr.f32.gmra.mrb[0].mxu0 %v293
      %v367 = vpop.f32.mrb[0].mxu0
      %v368 = vadd.f32 0.0, %v367
      %v369 = vpop.f32.mrb[0].mxu0
      %370 = vmatprep.mubr.f32.mxu0 0.0
      %371 = vmatmul.mubr.f32.gmra.mrb[0].mxu0 %v295
      %v372 = vpop.f32.mrb[0].mxu0
      %v373 = vadd.f32 0.0, %v372
      %v374 = vpop.f32.mrb[0].mxu0
      %375 = vmatprep.mubr.f32.mxu0 0.0
      %376 = vmatmul.mubr.f32.gmra.mrb[0].mxu0 %v297
      %v377 = vpop.f32.mrb[0].mxu0
      %v378 = vadd.f32 0.0, %v377
      %v379 = vpop.f32.mrb[0].mxu0
      %380 = vmatprep.mubr.f32.mxu0 0.0
      %381 = vmatmul.mubr.f32.gmra.mrb[0].mxu0 %v299
      %v382 = vpop.f32.mrb[0].mxu0
      %v383 = vadd.f32 0.0, %v382
      %v384 = vpop.f32.mrb[0].mxu0
      %385 = vdwg.mxu0
      %v386 = vsel %vm292, %v256, 0
      %v388 = vsel %vm292, %v258, 0
      %v390 = vsel %vm292, %v260, 0
      %v392 = vsel %vm292, %v262, 0
      %394 = vmatprep.subr.mxu0 0.0
      %395 = vmatpush1.msra.mxu0 %v268
      %396 = vmatprep.subr.mxu0 0.0
      %397 = vmatpush1.msra.mxu0 0.0
      %398 = vmatprep.subr.mxu0 0.0
      %399 = vmatpush1.msra.mxu0 0.0
      %400 = vmatprep.subr.mxu0 0.0
      %401 = vmatpush1.msra.mxu0 0.0
      %402 = vmatprep.subr.mxu0 0.0
      %403 = vmatpush1.msra.mxu0 0.0
      %404 = vmatprep.subr.mxu0 0.0
      %405 = vmatpush1.msra.mxu0 0.0
      %406 = vmatprep.subr.mxu0 0.0
      %407 = vmatpush1.msra.mxu0 0.0
      %408 = vmatprep.subr.mxu0 0.0
      %409 = vmatpush1.msra.mxu0 0.0
      %410 = vmatprep.subr.mxu0 0.0
      %411 = vmatpush1.msra.mxu0 0.0
      %412 = vmatprep.subr.mxu0 0.0
      %413 = vmatpush1.msra.mxu0 0.0
      %414 = vmatprep.subr.mxu0 0.0
      %415 = vmatpush1.msra.mxu0 0.0
      %416 = vmatprep.subr.mxu0 0.0
      %417 = vmatpush1.msra.mxu0 0.0
      %418 = vmatprep.subr.mxu0 0.0
      %419 = vmatpush1.msra.mxu0 0.0
      %420 = vmatprep.subr.mxu0 0.0
      %421 = vmatpush1.msra.mxu0 0.0
      %422 = vmatprep.subr.mxu0 0.0
      %423 = vmatpush1.msra.mxu0 0.0
      %424 = vmatprep.subr.mxu0 0.0
      %425 = vmatpush1.msra.mxu0 0.0
      %426 = vmatprep.subr.mxu0 0.0
      %427 = vmatpush1.msra.mxu0 0.0
      %428 = vmatprep.subr.mxu0 0.0
      %429 = vmatpush1.msra.mxu0 0.0
      %430 = vmatprep.subr.mxu0 0.0
      %431 = vmatpush1.msra.mxu0 0.0
      %432 = vmatprep.subr.mxu0 0.0
      %433 = vmatpush1.msra.mxu0 0.0
      %434 = vmatprep.subr.mxu0 0.0
      %435 = vmatpush1.msra.mxu0 0.0
      %436 = vmatprep.subr.mxu0 0.0
      %437 = vmatpush1.msra.mxu0 0.0
      %438 = vmatprep.subr.mxu0 0.0
      %439 = vmatpush1.msra.mxu0 0.0
      %440 = vmatprep.subr.mxu0 0.0
      %441 = vmatpush1.msra.mxu0 0.0
      %442 = vmatprep.subr.mxu0 0.0
      %443 = vmatpush1.msra.mxu0 0.0
      %444 = vmatprep.subr.mxu0 0.0
      %445 = vmatpush1.msra.mxu0 0.0
      %446 = vmatprep.subr.mxu0 0.0
      %447 = vmatpush1.msra.mxu0 0.0
      %448 = vmatprep.subr.mxu0 0.0
      %449 = vmatpush1.msra.mxu0 0.0
      %450 = vmatprep.subr.mxu0 0.0
      %451 = vmatpush1.msra.mxu0 0.0
      %452 = vmatprep.subr.mxu0 0.0
      %453 = vmatpush1.msra.mxu0 0.0
      %454 = vmatprep.subr.mxu0 0.0
      %455 = vmatpush1.msra.mxu0 0.0
      %456 = vmatprep.subr.mxu0 0.0
      %457 = vmatpush1.msra.mxu0 0.0
      %458 = vmatprep.mubr.f32.mxu0 0.0
      %459 = vmatmul.mubr.f32.gmra.mrb[0].mxu0 %v386
      %v460 = vpop.f32.mrb[0].mxu0
      %v461 = vadd.f32 %v368, %v460
      %v462 = vpop.f32.mrb[0].mxu0
      %463 = vmatprep.mubr.f32.mxu0 0.0
      %464 = vmatmul.mubr.f32.gmra.mrb[0].mxu0 %v388
      %v465 = vpop.f32.mrb[0].mxu0
      %v466 = vadd.f32 %v373, %v465
      %v467 = vpop.f32.mrb[0].mxu0
      %468 = vmatprep.mubr.f32.mxu0 0.0
      %469 = vmatmul.mubr.f32.gmra.mrb[0].mxu0 %v390
      %v470 = vpop.f32.mrb[0].mxu0
      %v471 = vadd.f32 %v378, %v470
      %v472 = vpop.f32.mrb[0].mxu0
      %473 = vmatprep.mubr.f32.mxu0 0.0
      %474 = vmatmul.mubr.f32.gmra.mrb[0].mxu0 %v392
      %v475 = vpop.f32.mrb[0].mxu0
      %v476 = vadd.f32 %v383, %v475
      %v477 = vpop.f32.mrb[0].mxu0
      %478 = vdwg.mxu0
      %vm479 = vcmask 1045504
      %v480 = vrot.slane %v256, 2
      %v481 = vrot.slane %v257, 2
      %v482 = vsel %vm479, %v480, %v481
      %v483 = vrot.slane %v258, 2
      %v484 = vrot.slane %v259, 2
      %v485 = vsel %vm479, %v483, %v484
      %v486 = vrot.slane %v260, 2
      %v487 = vrot.slane %v261, 2
      %v488 = vsel %vm479, %v486, %v487
      %v489 = vrot.slane %v262, 2
      %v490 = vrot.slane %v263, 2
      %v491 = vsel %vm479, %v489, %v490
      %s492 = scalar_lea.vmem %s1, 16
      %v493 = vld [vmem:[%s492] sm:$0xff]
      %v494 = vsel %vm292, %v482, 0
      %v496 = vsel %vm292, %v485, 0
      %v498 = vsel %vm292, %v488, 0
      %v500 = vsel %vm292, %v491, 0
      %502 = vmatprep.subr.mxu0 0.0
      %503 = vmatpush1.msra.mxu0 %v493
      %504 = vmatprep.subr.mxu0 0.0
      %505 = vmatpush1.msra.mxu0 0.0
      %506 = vmatprep.subr.mxu0 0.0
      %507 = vmatpush1.msra.mxu0 0.0
      %508 = vmatprep.subr.mxu0 0.0
      %509 = vmatpush1.msra.mxu0 0.0
      %510 = vmatprep.subr.mxu0 0.0
      %511 = vmatpush1.msra.mxu0 0.0
      %512 = vmatprep.subr.mxu0 0.0
      %513 = vmatpush1.msra.mxu0 0.0
      %514 = vmatprep.subr.mxu0 0.0
      %515 = vmatpush1.msra.mxu0 0.0
      %516 = vmatprep.subr.mxu0 0.0
      %517 = vmatpush1.msra.mxu0 0.0
      %518 = vmatprep.subr.mxu0 0.0
      %519 = vmatpush1.msra.mxu0 0.0
      %520 = vmatprep.subr.mxu0 0.0
      %521 = vmatpush1.msra.mxu0 0.0
      %522 = vmatprep.subr.mxu0 0.0
      %523 = vmatpush1.msra.mxu0 0.0
      %524 = vmatprep.subr.mxu0 0.0
      %525 = vmatpush1.msra.mxu0 0.0
      %526 = vmatprep.subr.mxu0 0.0
      %527 = vmatpush1.msra.mxu0 0.0
      %528 = vmatprep.subr.mxu0 0.0
      %529 = vmatpush1.msra.mxu0 0.0
      %530 = vmatprep.subr.mxu0 0.0
      %531 = vmatpush1.msra.mxu0 0.0
      %532 = vmatprep.subr.mxu0 0.0
      %533 = vmatpush1.msra.mxu0 0.0
      %534 = vmatprep.subr.mxu0 0.0
      %535 = vmatpush1.msra.mxu0 0.0
      %536 = vmatprep.subr.mxu0 0.0
      %537 = vmatpush1.msra.mxu0 0.0
      %538 = vmatprep.subr.mxu0 0.0
      %539 = vmatpush1.msra.mxu0 0.0
      %540 = vmatprep.subr.mxu0 0.0
      %541 = vmatpush1.msra.mxu0 0.0
      %542 = vmatprep.subr.mxu0 0.0
      %543 = vmatpush1.msra.mxu0 0.0
      %544 = vmatprep.subr.mxu0 0.0
      %545 = vmatpush1.msra.mxu0 0.0
      %546 = vmatprep.subr.mxu0 0.0
      %547 = vmatpush1.msra.mxu0 0.0
      %548 = vmatprep.subr.mxu0 0.0
      %549 = vmatpush1.msra.mxu0 0.0
      %550 = vmatprep.subr.mxu0 0.0
      %551 = vmatpush1.msra.mxu0 0.0
      %552 = vmatprep.subr.mxu0 0.0
      %553 = vmatpush1.msra.mxu0 0.0
      %554 = vmatprep.subr.mxu0 0.0
      %555 = vmatpush1.msra.mxu0 0.0
      %556 = vmatprep.subr.mxu0 0.0
      %557 = vmatpush1.msra.mxu0 0.0
      %558 = vmatprep.subr.mxu0 0.0
      %559 = vmatpush1.msra.mxu0 0.0
      %560 = vmatprep.subr.mxu0 0.0
      %561 = vmatpush1.msra.mxu0 0.0
      %562 = vmatprep.subr.mxu0 0.0
      %563 = vmatpush1.msra.mxu0 0.0
      %564 = vmatprep.subr.mxu0 0.0
      %565 = vmatpush1.msra.mxu0 0.0
      %566 = vmatprep.mubr.f32.mxu0 0.0
      %567 = vmatmul.mubr.f32.gmra.mrb[0].mxu0 %v494
      %v568 = vpop.f32.mrb[0].mxu0
      %v569 = vadd.f32 0.0, %v568
      %v570 = vpop.f32.mrb[0].mxu0
      %571 = vmatprep.mubr.f32.mxu0 0.0
      %572 = vmatmul.mubr.f32.gmra.mrb[0].mxu0 %v496
      %v573 = vpop.f32.mrb[0].mxu0
      %v574 = vadd.f32 0.0, %v573
      %v575 = vpop.f32.mrb[0].mxu0
      %576 = vmatprep.mubr.f32.mxu0 0.0
      %577 = vmatmul.mubr.f32.gmra.mrb[0].mxu0 %v498
      %v578 = vpop.f32.mrb[0].mxu0
      %v579 = vadd.f32 0.0, %v578
      %v580 = vpop.f32.mrb[0].mxu0
      %581 = vmatprep.mubr.f32.mxu0 0.0
      %582 = vmatmul.mubr.f32.gmra.mrb[0].mxu0 %v500
      %v583 = vpop.f32.mrb[0].mxu0
      %v584 = vadd.f32 0.0, %v583
      %v585 = vpop.f32.mrb[0].mxu0
      %586 = vdwg.mxu0
      %v587 = vadd.f32 %v461, %v569
      %v588 = vadd.f32 %v466, %v574
      %v589 = vadd.f32 %v471, %v579
      %v590 = vadd.f32 %v476, %v584
      %s591 = scalar_lea.vmem %s1, 24
      %v592 = vld [vmem:[%s591] sm:$0xff]
      %v594 = vsel %vm292, %v264, 0
      %596 = vmatprep.subr.mxu0 0.0
      %597 = vmatpush1.msra.mxu0 %v592
      %598 = vmatprep.subr.mxu0 0.0
      %599 = vmatpush1.msra.mxu0 0.0
      %600 = vmatprep.subr.mxu0 0.0
      %601 = vmatpush1.msra.mxu0 0.0
      %602 = vmatprep.subr.mxu0 0.0
      %603 = vmatpush1.msra.mxu0 0.0
      %604 = vmatprep.subr.mxu0 0.0
      %605 = vmatpush1.msra.mxu0 0.0
      %606 = vmatprep.subr.mxu0 0.0
      %607 = vmatpush1.msra.mxu0 0.0
      %608 = vmatprep.subr.mxu0 0.0
      %609 = vmatpush1.msra.mxu0 0.0
      %610 = vmatprep.subr.mxu0 0.0
      %611 = vmatpush1.msra.mxu0 0.0
      %612 = vmatprep.subr.mxu0 0.0
      %613 = vmatpush1.msra.mxu0 0.0
      %614 = vmatprep.subr.mxu0 0.0
      %615 = vmatpush1.msra.mxu0 0.0
      %616 = vmatprep.subr.mxu0 0.0
      %617 = vmatpush1.msra.mxu0 0.0
      %618 = vmatprep.subr.mxu0 0.0
      %619 = vmatpush1.msra.mxu0 0.0
      %620 = vmatprep.subr.mxu0 0.0
      %621 = vmatpush1.msra.mxu0 0.0
      %622 = vmatprep.subr.mxu0 0.0
      %623 = vmatpush1.msra.mxu0 0.0
      %624 = vmatprep.subr.mxu0 0.0
      %625 = vmatpush1.msra.mxu0 0.0
      %626 = vmatprep.subr.mxu0 0.0
      %627 = vmatpush1.msra.mxu0 0.0
      %628 = vmatprep.subr.mxu0 0.0
      %629 = vmatpush1.msra.mxu0 0.0
      %630 = vmatprep.subr.mxu0 0.0
      %631 = vmatpush1.msra.mxu0 0.0
      %632 = vmatprep.subr.mxu0 0.0
      %633 = vmatpush1.msra.mxu0 0.0
      %634 = vmatprep.subr.mxu0 0.0
      %635 = vmatpush1.msra.mxu0 0.0
      %636 = vmatprep.subr.mxu0 0.0
      %637 = vmatpush1.msra.mxu0 0.0
      %638 = vmatprep.subr.mxu0 0.0
      %639 = vmatpush1.msra.mxu0 0.0
      %640 = vmatprep.subr.mxu0 0.0
      %641 = vmatpush1.msra.mxu0 0.0
      %642 = vmatprep.subr.mxu0 0.0
      %643 = vmatpush1.msra.mxu0 0.0
      %644 = vmatprep.subr.mxu0 0.0
      %645 = vmatpush1.msra.mxu0 0.0
      %646 = vmatprep.subr.mxu0 0.0
      %647 = vmatpush1.msra.mxu0 0.0
      %648 = vmatprep.subr.mxu0 0.0
      %649 = vmatpush1.msra.mxu0 0.0
      %650 = vmatprep.subr.mxu0 0.0
      %651 = vmatpush1.msra.mxu0 0.0
      %652 = vmatprep.subr.mxu0 0.0
      %653 = vmatpush1.msra.mxu0 0.0
      %654 = vmatprep.subr.mxu0 0.0
      %655 = vmatpush1.msra.mxu0 0.0
      %656 = vmatprep.subr.mxu0 0.0
      %657 = vmatpush1.msra.mxu0 0.0
      %658 = vmatprep.subr.mxu0 0.0
      %659 = vmatpush1.msra.mxu0 0.0
      %660 = vmatprep.mubr.f32.mxu0 0.0
      %661 = vmatmul.mubr.f32.gmra.mrb[0].mxu0 %v388
      %v662 = vpop.f32.mrb[0].mxu0
      %v663 = vadd.f32 0.0, %v662
      %v664 = vpop.f32.mrb[0].mxu0
      %665 = vmatprep.mubr.f32.mxu0 0.0
      %666 = vmatmul.mubr.f32.gmra.mrb[0].mxu0 %v390
      %v667 = vpop.f32.mrb[0].mxu0
      %v668 = vadd.f32 0.0, %v667
      %v669 = vpop.f32.mrb[0].mxu0
      %670 = vmatprep.mubr.f32.mxu0 0.0
      %671 = vmatmul.mubr.f32.gmra.mrb[0].mxu0 %v392
      %v672 = vpop.f32.mrb[0].mxu0
      %v673 = vadd.f32 0.0, %v672
      %v674 = vpop.f32.mrb[0].mxu0
      %675 = vmatprep.mubr.f32.mxu0 0.0
      %676 = vmatmul.mubr.f32.gmra.mrb[0].mxu0 %v594
      %v677 = vpop.f32.mrb[0].mxu0
      %v678 = vadd.f32 0.0, %v677
      %v679 = vpop.f32.mrb[0].mxu0
      %680 = vdwg.mxu0
      %v681 = vadd.f32 %v587, %v663
      %v682 = vadd.f32 %v588, %v668
      %v683 = vadd.f32 %v589, %v673
      %v684 = vadd.f32 %v590, %v678
      %v686 = vrot.slane %v264, 1
      %v687 = vrot.slane %v265, 1
      %v688 = vsel %vm277, %v686, %v687
      %s689 = scalar_lea.vmem %s1, 32
      %v690 = vld [vmem:[%s689] sm:$0xff]
      %v691 = vsel %vm292, %v688, 0
      %693 = vmatprep.subr.mxu0 0.0
      %694 = vmatpush1.msra.mxu0 %v690
      %695 = vmatprep.subr.mxu0 0.0
      %696 = vmatpush1.msra.mxu0 0.0
      %697 = vmatprep.subr.mxu0 0.0
      %698 = vmatpush1.msra.mxu0 0.0
      %699 = vmatprep.subr.mxu0 0.0
      %700 = vmatpush1.msra.mxu0 0.0
      %701 = vmatprep.subr.mxu0 0.0
      %702 = vmatpush1.msra.mxu0 0.0
      %703 = vmatprep.subr.mxu0 0.0
      %704 = vmatpush1.msra.mxu0 0.0
      %705 = vmatprep.subr.mxu0 0.0
      %706 = vmatpush1.msra.mxu0 0.0
      %707 = vmatprep.subr.mxu0 0.0
      %708 = vmatpush1.msra.mxu0 0.0
      %709 = vmatprep.subr.mxu0 0.0
      %710 = vmatpush1.msra.mxu0 0.0
      %711 = vmatprep.subr.mxu0 0.0
      %712 = vmatpush1.msra.mxu0 0.0
      %713 = vmatprep.subr.mxu0 0.0
      %714 = vmatpush1.msra.mxu0 0.0
      %715 = vmatprep.subr.mxu0 0.0
      %716 = vmatpush1.msra.mxu0 0.0
      %717 = vmatprep.subr.mxu0 0.0
      %718 = vmatpush1.msra.mxu0 0.0
      %719 = vmatprep.subr.mxu0 0.0
      %720 = vmatpush1.msra.mxu0 0.0
      %721 = vmatprep.subr.mxu0 0.0
      %722 = vmatpush1.msra.mxu0 0.0
      %723 = vmatprep.subr.mxu0 0.0
      %724 = vmatpush1.msra.mxu0 0.0
      %725 = vmatprep.subr.mxu0 0.0
      %726 = vmatpush1.msra.mxu0 0.0
      %727 = vmatprep.subr.mxu0 0.0
      %728 = vmatpush1.msra.mxu0 0.0
      %729 = vmatprep.subr.mxu0 0.0
      %730 = vmatpush1.msra.mxu0 0.0
      %731 = vmatprep.subr.mxu0 0.0
      %732 = vmatpush1.msra.mxu0 0.0
      %733 = vmatprep.subr.mxu0 0.0
      %734 = vmatpush1.msra.mxu0 0.0
      %735 = vmatprep.subr.mxu0 0.0
      %736 = vmatpush1.msra.mxu0 0.0
      %737 = vmatprep.subr.mxu0 0.0
      %738 = vmatpush1.msra.mxu0 0.0
      %739 = vmatprep.subr.mxu0 0.0
      %740 = vmatpush1.msra.mxu0 0.0
      %741 = vmatprep.subr.mxu0 0.0
      %742 = vmatpush1.msra.mxu0 0.0
      %743 = vmatprep.subr.mxu0 0.0
      %744 = vmatpush1.msra.mxu0 0.0
      %745 = vmatprep.subr.mxu0 0.0
      %746 = vmatpush1.msra.mxu0 0.0
      %747 = vmatprep.subr.mxu0 0.0
      %748 = vmatpush1.msra.mxu0 0.0
      %749 = vmatprep.subr.mxu0 0.0
      %750 = vmatpush1.msra.mxu0 0.0
      %751 = vmatprep.subr.mxu0 0.0
      %752 = vmatpush1.msra.mxu0 0.0
      %753 = vmatprep.subr.mxu0 0.0
      %754 = vmatpush1.msra.mxu0 0.0
      %755 = vmatprep.subr.mxu0 0.0
      %756 = vmatpush1.msra.mxu0 0.0
      %757 = vmatprep.mubr.f32.mxu0 0.0
      %758 = vmatmul.mubr.f32.gmra.mrb[0].mxu0 %v295
      %v759 = vpop.f32.mrb[0].mxu0
      %v760 = vadd.f32 0.0, %v759
      %v761 = vpop.f32.mrb[0].mxu0
      %762 = vmatprep.mubr.f32.mxu0 0.0
      %763 = vmatmul.mubr.f32.gmra.mrb[0].mxu0 %v297
      %v764 = vpop.f32.mrb[0].mxu0
      %v765 = vadd.f32 0.0, %v764
      %v766 = vpop.f32.mrb[0].mxu0
      %767 = vmatprep.mubr.f32.mxu0 0.0
      %768 = vmatmul.mubr.f32.gmra.mrb[0].mxu0 %v299
      %v769 = vpop.f32.mrb[0].mxu0
      %v770 = vadd.f32 0.0, %v769
      %v771 = vpop.f32.mrb[0].mxu0
      %772 = vmatprep.mubr.f32.mxu0 0.0
      %773 = vmatmul.mubr.f32.gmra.mrb[0].mxu0 %v691
      %v774 = vpop.f32.mrb[0].mxu0
      %v775 = vadd.f32 0.0, %v774
      %v776 = vpop.f32.mrb[0].mxu0
      %777 = vdwg.mxu0
      %v778 = vadd.f32 %v681, %v760
      %v779 = vadd.f32 %v682, %v765
      %v780 = vadd.f32 %v683, %v770
      %v781 = vadd.f32 %v684, %v775
      %v782 = vrot.slane %v264, 2
      %v783 = vrot.slane %v265, 2
      %v784 = vsel %vm479, %v782, %v783
      %s785 = scalar_lea.vmem %s1, 40
      %v786 = vld [vmem:[%s785] sm:$0xff]
      %v787 = vsel %vm292, %v784, 0
      %789 = vmatprep.subr.mxu0 0.0
      %790 = vmatpush1.msra.mxu0 %v786
      %791 = vmatprep.subr.mxu0 0.0
      %792 = vmatpush1.msra.mxu0 0.0
      %793 = vmatprep.subr.mxu0 0.0
      %794 = vmatpush1.msra.mxu0 0.0
      %795 = vmatprep.subr.mxu0 0.0
      %796 = vmatpush1.msra.mxu0 0.0
      %797 = vmatprep.subr.mxu0 0.0
      %798 = vmatpush1.msra.mxu0 0.0
      %799 = vmatprep.subr.mxu0 0.0
      %800 = vmatpush1.msra.mxu0 0.0
      %801 = vmatprep.subr.mxu0 0.0
      %802 = vmatpush1.msra.mxu0 0.0
      %803 = vmatprep.subr.mxu0 0.0
      %804 = vmatpush1.msra.mxu0 0.0
      %805 = vmatprep.subr.mxu0 0.0
      %806 = vmatpush1.msra.mxu0 0.0
      %807 = vmatprep.subr.mxu0 0.0
      %808 = vmatpush1.msra.mxu0 0.0
      %809 = vmatprep.subr.mxu0 0.0
      %810 = vmatpush1.msra.mxu0 0.0
      %811 = vmatprep.subr.mxu0 0.0
      %812 = vmatpush1.msra.mxu0 0.0
      %813 = vmatprep.subr.mxu0 0.0
      %814 = vmatpush1.msra.mxu0 0.0
      %815 = vmatprep.subr.mxu0 0.0
      %816 = vmatpush1.msra.mxu0 0.0
      %817 = vmatprep.subr.mxu0 0.0
      %818 = vmatpush1.msra.mxu0 0.0
      %819 = vmatprep.subr.mxu0 0.0
      %820 = vmatpush1.msra.mxu0 0.0
      %821 = vmatprep.subr.mxu0 0.0
      %822 = vmatpush1.msra.mxu0 0.0
      %823 = vmatprep.subr.mxu0 0.0
      %824 = vmatpush1.msra.mxu0 0.0
      %825 = vmatprep.subr.mxu0 0.0
      %826 = vmatpush1.msra.mxu0 0.0
      %827 = vmatprep.subr.mxu0 0.0
      %828 = vmatpush1.msra.mxu0 0.0
      %829 = vmatprep.subr.mxu0 0.0
      %830 = vmatpush1.msra.mxu0 0.0
      %831 = vmatprep.subr.mxu0 0.0
      %832 = vmatpush1.msra.mxu0 0.0
      %833 = vmatprep.subr.mxu0 0.0
      %834 = vmatpush1.msra.mxu0 0.0
      %835 = vmatprep.subr.mxu0 0.0
      %836 = vmatpush1.msra.mxu0 0.0
      %837 = vmatprep.subr.mxu0 0.0
      %838 = vmatpush1.msra.mxu0 0.0
      %839 = vmatprep.subr.mxu0 0.0
      %840 = vmatpush1.msra.mxu0 0.0
      %841 = vmatprep.subr.mxu0 0.0
      %842 = vmatpush1.msra.mxu0 0.0
      %843 = vmatprep.subr.mxu0 0.0
      %844 = vmatpush1.msra.mxu0 0.0
      %845 = vmatprep.subr.mxu0 0.0
      %846 = vmatpush1.msra.mxu0 0.0
      %847 = vmatprep.subr.mxu0 0.0
      %848 = vmatpush1.msra.mxu0 0.0
      %849 = vmatprep.subr.mxu0 0.0
      %850 = vmatpush1.msra.mxu0 0.0
      %851 = vmatprep.subr.mxu0 0.0
      %852 = vmatpush1.msra.mxu0 0.0
      %853 = vmatprep.mubr.f32.mxu0 0.0
      %854 = vmatmul.mubr.f32.gmra.mrb[0].mxu0 %v496
      %v855 = vpop.f32.mrb[0].mxu0
      %v856 = vadd.f32 0.0, %v855
      %v857 = vpop.f32.mrb[0].mxu0
      %858 = vmatprep.mubr.f32.mxu0 0.0
      %859 = vmatmul.mubr.f32.gmra.mrb[0].mxu0 %v498
      %v860 = vpop.f32.mrb[0].mxu0
      %v861 = vadd.f32 0.0, %v860
      %v862 = vpop.f32.mrb[0].mxu0
      %863 = vmatprep.mubr.f32.mxu0 0.0
      %864 = vmatmul.mubr.f32.gmra.mrb[0].mxu0 %v500
      %v865 = vpop.f32.mrb[0].mxu0
      %v866 = vadd.f32 0.0, %v865
      %v867 = vpop.f32.mrb[0].mxu0
      %868 = vmatprep.mubr.f32.mxu0 0.0
      %869 = vmatmul.mubr.f32.gmra.mrb[0].mxu0 %v787
      %v870 = vpop.f32.mrb[0].mxu0
      %v871 = vadd.f32 0.0, %v870
      %v872 = vpop.f32.mrb[0].mxu0
      %873 = vdwg.mxu0
      %v874 = vadd.f32 %v778, %v856
      %v875 = vadd.f32 %v779, %v861
      %v876 = vadd.f32 %v780, %v866
      %v877 = vadd.f32 %v781, %v871
      %s878 = scalar_lea.vmem %s1, 48
      %v879 = vld [vmem:[%s878] sm:$0xff]
      %v881 = vsel %vm292, %v266, 0
      %883 = vmatprep.subr.mxu0 0.0
      %884 = vmatpush1.msra.mxu0 %v879
      %885 = vmatprep.subr.mxu0 0.0
      %886 = vmatpush1.msra.mxu0 0.0
      %887 = vmatprep.subr.mxu0 0.0
      %888 = vmatpush1.msra.mxu0 0.0
      %889 = vmatprep.subr.mxu0 0.0
      %890 = vmatpush1.msra.mxu0 0.0
      %891 = vmatprep.subr.mxu0 0.0
      %892 = vmatpush1.msra.mxu0 0.0
      %893 = vmatprep.subr.mxu0 0.0
      %894 = vmatpush1.msra.mxu0 0.0
      %895 = vmatprep.subr.mxu0 0.0
      %896 = vmatpush1.msra.mxu0 0.0
      %897 = vmatprep.subr.mxu0 0.0
      %898 = vmatpush1.msra.mxu0 0.0
      %899 = vmatprep.subr.mxu0 0.0
      %900 = vmatpush1.msra.mxu0 0.0
      %901 = vmatprep.subr.mxu0 0.0
      %902 = vmatpush1.msra.mxu0 0.0
      %903 = vmatprep.subr.mxu0 0.0
      %904 = vmatpush1.msra.mxu0 0.0
      %905 = vmatprep.subr.mxu0 0.0
      %906 = vmatpush1.msra.mxu0 0.0
      %907 = vmatprep.subr.mxu0 0.0
      %908 = vmatpush1.msra.mxu0 0.0
      %909 = vmatprep.subr.mxu0 0.0
      %910 = vmatpush1.msra.mxu0 0.0
      %911 = vmatprep.subr.mxu0 0.0
      %912 = vmatpush1.msra.mxu0 0.0
      %913 = vmatprep.subr.mxu0 0.0
      %914 = vmatpush1.msra.mxu0 0.0
      %915 = vmatprep.subr.mxu0 0.0
      %916 = vmatpush1.msra.mxu0 0.0
      %917 = vmatprep.subr.mxu0 0.0
      %918 = vmatpush1.msra.mxu0 0.0
      %919 = vmatprep.subr.mxu0 0.0
      %920 = vmatpush1.msra.mxu0 0.0
      %921 = vmatprep.subr.mxu0 0.0
      %922 = vmatpush1.msra.mxu0 0.0
      %923 = vmatprep.subr.mxu0 0.0
      %924 = vmatpush1.msra.mxu0 0.0
      %925 = vmatprep.subr.mxu0 0.0
      %926 = vmatpush1.msra.mxu0 0.0
      %927 = vmatprep.subr.mxu0 0.0
      %928 = vmatpush1.msra.mxu0 0.0
      %929 = vmatprep.subr.mxu0 0.0
      %930 = vmatpush1.msra.mxu0 0.0
      %931 = vmatprep.subr.mxu0 0.0
      %932 = vmatpush1.msra.mxu0 0.0
      %933 = vmatprep.subr.mxu0 0.0
      %934 = vmatpush1.msra.mxu0 0.0
      %935 = vmatprep.subr.mxu0 0.0
      %936 = vmatpush1.msra.mxu0 0.0
      %937 = vmatprep.subr.mxu0 0.0
      %938 = vmatpush1.msra.mxu0 0.0
      %939 = vmatprep.subr.mxu0 0.0
      %940 = vmatpush1.msra.mxu0 0.0
      %941 = vmatprep.subr.mxu0 0.0
      %942 = vmatpush1.msra.mxu0 0.0
      %943 = vmatprep.subr.mxu0 0.0
      %944 = vmatpush1.msra.mxu0 0.0
      %945 = vmatprep.subr.mxu0 0.0
      %946 = vmatpush1.msra.mxu0 0.0
      %947 = vmatprep.mubr.f32.mxu0 0.0
      %948 = vmatmul.mubr.f32.gmra.mrb[0].mxu0 %v390
      %v949 = vpop.f32.mrb[0].mxu0
      %v950 = vadd.f32 0.0, %v949
      %v951 = vpop.f32.mrb[0].mxu0
      %952 = vmatprep.mubr.f32.mxu0 0.0
      %953 = vmatmul.mubr.f32.gmra.mrb[0].mxu0 %v392
      %v954 = vpop.f32.mrb[0].mxu0
      %v955 = vadd.f32 0.0, %v954
      %v956 = vpop.f32.mrb[0].mxu0
      %957 = vmatprep.mubr.f32.mxu0 0.0
      %958 = vmatmul.mubr.f32.gmra.mrb[0].mxu0 %v594
      %v959 = vpop.f32.mrb[0].mxu0
      %v960 = vadd.f32 0.0, %v959
      %v961 = vpop.f32.mrb[0].mxu0
      %962 = vmatprep.mubr.f32.mxu0 0.0
      %963 = vmatmul.mubr.f32.gmra.mrb[0].mxu0 %v881
      %v964 = vpop.f32.mrb[0].mxu0
      %v965 = vadd.f32 0.0, %v964
      %v966 = vpop.f32.mrb[0].mxu0
      %967 = vdwg.mxu0
      %v968 = vadd.f32 %v874, %v950
      %v969 = vadd.f32 %v875, %v955
      %v970 = vadd.f32 %v876, %v960
      %v971 = vadd.f32 %v877, %v965
      %v973 = vrot.slane %v266, 1
      %v974 = vrot.slane %v267, 1
      %v975 = vsel %vm277, %v973, %v974
      %s976 = scalar_lea.vmem %s1, 56
      %v977 = vld [vmem:[%s976] sm:$0xff]
      %v978 = vsel %vm292, %v975, 0
      %980 = vmatprep.subr.mxu0 0.0
      %981 = vmatpush1.msra.mxu0 %v977
      %982 = vmatprep.subr.mxu0 0.0
      %983 = vmatpush1.msra.mxu0 0.0
      %984 = vmatprep.subr.mxu0 0.0
      %985 = vmatpush1.msra.mxu0 0.0
      %986 = vmatprep.subr.mxu0 0.0
      %987 = vmatpush1.msra.mxu0 0.0
      %988 = vmatprep.subr.mxu0 0.0
      %989 = vmatpush1.msra.mxu0 0.0
      %990 = vmatprep.subr.mxu0 0.0
      %991 = vmatpush1.msra.mxu0 0.0
      %992 = vmatprep.subr.mxu0 0.0
      %993 = vmatpush1.msra.mxu0 0.0
      %994 = vmatprep.subr.mxu0 0.0
      %995 = vmatpush1.msra.mxu0 0.0
      %996 = vmatprep.subr.mxu0 0.0
      %997 = vmatpush1.msra.mxu0 0.0
      %998 = vmatprep.subr.mxu0 0.0
      %999 = vmatpush1.msra.mxu0 0.0
      %1000 = vmatprep.subr.mxu0 0.0
      %1001 = vmatpush1.msra.mxu0 0.0
      %1002 = vmatprep.subr.mxu0 0.0
      %1003 = vmatpush1.msra.mxu0 0.0
      %1004 = vmatprep.subr.mxu0 0.0
      %1005 = vmatpush1.msra.mxu0 0.0
      %1006 = vmatprep.subr.mxu0 0.0
      %1007 = vmatpush1.msra.mxu0 0.0
      %1008 = vmatprep.subr.mxu0 0.0
      %1009 = vmatpush1.msra.mxu0 0.0
      %1010 = vmatprep.subr.mxu0 0.0
      %1011 = vmatpush1.msra.mxu0 0.0
      %1012 = vmatprep.subr.mxu0 0.0
      %1013 = vmatpush1.msra.mxu0 0.0
      %1014 = vmatprep.subr.mxu0 0.0
      %1015 = vmatpush1.msra.mxu0 0.0
      %1016 = vmatprep.subr.mxu0 0.0
      %1017 = vmatpush1.msra.mxu0 0.0
      %1018 = vmatprep.subr.mxu0 0.0
      %1019 = vmatpush1.msra.mxu0 0.0
      %1020 = vmatprep.subr.mxu0 0.0
      %1021 = vmatpush1.msra.mxu0 0.0
      %1022 = vmatprep.subr.mxu0 0.0
      %1023 = vmatpush1.msra.mxu0 0.0
      %1024 = vmatprep.subr.mxu0 0.0
      %1025 = vmatpush1.msra.mxu0 0.0
      %1026 = vmatprep.subr.mxu0 0.0
      %1027 = vmatpush1.msra.mxu0 0.0
      %1028 = vmatprep.subr.mxu0 0.0
      %1029 = vmatpush1.msra.mxu0 0.0
      %1030 = vmatprep.subr.mxu0 0.0
      %1031 = vmatpush1.msra.mxu0 0.0
      %1032 = vmatprep.subr.mxu0 0.0
      %1033 = vmatpush1.msra.mxu0 0.0
      %1034 = vmatprep.subr.mxu0 0.0
      %1035 = vmatpush1.msra.mxu0 0.0
      %1036 = vmatprep.subr.mxu0 0.0
      %1037 = vmatpush1.msra.mxu0 0.0
      %1038 = vmatprep.subr.mxu0 0.0
      %1039 = vmatpush1.msra.mxu0 0.0
      %1040 = vmatprep.subr.mxu0 0.0
      %1041 = vmatpush1.msra.mxu0 0.0
      %1042 = vmatprep.subr.mxu0 0.0
      %1043 = vmatpush1.msra.mxu0 0.0
      %1044 = vmatprep.mubr.f32.mxu0 0.0
      %1045 = vmatmul.mubr.f32.gmra.mrb[0].mxu0 %v297
      %v1046 = vpop.f32.mrb[0].mxu0
      %v1047 = vadd.f32 0.0, %v1046
      %v1048 = vpop.f32.mrb[0].mxu0
      %1049 = vmatprep.mubr.f32.mxu0 0.0
      %1050 = vmatmul.mubr.f32.gmra.mrb[0].mxu0 %v299
      %v1051 = vpop.f32.mrb[0].mxu0
      %v1052 = vadd.f32 0.0, %v1051
      %v1053 = vpop.f32.mrb[0].mxu0
      %1054 = vmatprep.mubr.f32.mxu0 0.0
      %1055 = vmatmul.mubr.f32.gmra.mrb[0].mxu0 %v691
      %v1056 = vpop.f32.mrb[0].mxu0
      %v1057 = vadd.f32 0.0, %v1056
      %v1058 = vpop.f32.mrb[0].mxu0
      %1059 = vmatprep.mubr.f32.mxu0 0.0
      %1060 = vmatmul.mubr.f32.gmra.mrb[0].mxu0 %v978
      %v1061 = vpop.f32.mrb[0].mxu0
      %v1062 = vadd.f32 0.0, %v1061
      %v1063 = vpop.f32.mrb[0].mxu0
      %1064 = vdwg.mxu0
      %v1065 = vadd.f32 %v968, %v1047
      %v1066 = vadd.f32 %v969, %v1052
      %v1067 = vadd.f32 %v970, %v1057
      %v1068 = vadd.f32 %v971, %v1062
      %v1069 = vrot.slane %v266, 2
      %v1070 = vrot.slane %v267, 2
      %v1071 = vsel %vm479, %v1069, %v1070
      %s1072 = scalar_lea.vmem %s1, 64
      %v1073 = vld [vmem:[%s1072] sm:$0xff]
      %v1074 = vsel %vm292, %v1071, 0
      %1076 = vmatprep.subr.mxu0 0.0
      %1077 = vmatpush1.msra.mxu0 %v1073
      %1078 = vmatprep.subr.mxu0 0.0
      %1079 = vmatpush1.msra.mxu0 0.0
      %1080 = vmatprep.subr.mxu0 0.0
      %1081 = vmatpush1.msra.mxu0 0.0
      %1082 = vmatprep.subr.mxu0 0.0
      %1083 = vmatpush1.msra.mxu0 0.0
      %1084 = vmatprep.subr.mxu0 0.0
      %1085 = vmatpush1.msra.mxu0 0.0
      %1086 = vmatprep.subr.mxu0 0.0
      %1087 = vmatpush1.msra.mxu0 0.0
      %1088 = vmatprep.subr.mxu0 0.0
      %1089 = vmatpush1.msra.mxu0 0.0
      %1090 = vmatprep.subr.mxu0 0.0
      %1091 = vmatpush1.msra.mxu0 0.0
      %1092 = vmatprep.subr.mxu0 0.0
      %1093 = vmatpush1.msra.mxu0 0.0
      %1094 = vmatprep.subr.mxu0 0.0
      %1095 = vmatpush1.msra.mxu0 0.0
      %1096 = vmatprep.subr.mxu0 0.0
      %1097 = vmatpush1.msra.mxu0 0.0
      %1098 = vmatprep.subr.mxu0 0.0
      %1099 = vmatpush1.msra.mxu0 0.0
      %1100 = vmatprep.subr.mxu0 0.0
      %1101 = vmatpush1.msra.mxu0 0.0
      %1102 = vmatprep.subr.mxu0 0.0
      %1103 = vmatpush1.msra.mxu0 0.0
      %1104 = vmatprep.subr.mxu0 0.0
      %1105 = vmatpush1.msra.mxu0 0.0
      %1106 = vmatprep.subr.mxu0 0.0
      %1107 = vmatpush1.msra.mxu0 0.0
      %1108 = vmatprep.subr.mxu0 0.0
      %1109 = vmatpush1.msra.mxu0 0.0
      %1110 = vmatprep.subr.mxu0 0.0
      %1111 = vmatpush1.msra.mxu0 0.0
      %1112 = vmatprep.subr.mxu0 0.0
      %1113 = vmatpush1.msra.mxu0 0.0
      %1114 = vmatprep.subr.mxu0 0.0
      %1115 = vmatpush1.msra.mxu0 0.0
      %1116 = vmatprep.subr.mxu0 0.0
      %1117 = vmatpush1.msra.mxu0 0.0
      %1118 = vmatprep.subr.mxu0 0.0
      %1119 = vmatpush1.msra.mxu0 0.0
      %1120 = vmatprep.subr.mxu0 0.0
      %1121 = vmatpush1.msra.mxu0 0.0
      %1122 = vmatprep.subr.mxu0 0.0
      %1123 = vmatpush1.msra.mxu0 0.0
      %1124 = vmatprep.subr.mxu0 0.0
      %1125 = vmatpush1.msra.mxu0 0.0
      %1126 = vmatprep.subr.mxu0 0.0
      %1127 = vmatpush1.msra.mxu0 0.0
      %1128 = vmatprep.subr.mxu0 0.0
      %1129 = vmatpush1.msra.mxu0 0.0
      %1130 = vmatprep.subr.mxu0 0.0
      %1131 = vmatpush1.msra.mxu0 0.0
      %1132 = vmatprep.subr.mxu0 0.0
      %1133 = vmatpush1.msra.mxu0 0.0
      %1134 = vmatprep.subr.mxu0 0.0
      %1135 = vmatpush1.msra.mxu0 0.0
      %1136 = vmatprep.subr.mxu0 0.0
      %1137 = vmatpush1.msra.mxu0 0.0
      %1138 = vmatprep.subr.mxu0 0.0
      %1139 = vmatpush1.msra.mxu0 0.0
      %1140 = vmatprep.mubr.f32.mxu0 0.0
      %1141 = vmatmul.mubr.f32.gmra.mrb[0].mxu0 %v498
      %v1142 = vpop.f32.mrb[0].mxu0
      %v1143 = vadd.f32 0.0, %v1142
      %v1144 = vpop.f32.mrb[0].mxu0
      %1145 = vmatprep.mubr.f32.mxu0 0.0
      %1146 = vmatmul.mubr.f32.gmra.mrb[0].mxu0 %v500
      %v1147 = vpop.f32.mrb[0].mxu0
      %v1148 = vadd.f32 0.0, %v1147
      %v1149 = vpop.f32.mrb[0].mxu0
      %1150 = vmatprep.mubr.f32.mxu0 0.0
      %1151 = vmatmul.mubr.f32.gmra.mrb[0].mxu0 %v787
      %v1152 = vpop.f32.mrb[0].mxu0
      %v1153 = vadd.f32 0.0, %v1152
      %v1154 = vpop.f32.mrb[0].mxu0
      %1155 = vmatprep.mubr.f32.mxu0 0.0
      %1156 = vmatmul.mubr.f32.gmra.mrb[0].mxu0 %v1074
      %v1157 = vpop.f32.mrb[0].mxu0
      %v1158 = vadd.f32 0.0, %v1157
      %v1159 = vpop.f32.mrb[0].mxu0
      %1160 = vdwg.mxu0
      %v1161 = vadd.f32 %v1065, %v1143
      %v1162 = vadd.f32 %v1066, %v1148
      %v1163 = vadd.f32 %v1067, %v1153
      %v1164 = vadd.f32 %v1068, %v1158
      %v1165 = vld [vmem:[%s2] sm:$0x1]
      %v1167 = vlaneseq
      %v1168 = vshrl.u32 %v1167, 7
      %v1169 = vsub.s32 0, %v1168
      %v1170 = vrot.slane %v1165, %v1169
      %v1172 = vadd.f32 %v1161, %v1170
      %v1173 = vadd.f32 %v1162, %v1170
      %v1174 = vadd.f32 %v1163, %v1170
      %v1175 = vadd.f32 %v1164, %v1170
      %vm1176 = vcmask 261120
      %v1178 = vsel %vm1176, 1.0, 0
      %1180 = vmatprep.subr.mxu0 0.0
      %1181 = vmatpush1.msra.mxu0 %v1172
      %1182 = vmatprep.subr.mxu0 0.0
      %1183 = vmatpush1.msra.mxu0 %v1173
      %1184 = vmatprep.subr.mxu0 0.0
      %1185 = vmatpush1.msra.mxu0 %v1174
      %1186 = vmatprep.subr.mxu0 0.0
      %1187 = vmatpush1.msra.mxu0 %v1175
      %1188 = vmatprep.subr.mxu0 0.0
      %1189 = vmatpush1.msra.mxu0 0.0
      %1190 = vmatprep.subr.mxu0 0.0
      %1191 = vmatpush1.msra.mxu0 0.0
      %1192 = vmatprep.subr.mxu0 0.0
      %1193 = vmatpush1.msra.mxu0 0.0
      %1194 = vmatprep.subr.mxu0 0.0
      %1195 = vmatpush1.msra.mxu0 0.0
      %1196 = vmatprep.subr.mxu0 0.0
      %1197 = vmatpush1.msra.mxu0 0.0
      %1198 = vmatprep.subr.mxu0 0.0
      %1199 = vmatpush1.msra.mxu0 0.0
      %1200 = vmatprep.subr.mxu0 0.0
      %1201 = vmatpush1.msra.mxu0 0.0
      %1202 = vmatprep.subr.mxu0 0.0
      %1203 = vmatpush1.msra.mxu0 0.0
      %1204 = vmatprep.subr.mxu0 0.0
      %1205 = vmatpush1.msra.mxu0 0.0
      %1206 = vmatprep.subr.mxu0 0.0
      %1207 = vmatpush1.msra.mxu0 0.0
      %1208 = vmatprep.subr.mxu0 0.0
      %1209 = vmatpush1.msra.mxu0 0.0
      %1210 = vmatprep.subr.mxu0 0.0
      %1211 = vmatpush1.msra.mxu0 0.0
      %1212 = vmatprep.subr.mxu0 0.0
      %1213 = vmatpush1.msra.mxu0 0.0
      %1214 = vmatprep.subr.mxu0 0.0
      %1215 = vmatpush1.msra.mxu0 0.0
      %1216 = vmatprep.subr.mxu0 0.0
      %1217 = vmatpush1.msra.mxu0 0.0
      %1218 = vmatprep.subr.mxu0 0.0
      %1219 = vmatpush1.msra.mxu0 0.0
      %1220 = vmatprep.subr.mxu0 0.0
      %1221 = vmatpush1.msra.mxu0 0.0
      %1222 = vmatprep.subr.mxu0 0.0
      %1223 = vmatpush1.msra.mxu0 0.0
      %1224 = vmatprep.subr.mxu0 0.0
      %1225 = vmatpush1.msra.mxu0 0.0
      %1226 = vmatprep.subr.mxu0 0.0
      %1227 = vmatpush1.msra.mxu0 0.0
      %1228 = vmatprep.subr.mxu0 0.0
      %1229 = vmatpush1.msra.mxu0 0.0
      %1230 = vmatprep.subr.mxu0 0.0
      %1231 = vmatpush1.msra.mxu0 0.0
      %1232 = vmatprep.subr.mxu0 0.0
      %1233 = vmatpush1.msra.mxu0 0.0
      %1234 = vmatprep.subr.mxu0 0.0
      %1235 = vmatpush1.msra.mxu0 0.0
      %1236 = vmatprep.subr.mxu0 0.0
      %1237 = vmatpush1.msra.mxu0 0.0
      %1238 = vmatprep.subr.mxu0 0.0
      %1239 = vmatpush1.msra.mxu0 0.0
      %1240 = vmatprep.subr.mxu0 0.0
      %1241 = vmatpush1.msra.mxu0 0.0
      %1242 = vmatprep.subr.mxu0 0.0
      %1243 = vmatpush1.msra.mxu0 0.0
      %1244 = vmatprep.mubr.f32.mxu0 0.0
      %1245 = vmatmul.mubr.f32.gmra.mrb[0].mxu0 %v1178
      %v1246 = vpop.f32.mrb[0].mxu0
      %v1247 = vadd.f32 0.0, %v1246
      %v1248 = vpop.f32.mrb[0].mxu0
      %1249 = vdwg.mxu0
      %v1250 = vmul.f32 %v1172, %v1172
      %v1251 = vmul.f32 %v1173, %v1173
      %v1252 = vmul.f32 %v1174, %v1174
      %v1253 = vmul.f32 %v1175, %v1175
      %1254 = vmatprep.subr.mxu0 0.0
      %1255 = vmatpush1.msra.mxu0 %v1250
      %1256 = vmatprep.subr.mxu0 0.0
      %1257 = vmatpush1.msra.mxu0 %v1251
      %1258 = vmatprep.subr.mxu0 0.0
      %1259 = vmatpush1.msra.mxu0 %v1252
      %1260 = vmatprep.subr.mxu0 0.0
      %1261 = vmatpush1.msra.mxu0 %v1253
      %1262 = vmatprep.subr.mxu0 0.0
      %1263 = vmatpush1.msra.mxu0 0.0
      %1264 = vmatprep.subr.mxu0 0.0
      %1265 = vmatpush1.msra.mxu0 0.0
      %1266 = vmatprep.subr.mxu0 0.0
      %1267 = vmatpush1.msra.mxu0 0.0
      %1268 = vmatprep.subr.mxu0 0.0
      %1269 = vmatpush1.msra.mxu0 0.0
      %1270 = vmatprep.subr.mxu0 0.0
      %1271 = vmatpush1.msra.mxu0 0.0
      %1272 = vmatprep.subr.mxu0 0.0
      %1273 = vmatpush1.msra.mxu0 0.0
      %1274 = vmatprep.subr.mxu0 0.0
      %1275 = vmatpush1.msra.mxu0 0.0
      %1276 = vmatprep.subr.mxu0 0.0
      %1277 = vmatpush1.msra.mxu0 0.0
      %1278 = vmatprep.subr.mxu0 0.0
      %1279 = vmatpush1.msra.mxu0 0.0
      %1280 = vmatprep.subr.mxu0 0.0
      %1281 = vmatpush1.msra.mxu0 0.0
      %1282 = vmatprep.subr.mxu0 0.0
      %1283 = vmatpush1.msra.mxu0 0.0
      %1284 = vmatprep.subr.mxu0 0.0
      %1285 = vmatpush1.msra.mxu0 0.0
      %1286 = vmatprep.subr.mxu0 0.0
      %1287 = vmatpush1.msra.mxu0 0.0
      %1288 = vmatprep.subr.mxu0 0.0
      %1289 = vmatpush1.msra.mxu0 0.0
      %1290 = vmatprep.subr.mxu0 0.0
      %1291 = vmatpush1.msra.mxu0 0.0
      %1292 = vmatprep.subr.mxu0 0.0
      %1293 = vmatpush1.msra.mxu0 0.0
      %1294 = vmatprep.subr.mxu0 0.0
      %1295 = vmatpush1.msra.mxu0 0.0
      %1296 = vmatprep.subr.mxu0 0.0
      %1297 = vmatpush1.msra.mxu0 0.0
      %1298 = vmatprep.subr.mxu0 0.0
      %1299 = vmatpush1.msra.mxu0 0.0
      %1300 = vmatprep.subr.mxu0 0.0
      %1301 = vmatpush1.msra.mxu0 0.0
      %1302 = vmatprep.subr.mxu0 0.0
      %1303 = vmatpush1.msra.mxu0 0.0
      %1304 = vmatprep.subr.mxu0 0.0
      %1305 = vmatpush1.msra.mxu0 0.0
      %1306 = vmatprep.subr.mxu0 0.0
      %1307 = vmatpush1.msra.mxu0 0.0
      %1308 = vmatprep.subr.mxu0 0.0
      %1309 = vmatpush1.msra.mxu0 0.0
      %1310 = vmatprep.subr.mxu0 0.0
      %1311 = vmatpush1.msra.mxu0 0.0
      %1312 = vmatprep.subr.mxu0 0.0
      %1313 = vmatpush1.msra.mxu0 0.0
      %1314 = vmatprep.subr.mxu0 0.0
      %1315 = vmatpush1.msra.mxu0 0.0
      %1316 = vmatprep.subr.mxu0 0.0
      %1317 = vmatpush1.msra.mxu0 0.0
      %1318 = vmatprep.mubr.f32.mxu0 0.0
      %1319 = vmatmul.mubr.f32.gmra.mrb[0].mxu0 %v1178
      %v1320 = vpop.f32.mrb[0].mxu0
      %v1321 = vadd.f32 0.0, %v1320
      %v1322 = vpop.f32.mrb[0].mxu0
      %1323 = vdwg.mxu0
      %v1325 = vrot.slane %v1321, 7
      %vm1327 = vcmask 1040384
      %v1328 = vsel %vm1327, %v1247, %v1325
      %vm1329 = vcmask 123904
      %1330 = vst.msk [vmem:[%s255] sm:$0x3] %vm1329, %v1328
      %vm1331 = vcmask 130048
      %1332 = vst.msk [vmem:[%s246] sm:$0xff] %vm1331, %v1172
      %1333 = vst.msk [vmem:[%s246 + $0x8] sm:$0xff] %vm1331, %v1173
      %1334 = vst.msk [vmem:[%s246 + $0x10] sm:$0xff] %vm1331, %v1174
      %1335 = vst.msk [vmem:[%s246 + $0x18] sm:$0xff] %vm1331, %v1175
      %s1336 = smul.u32 4, %s21
      %p1337 = scmp.lt.s32.totalorder %s20, 1
      %s1338 = scalar_select %p1337, %s20, 1
      %p1339 = scmp.lt.s32.totalorder %s1336, 7
      %s1340 = scalar_select %p1339, %s1336, 7
      %s1341 = smul.addr %s1338, 8
      %s1342 = sadd.s32 %s1340, %s1341
      %s1343 = smul.addr %s1342, 8
      %s1344 = scalar_lea.vmem %s3, %s1343
      %p1345 = scmp.lt.s32.totalorder %s20, 1
      %s1346 = scalar_select %p1345, %s20, 1
      %p1347 = scmp.lt.s32.totalorder %s21, 1
      %s1348 = scalar_select %p1347, %s21, 1
      %s1349 = smul.addr %s1346, 2
      %s1350 = sadd.s32 %s1348, %s1349
      %s1351 = smul.addr %s1350, 2
      %s1352 = scalar_lea.vmem %s4, %s1351
      // Predicated region
      $region33: #{unet_layer_forward.3} parent=31 // pred_check
        %p1353 = pneg %p118
      $region34: #{unet_layer_forward.3} parent=31 // pred_check_branch
        %1355 = sbr.rel (%p1353) target = $region36
      $region35: #{unet_layer_forward.3} parent=31 // pred_region
        %s1356 = smul.u32 4, %s21
      $region36: #{unet_layer_forward.3} parent=31 // pred_fallthru
        _
      // Predicated region
      $region37: #{unet_layer_forward.3} parent=31 // pred_check
        %p1357 = pneg %p146
      $region38: #{unet_layer_forward.3} parent=31 // pred_check_branch
        %1359 = sbr.rel (%p1357) target = $region40
      $region39: #{unet_layer_forward.3} parent=31 // pred_region
        _
      $region40: #{unet_layer_forward.3} parent=31 // pred_fallthru
        _
    $region32: #{unet_layer_forward.3} parent=5 // pred_fallthru
      _
    %p1360 = scmp.le.s32.totalorder 2, %s11
    // Predicated region
    $region41: #{unet_layer_forward.3} parent=5 // pred_check
      %p1361 = pneg %p1360
    $region42: #{unet_layer_forward.3} parent=5 // pred_check_branch
      %1363 = sbr.rel (%p1361) target = $region44
    $region43: #{unet_layer_forward.3} parent=5 // pred_region
      %s1364 = ssub.s32 %s11, 2
      // Predicated region
      $region45: #{unet_layer_forward.3} parent=43 // pred_check
        %p1365 = pneg %p124
      $region46: #{unet_layer_forward.3} parent=43 // pred_check_branch
        %1367 = sbr.rel (%p1365) target = $region48
      $region47: #{unet_layer_forward.3} parent=43 // pred_region
        %s1368 = smul.u32 4, %s23
        %p1369 = scmp.lt.s32.totalorder %s22, 1
        %s1370 = scalar_select %p1369, %s22, 1
        %p1371 = scmp.lt.s32.totalorder %s1368, 7
        %s1372 = scalar_select %p1371, %s1368, 7
        %s1373 = smul.addr %s1370, 8
        %s1374 = sadd.s32 %s1372, %s1373
        %s1375 = smul.addr %s1374, 8
        %s1376 = scalar_lea.vmem %s3, %s1375
      $region48: #{unet_layer_forward.3} parent=43 // pred_fallthru
        _
      // Predicated region
      $region49: #{unet_layer_forward.3} parent=43 // pred_check
        %p1377 = pneg %p152
      $region50: #{unet_layer_forward.3} parent=43 // pred_check_branch
        %1379 = sbr.rel (%p1377) target = $region52
      $region51: #{unet_layer_forward.3} parent=43 // pred_region
        %p1380 = scmp.lt.s32.totalorder %s22, 1
        %s1381 = scalar_select %p1380, %s22, 1
        %p1382 = scmp.lt.s32.totalorder %s23, 1
        %s1383 = scalar_select %p1382, %s23, 1
        %s1384 = smul.addr %s1381, 2
        %s1385 = sadd.s32 %s1383, %s1384
        %s1386 = smul.addr %s1385, 2
        %s1387 = scalar_lea.vmem %s4, %s1386
      $region52: #{unet_layer_forward.3} parent=43 // pred_fallthru
        _
    $region44: #{unet_layer_forward.3} parent=5 // pred_fallthru
      _
  $region6: #{unet_layer_forward.3} parent=0 // loop_footer
    %s15 = sadd.s32 1, %s11
  $region7: #{unet_layer_forward.3} parent=0 // loop_footer_branch
    %10 = sbr.rel target = $region3
  $region8: #{unet_layer_forward.3} parent=0 // loop_exit
    _

</llo_original>
